<compile_context>
chip_gen: v6e
topology: v6e:2x2x1
jax: 0.10.0
libtpu: 0.0.40
codegen_flags: <defaults>
</compile_context>

<pallas_src>
import functools

import jax
import jax.numpy as jnp
from jax.experimental import pallas as pl
from jax.experimental.pallas import tpu as pltpu


# patten -> ((row_parity, col_parity) of first return, same for the second return)
# out1=(0,0)  out2=(1,0)  out3=(0,1)  out4=(1,1)
_PATTEN_PAIRS = {
    0: ((1, 0), (0, 0)),
    1: ((1, 0), (0, 0)),
    2: ((0, 0), (0, 1)),
    3: ((0, 1), (0, 0)),
    4: ((1, 1), (1, 0)),
    5: ((1, 0), (1, 1)),
    6: ((0, 1), (1, 1)),
    7: ((1, 1), (0, 1)),
}


def _round_up(x, m):
    return -(-x // m) * m


def _largest_divisor_le(n, cap):
    """Largest divisor of n that is <= cap (always >= 1)."""
    best, d = 1, 1
    while d * d <= n:
        if n % d == 0:
            if d <= cap:
                best = max(best, d)
            q = n // d
            if q <= cap:
                best = max(best, q)
        d += 1
    return best


def _build_selector(g, w, wh, r, c, dtype):
    """One-hot (g*2*w, g*wh) selector: input lane u*2*w + r*w + 2*t + c -> output lane u*wh + t."""
    u = jnp.arange(g)[:, None]
    t = jnp.arange(wh)[None, :]
    rows = (u * 2 * w + r * w + 2 * t + c).reshape(-1)
    cols = (u * wh + t).reshape(-1)
    sel = jnp.zeros((g * 2 * w, g * wh), dtype)
    return sel.at[rows, cols].set(jnp.ones((), dtype))


def _make_kernel(n_tiles, Kt, Lt, starts_a, starts_b, compute_dtype, out_dtype):
    """Kernel factory: everything but the refs is a static Python value (patten is static)."""

    def kernel(sa_ref, sb_ref, x_ref, oa_ref, ob_ref):
        for j in range(n_tiles):                              # static unroll over output-lane tiles
            a0, b0 = starts_a[j], starts_b[j]
            xa = x_ref[:, a0:a0 + Kt]                         # 128-aligned static lane window
            xb = xa if b0 == a0 else x_ref[:, b0:b0 + Kt]
            if xa.dtype != compute_dtype:
                xa = xa.astype(compute_dtype)
                xb = xa if b0 == a0 else xb.astype(compute_dtype)
            # One small MXU op per output tile; HIGHEST precision => exact pass-through for f32.
            ya = jnp.dot(xa, sa_ref[...], preferred_element_type=jnp.float32,
                         precision=jax.lax.Precision.HIGHEST)
            yb = jnp.dot(xb, sb_ref[...], preferred_element_type=jnp.float32,
                         precision=jax.lax.Precision.HIGHEST)
            oa_ref[:, j * Lt:(j + 1) * Lt] = ya.astype(out_dtype)   # lane-dense, 128-aligned store
            ob_ref[:, j * Lt:(j + 1) * Lt] = yb.astype(out_dtype)

    return kernel


def _pick_row_block(R, K, L, itemsize, sel_bytes, budget_bytes=36 << 20):
    """Rows per grid step.  The budget counts everything live in VMEM at once:
    2x (double-buffered) input block + 2 x 2x output blocks + the selectors."""
    Kp = _round_up(K, 128)                 # lane padding in VMEM
    Lp = _round_up(L, 128)
    per_row = itemsize * (2 * Kp + 4 * Lp)
    avail = max(budget_bytes - sel_bytes, 8 * per_row)
    mb = max(8, (avail // per_row) // 8 * 8)
    if R <= 8:
        return R                           # single full block (block dim == array dim is legal)
    # Keep >= 2 grid steps so the ("parallel",) axis can spread across v7x's two TensorCores.
    return min(mb, _round_up(-(-R // 2), 8))


@functools.partial(jax.jit, static_argnums=1)
def mask_sampling_v2(x, patten):
    """Forward pass of masksamplingv2.

    x: (N, C, H, W) array with even H and W.  `patten` is a static Python int in [0, 8).
    Returns the pair of (N, C, H//2, W//2) stride-2 sub-samples in the module's ordering.
    """
    if patten not in _PATTEN_PAIRS:
        raise Exception('no implemented patten')
    (ra, ca), (rb, cb) = _PATTEN_PAIRS[patten]

    N, C, H, W = x.shape
    assert H % 2 == 0 and W % 2 == 0
    Hh, Wh = H // 2, W // 2
    M = N * C * Hh                        # rows of the (M, 2W) view; lane k = row_parity*W + col

    floating = jnp.issubdtype(x.dtype, jnp.floating)
    compute_dtype = x.dtype if floating else jnp.float32

    # ---- static layout decisions -------------------------------------------------------------
    if Wh % 128 == 0:
        # Large, lane-aligned widths: no row folding.  De-interleave in 128-output-lane tiles;
        # each tile contracts a 256-lane, 128-aligned input slice against a constant (256, 128)
        # selector, so MACs/element and selector VMEM are independent of W.
        g = 1
        Kt, Lt = 256, 128
        n_tiles = Wh // 128
        starts_a = tuple(ra * W + 256 * j for j in range(n_tiles))
        starts_b = tuple(rb * W + 256 * j for j in range(n_tiles))
        sel_a = _build_selector(1, 128, 128, 0, ca, compute_dtype)
        sel_b = _build_selector(1, 128, 128, 0, cb, compute_dtype)
    else:
        # Small / unaligned widths: fold g rows into the lane axis (metadata-only reshape) so the
        # outputs are lane-dense (>=128 lanes when M allows) while keeping the contraction depth
        # bounded (~4*max(128, Wh)).  g must divide M = N*C*(H//2).
        target_g = -(-128 // Wh) if Wh < 128 else 1
        g = _largest_divisor_le(M, target_g)
        Kt, Lt = g * 2 * W, g * Wh
        n_tiles = 1
        starts_a = (0,)
        starts_b = (0,)
        sel_a = _build_selector(g, W, Wh, ra, ca, compute_dtype)
        sel_b = _build_selector(g, W, Wh, rb, cb, compute_dtype)

    R, K, L = M // g, g * 2 * W, g * Wh
    xr = x.reshape(R, K)                  # metadata-only: element (p, u*2W + r*W + w)

    itemsize = jnp.dtype(x.dtype).itemsize
    sel_bytes = 2 * 2 * Kt * Lt * jnp.dtype(compute_dtype).itemsize
    Mb = _pick_row_block(R, K, L, itemsize, sel_bytes)
    grid = (pl.cdiv(R, Mb),)              # no divisibility requirement; partial last block masked

    kernel = _make_kernel(n_tiles, Kt, Lt, starts_a, starts_b, compute_dtype, x.dtype)
    out_sds = jax.ShapeDtypeStruct((R, L), x.dtype)

    oa, ob = pl.pallas_call(
        kernel,
        out_shape=(out_sds, out_sds),
        grid_spec=pltpu.PrefetchScalarGridSpec(
            num_scalar_prefetch=0,
            grid=grid,
            in_specs=[
                pl.BlockSpec((Kt, Lt), lambda i: (0, 0)),    # selector A (VMEM-resident)
                pl.BlockSpec((Kt, Lt), lambda i: (0, 0)),    # selector B (VMEM-resident)
                pl.BlockSpec((Mb, K), lambda i: (i, 0)),     # input row block
            ],
            out_specs=[
                pl.BlockSpec((Mb, L), lambda i: (i, 0)),
                pl.BlockSpec((Mb, L), lambda i: (i, 0)),
            ],
        ),
        compiler_params=pltpu.CompilerParams(
            dimension_semantics=("parallel",),
            vmem_limit_bytes=48 << 20),
    )(sel_a, sel_b, xr)

    # Metadata-only unfolds back to the module's output layout.
    return oa.reshape(N, C, Hh, Wh), ob.reshape(N, C, Hh, Wh)


if __name__ == "__main__":
    key = jax.random.PRNGKey(0)
    x = jax.random.normal(key, (2, 4, 16, 16), dtype=jnp.float32)

    # Pure-JAX reference (MaxPool2d(1, 2) == stride-2 subsampling).
    ref1 = x[:, :, ::2, ::2]
    ref2 = x[:, :, 1::2, ::2]
    ref3 = x[:, :, ::2, 1::2]
    ref4 = x[:, :, 1::2, 1::2]
    ref_pairs = {
        0: (ref2, ref1), 1: (ref2, ref1), 2: (ref1, ref3), 3: (ref3, ref1),
        4: (ref4, ref2), 5: (ref2, ref4), 6: (ref3, ref4), 7: (ref4, ref3),
    }

    for p in range(8):
        a, b = mask_sampling_v2(x, p)
        a = jax.block_until_ready(a)
        b = jax.block_until_ready(b)
        ea, eb = ref_pairs[p]
        assert a.shape == (2, 4, 8, 8) and b.shape == (2, 4, 8, 8)
        assert bool(jnp.allclose(a, ea)), f"mismatch in first output, patten={p}"
        assert bool(jnp.allclose(b, eb)), f"mismatch in second output, patten={p}"

    print("KERNEL_OK")
</pallas_src>

<mosaic_0001>
module attributes {stable_mosaic.version = 11 : i64} {
  func.func @kernel(%arg0: i32, %arg1: memref<512x128xf32, #tpu.memory_space<vmem>>, %arg2: memref<512x128xf32, #tpu.memory_space<vmem>>, %arg3: memref<4x512xf32, #tpu.memory_space<vmem>>, %arg4: memref<4x128xf32, #tpu.memory_space<vmem>>, %arg5: memref<4x128xf32, #tpu.memory_space<vmem>>) attributes {dimension_semantics = [#tpu.dimension_semantics<parallel>], iteration_bounds = array<i64: 1>, scalar_prefetch = 0 : i64, scratch_operands = 0 : i64, tpu.core_type = #tpu.core_type<tc>, window_params = [{pipeline_mode = #tpu.pipeline_mode<synchronous>, transform_indices = @transform_0, window_bounds = array<i64: 512, 128>}, {pipeline_mode = #tpu.pipeline_mode<synchronous>, transform_indices = @transform_1, window_bounds = array<i64: 512, 128>}, {transform_indices = @transform_2, window_bounds = array<i64: 4, 512>}, {transform_indices = @transform_3, window_bounds = array<i64: 4, 128>}, {transform_indices = @transform_4, window_bounds = array<i64: 4, 128>}]} {
    %c0 = arith.constant 0 : index
    %c0_0 = arith.constant 0 : index
    %0 = vector.load %arg3[%c0, %c0_0] : memref<4x512xf32, #tpu.memory_space<vmem>>, vector<4x512xf32>
    %c0_1 = arith.constant 0 : index
    %c0_2 = arith.constant 0 : index
    %1 = vector.load %arg1[%c0_1, %c0_2] : memref<512x128xf32, #tpu.memory_space<vmem>>, vector<512x128xf32>
    %cst = arith.constant dense<0.000000e+00> : vector<4x128xf32>
    %2 = tpu.matmul %0, %1, %cst {dimension_numbers = #tpu.dot_dimension_numbers<[1], [0], [0], [1], [0, 0, 1, 1], [], []>, precision = #tpu.contract_precision<fp32>} : vector<4x512xf32>, vector<512x128xf32>, vector<4x128xf32> -> vector<4x128xf32>
    %c0_3 = arith.constant 0 : index
    %c0_4 = arith.constant 0 : index
    %3 = vector.load %arg2[%c0_3, %c0_4] : memref<512x128xf32, #tpu.memory_space<vmem>>, vector<512x128xf32>
    %cst_5 = arith.constant dense<0.000000e+00> : vector<4x128xf32>
    %4 = tpu.matmul %0, %3, %cst_5 {dimension_numbers = #tpu.dot_dimension_numbers<[1], [0], [0], [1], [0, 0, 1, 1], [], []>, precision = #tpu.contract_precision<fp32>} : vector<4x512xf32>, vector<512x128xf32>, vector<4x128xf32> -> vector<4x128xf32>
    %c0_6 = arith.constant 0 : index
    %c0_7 = arith.constant 0 : index
    %5 = vector.load %arg4[%c0_6, %c0_7] : memref<4x128xf32, #tpu.memory_space<vmem>>, vector<4x128xf32>
    tpu.vector_store %arg4[%c0_6, %c0_7], %2 {strides = array<i32>} : memref<4x128xf32, #tpu.memory_space<vmem>>, vector<4x128xf32>,
    %c0_8 = arith.constant 0 : index
    %c0_9 = arith.constant 0 : index
    %6 = vector.load %arg5[%c0_8, %c0_9] : memref<4x128xf32, #tpu.memory_space<vmem>>, vector<4x128xf32>
    tpu.vector_store %arg5[%c0_8, %c0_9], %4 {strides = array<i32>} : memref<4x128xf32, #tpu.memory_space<vmem>>, vector<4x128xf32>,
    return
  }
  func.func @transform_0(%arg0: i32) -> (i32, i32) {
    %c0_i32 = arith.constant 0 : i32
    %c0_i32_0 = arith.constant 0 : i32
    %c0_i32_1 = arith.constant 0 : i32
    return %c0_i32, %c0_i32_0 : i32, i32
  }
  func.func @transform_1(%arg0: i32) -> (i32, i32) {
    %c0_i32 = arith.constant 0 : i32
    %c0_i32_0 = arith.constant 0 : i32
    %c0_i32_1 = arith.constant 0 : i32
    return %c0_i32, %c0_i32_0 : i32, i32
  }
  func.func @transform_2(%arg0: i32) -> (i32, i32) {
    %c0_i32 = arith.constant 0 : i32
    %c0_i32_0 = arith.constant 0 : i32
    return %arg0, %c0_i32 : i32, i32
  }
  func.func @transform_3(%arg0: i32) -> (i32, i32) {
    %c0_i32 = arith.constant 0 : i32
    %c0_i32_0 = arith.constant 0 : i32
    return %arg0, %c0_i32 : i32, i32
  }
  func.func @transform_4(%arg0: i32) -> (i32, i32) {
    %c0_i32 = arith.constant 0 : i32
    %c0_i32_0 = arith.constant 0 : i32
    return %arg0, %c0_i32 : i32, i32
  }
}

</mosaic_0001>

<llo_original>
// kernel: mask_sampling_v2.1
$region0: #{mask_sampling_v2.1}
  #allocation0 [shape = 'u32[]', space=smem, size = 0x4, offset = 0x4, fixed_abs, tag = 'smem constant byte address 0x4 - core index']
  #allocation1 [shape = 'u32[144,128]{1,0:T(1,128)}', space=vmem, size = 0x12000, scoped, tag = 'internal scratch']
  %s0 = inlined_call_operand.vmem [shape: f32[512,128], index: 0, kind: input, shape index: {}]
  %s1 = inlined_call_operand.vmem [shape: f32[512,128], index: 1, kind: input, shape index: {}]
  %s2 = inlined_call_operand.vmem [shape: f32[4,512], index: 2, kind: input, shape index: {}]
  %s3 = inlined_call_operand.vmem [shape: f32[4,128], index: 3, kind: output, shape index: {0}]
  %s4 = inlined_call_operand.vmem [shape: f32[4,128], index: 4, kind: output, shape index: {1}]
  %5 = xla_tuple %s3, %s4
  %s6 = sld [smem:[#allocation0]]
  $region30: #{mask_sampling_v2.1} parent=0
    _
  %s8 = ssub.s32 1, %s6
  %s9 = scalar_select 0, %s8, %s6
  // Predicated region
  $region2: #{mask_sampling_v2.1} parent=0 // pred_check
    _
  $region3: #{mask_sampling_v2.1} parent=0 // pred_check_branch
    %11 = sbr.rel (0) target = $region5
  $region4: #{mask_sampling_v2.1} parent=0 // pred_region
    _
  $region5: #{mask_sampling_v2.1} parent=0 // pred_fallthru
    _
  // Predicated region
  $region6: #{mask_sampling_v2.1} parent=0 // pred_check
    _
  $region7: #{mask_sampling_v2.1} parent=0 // pred_check_branch
    %13 = sbr.rel (0) target = $region9
  $region8: #{mask_sampling_v2.1} parent=0 // pred_region
    _
  $region9: #{mask_sampling_v2.1} parent=0 // pred_fallthru
    _
  // Predicated region
  $region10: #{mask_sampling_v2.1} parent=0 // pred_check
    _
  $region11: #{mask_sampling_v2.1} parent=0 // pred_check_branch
    %15 = sbr.rel (0) target = $region13
  $region12: #{mask_sampling_v2.1} parent=0 // pred_region
    _
  $region13: #{mask_sampling_v2.1} parent=0 // pred_fallthru
    _
  %v16 = vld [vmem:[%s2] sm:$0xff]
  %v17 = vld [vmem:[%s2 + $0x8] sm:$0xff]
  %v18 = vld [vmem:[%s0] sm:$0xff]
  %v19 = vld [vmem:[%s0 + $0x8] sm:$0xff]
  %v20 = vld [vmem:[%s0 + $0x10] sm:$0xff]
  %v21 = vld [vmem:[%s0 + $0x18] sm:$0xff]
  %v22 = vld [vmem:[%s0 + $0x20] sm:$0xff]
  %v23 = vld [vmem:[%s0 + $0x28] sm:$0xff]
  %v24 = vld [vmem:[%s0 + $0x30] sm:$0xff]
  %v25 = vld [vmem:[%s0 + $0x38] sm:$0xff]
  %v26 = vld [vmem:[%s0 + $0x40] sm:$0xff]
  %v27 = vld [vmem:[%s0 + $0x48] sm:$0xff]
  %v28 = vld [vmem:[%s0 + $0x50] sm:$0xff]
  %v29 = vld [vmem:[%s0 + $0x58] sm:$0xff]
  %v30 = vld [vmem:[%s0 + $0x60] sm:$0xff]
  %v31 = vld [vmem:[%s0 + $0x68] sm:$0xff]
  %v32 = vld [vmem:[%s0 + $0x70] sm:$0xff]
  %v33 = vld [vmem:[%s0 + $0x78] sm:$0xff]
  %v34 = vld [vmem:[%s0 + $0x80] sm:$0xff]
  %v35 = vld [vmem:[%s0 + $0x88] sm:$0xff]
  %v36 = vld [vmem:[%s0 + $0x90] sm:$0xff]
  %v37 = vld [vmem:[%s0 + $0x98] sm:$0xff]
  %v38 = vld [vmem:[%s0 + $0xa0] sm:$0xff]
  %v39 = vld [vmem:[%s0 + $0xa8] sm:$0xff]
  %v40 = vld [vmem:[%s0 + $0xb0] sm:$0xff]
  %v41 = vld [vmem:[%s0 + $0xb8] sm:$0xff]
  %v42 = vld [vmem:[%s0 + $0xc0] sm:$0xff]
  %v43 = vld [vmem:[%s0 + $0xc8] sm:$0xff]
  %v44 = vld [vmem:[%s0 + $0xd0] sm:$0xff]
  %v45 = vld [vmem:[%s0 + $0xd8] sm:$0xff]
  %v46 = vld [vmem:[%s0 + $0xe0] sm:$0xff]
  %v47 = vld [vmem:[%s0 + $0xe8] sm:$0xff]
  %v48 = vld [vmem:[%s0 + $0xf0] sm:$0xff]
  %v49 = vld [vmem:[%s0 + $0xf8] sm:$0xff]
  %v50 = vld [vmem:[%s0 + $0x100] sm:$0xff]
  %v51 = vld [vmem:[%s0 + $0x108] sm:$0xff]
  %v52 = vld [vmem:[%s0 + $0x110] sm:$0xff]
  %v53 = vld [vmem:[%s0 + $0x118] sm:$0xff]
  %v54 = vld [vmem:[%s0 + $0x120] sm:$0xff]
  %v55 = vld [vmem:[%s0 + $0x128] sm:$0xff]
  %v56 = vld [vmem:[%s0 + $0x130] sm:$0xff]
  %v57 = vld [vmem:[%s0 + $0x138] sm:$0xff]
  %v58 = vld [vmem:[%s0 + $0x140] sm:$0xff]
  %v59 = vld [vmem:[%s0 + $0x148] sm:$0xff]
  %v60 = vld [vmem:[%s0 + $0x150] sm:$0xff]
  %v61 = vld [vmem:[%s0 + $0x158] sm:$0xff]
  %v62 = vld [vmem:[%s0 + $0x160] sm:$0xff]
  %v63 = vld [vmem:[%s0 + $0x168] sm:$0xff]
  %v64 = vld [vmem:[%s0 + $0x170] sm:$0xff]
  %v65 = vld [vmem:[%s0 + $0x178] sm:$0xff]
  %v66 = vld [vmem:[%s0 + $0x180] sm:$0xff]
  %v67 = vld [vmem:[%s0 + $0x188] sm:$0xff]
  %v68 = vld [vmem:[%s0 + $0x190] sm:$0xff]
  %v69 = vld [vmem:[%s0 + $0x198] sm:$0xff]
  %v70 = vld [vmem:[%s0 + $0x1a0] sm:$0xff]
  %v71 = vld [vmem:[%s0 + $0x1a8] sm:$0xff]
  %v72 = vld [vmem:[%s0 + $0x1b0] sm:$0xff]
  %v73 = vld [vmem:[%s0 + $0x1b8] sm:$0xff]
  %v74 = vld [vmem:[%s0 + $0x1c0] sm:$0xff]
  %v75 = vld [vmem:[%s0 + $0x1c8] sm:$0xff]
  %v76 = vld [vmem:[%s0 + $0x1d0] sm:$0xff]
  %v77 = vld [vmem:[%s0 + $0x1d8] sm:$0xff]
  %v78 = vld [vmem:[%s0 + $0x1e0] sm:$0xff]
  %v79 = vld [vmem:[%s0 + $0x1e8] sm:$0xff]
  %v80 = vld [vmem:[%s0 + $0x1f0] sm:$0xff]
  %v81 = vld [vmem:[%s0 + $0x1f8] sm:$0xff]
  %v84 = vcombine.high %v16, %v16
  %v85 = vcombine.high %v17, %v17
  %88 = vmatprep.subr.mxu0 0.0
  %v89 = vand.u32 %v33, 4294901760
  %90 = vmatpush1.msra.mxu0 %v89
  %91 = vmatprep.subr.mxu0 0.0
  %v92 = vand.u32 %v32, 4294901760
  %93 = vmatpush1.msra.mxu0 %v92
  %94 = vmatprep.subr.mxu0 0.0
  %v95 = vand.u32 %v31, 4294901760
  %96 = vmatpush1.msra.mxu0 %v95
  %97 = vmatprep.subr.mxu0 0.0
  %v98 = vand.u32 %v30, 4294901760
  %99 = vmatpush1.msra.mxu0 %v98
  %100 = vmatprep.subr.mxu0 0.0
  %v101 = vand.u32 %v29, 4294901760
  %102 = vmatpush1.msra.mxu0 %v101
  %103 = vmatprep.subr.mxu0 0.0
  %v104 = vand.u32 %v28, 4294901760
  %105 = vmatpush1.msra.mxu0 %v104
  %106 = vmatprep.subr.mxu0 0.0
  %v107 = vand.u32 %v27, 4294901760
  %108 = vmatpush1.msra.mxu0 %v107
  %109 = vmatprep.subr.mxu0 0.0
  %v110 = vand.u32 %v26, 4294901760
  %111 = vmatpush1.msra.mxu0 %v110
  %112 = vmatprep.subr.mxu0 0.0
  %v113 = vand.u32 %v25, 4294901760
  %114 = vmatpush1.msra.mxu0 %v113
  %115 = vmatprep.subr.mxu0 0.0
  %v116 = vand.u32 %v24, 4294901760
  %117 = vmatpush1.msra.mxu0 %v116
  %118 = vmatprep.subr.mxu0 0.0
  %v119 = vand.u32 %v23, 4294901760
  %120 = vmatpush1.msra.mxu0 %v119
  %121 = vmatprep.subr.mxu0 0.0
  %v122 = vand.u32 %v22, 4294901760
  %123 = vmatpush1.msra.mxu0 %v122
  %124 = vmatprep.subr.mxu0 0.0
  %v125 = vand.u32 %v21, 4294901760
  %126 = vmatpush1.msra.mxu0 %v125
  %127 = vmatprep.subr.mxu0 0.0
  %v128 = vand.u32 %v20, 4294901760
  %129 = vmatpush1.msra.mxu0 %v128
  %130 = vmatprep.subr.mxu0 0.0
  %v131 = vand.u32 %v19, 4294901760
  %132 = vmatpush1.msra.mxu0 %v131
  %133 = vmatprep.subr.mxu0 0.0
  %v134 = vand.u32 %v18, 4294901760
  %135 = vmatpush1.msra.mxu0 %v134
  %136 = vmatprep.subr.mxu0 0.0
  %v137 = vand.u32 %v49, 4294901760
  %138 = vmatpush2.msra.mxu0 %v137
  %139 = vmatprep.subr.mxu0 0.0
  %v140 = vand.u32 %v48, 4294901760
  %141 = vmatpush2.msra.mxu0 %v140
  %142 = vmatprep.subr.mxu0 0.0
  %v143 = vand.u32 %v47, 4294901760
  %144 = vmatpush2.msra.mxu0 %v143
  %145 = vmatprep.subr.mxu0 0.0
  %v146 = vand.u32 %v46, 4294901760
  %147 = vmatpush2.msra.mxu0 %v146
  %148 = vmatprep.subr.mxu0 0.0
  %v149 = vand.u32 %v45, 4294901760
  %150 = vmatpush2.msra.mxu0 %v149
  %151 = vmatprep.subr.mxu0 0.0
  %v152 = vand.u32 %v44, 4294901760
  %153 = vmatpush2.msra.mxu0 %v152
  %154 = vmatprep.subr.mxu0 0.0
  %v155 = vand.u32 %v43, 4294901760
  %156 = vmatpush2.msra.mxu0 %v155
  %157 = vmatprep.subr.mxu0 0.0
  %v158 = vand.u32 %v42, 4294901760
  %159 = vmatpush2.msra.mxu0 %v158
  %160 = vmatprep.subr.mxu0 0.0
  %v161 = vand.u32 %v41, 4294901760
  %162 = vmatpush2.msra.mxu0 %v161
  %163 = vmatprep.subr.mxu0 0.0
  %v164 = vand.u32 %v40, 4294901760
  %165 = vmatpush2.msra.mxu0 %v164
  %166 = vmatprep.subr.mxu0 0.0
  %v167 = vand.u32 %v39, 4294901760
  %168 = vmatpush2.msra.mxu0 %v167
  %169 = vmatprep.subr.mxu0 0.0
  %v170 = vand.u32 %v38, 4294901760
  %171 = vmatpush2.msra.mxu0 %v170
  %172 = vmatprep.subr.mxu0 0.0
  %v173 = vand.u32 %v37, 4294901760
  %174 = vmatpush2.msra.mxu0 %v173
  %175 = vmatprep.subr.mxu0 0.0
  %v176 = vand.u32 %v36, 4294901760
  %177 = vmatpush2.msra.mxu0 %v176
  %178 = vmatprep.subr.mxu0 0.0
  %v179 = vand.u32 %v35, 4294901760
  %180 = vmatpush2.msra.mxu0 %v179
  %181 = vmatprep.subr.mxu0 0.0
  %v182 = vand.u32 %v34, 4294901760
  %183 = vmatpush2.msra.mxu0 %v182
  %v184 = vand.u32 %v84, 4294901760
  %v185 = vsub.f32 %v84, %v184
  %v186 = vand.u32 %v185, 4294901760
  %v187 = vsub.f32 %v185, %v186
  %v188 = vand.u32 %v187, 4294901760
  %189 = vmatprep.mubr.f32.mxu0 %v188
  %v190 = vand.u32 %v16, 4294901760
  %v191 = vsub.f32 %v16, %v190
  %v192 = vand.u32 %v191, 4294901760
  %v193 = vsub.f32 %v191, %v192
  %v194 = vand.u32 %v193, 4294901760
  %195 = vmatmul.mubr.f32.gmra.mxu0 %v194
  %v196 = vpop.f32.mrf.mxu0
  %v197 = vadd.f32 0.0, %v196
  %v198 = vpop.f32.mrf.mxu0
  %199 = vdwg.mxu0
  %200 = vmatprep.subr.mxu0 0.0
  %v201 = vand.u32 %v33, 4294901760
  %v202 = vsub.f32 %v33, %v201
  %v203 = vand.u32 %v202, 4294901760
  %v204 = vsub.f32 %v202, %v203
  %v205 = vand.u32 %v204, 4294901760
  %206 = vmatpush1.msra.mxu0 %v205
  %207 = vmatprep.subr.mxu0 0.0
  %v208 = vand.u32 %v32, 4294901760
  %v209 = vsub.f32 %v32, %v208
  %v210 = vand.u32 %v209, 4294901760
  %v211 = vsub.f32 %v209, %v210
  %v212 = vand.u32 %v211, 4294901760
  %213 = vmatpush1.msra.mxu0 %v212
  %214 = vmatprep.subr.mxu0 0.0
  %v215 = vand.u32 %v31, 4294901760
  %v216 = vsub.f32 %v31, %v215
  %v217 = vand.u32 %v216, 4294901760
  %v218 = vsub.f32 %v216, %v217
  %v219 = vand.u32 %v218, 4294901760
  %220 = vmatpush1.msra.mxu0 %v219
  %221 = vmatprep.subr.mxu0 0.0
  %v222 = vand.u32 %v30, 4294901760
  %v223 = vsub.f32 %v30, %v222
  %v224 = vand.u32 %v223, 4294901760
  %v225 = vsub.f32 %v223, %v224
  %v226 = vand.u32 %v225, 4294901760
  %227 = vmatpush1.msra.mxu0 %v226
  %228 = vmatprep.subr.mxu0 0.0
  %v229 = vand.u32 %v29, 4294901760
  %v230 = vsub.f32 %v29, %v229
  %v231 = vand.u32 %v230, 4294901760
  %v232 = vsub.f32 %v230, %v231
  %v233 = vand.u32 %v232, 4294901760
  %234 = vmatpush1.msra.mxu0 %v233
  %235 = vmatprep.subr.mxu0 0.0
  %v236 = vand.u32 %v28, 4294901760
  %v237 = vsub.f32 %v28, %v236
  %v238 = vand.u32 %v237, 4294901760
  %v239 = vsub.f32 %v237, %v238
  %v240 = vand.u32 %v239, 4294901760
  %241 = vmatpush1.msra.mxu0 %v240
  %242 = vmatprep.subr.mxu0 0.0
  %v243 = vand.u32 %v27, 4294901760
  %v244 = vsub.f32 %v27, %v243
  %v245 = vand.u32 %v244, 4294901760
  %v246 = vsub.f32 %v244, %v245
  %v247 = vand.u32 %v246, 4294901760
  %248 = vmatpush1.msra.mxu0 %v247
  %249 = vmatprep.subr.mxu0 0.0
  %v250 = vand.u32 %v26, 4294901760
  %v251 = vsub.f32 %v26, %v250
  %v252 = vand.u32 %v251, 4294901760
  %v253 = vsub.f32 %v251, %v252
  %v254 = vand.u32 %v253, 4294901760
  %255 = vmatpush1.msra.mxu0 %v254
  %256 = vmatprep.subr.mxu0 0.0
  %v257 = vand.u32 %v25, 4294901760
  %v258 = vsub.f32 %v25, %v257
  %v259 = vand.u32 %v258, 4294901760
  %v260 = vsub.f32 %v258, %v259
  %v261 = vand.u32 %v260, 4294901760
  %262 = vmatpush1.msra.mxu0 %v261
  %263 = vmatprep.subr.mxu0 0.0
  %v264 = vand.u32 %v24, 4294901760
  %v265 = vsub.f32 %v24, %v264
  %v266 = vand.u32 %v265, 4294901760
  %v267 = vsub.f32 %v265, %v266
  %v268 = vand.u32 %v267, 4294901760
  %269 = vmatpush1.msra.mxu0 %v268
  %270 = vmatprep.subr.mxu0 0.0
  %v271 = vand.u32 %v23, 4294901760
  %v272 = vsub.f32 %v23, %v271
  %v273 = vand.u32 %v272, 4294901760
  %v274 = vsub.f32 %v272, %v273
  %v275 = vand.u32 %v274, 4294901760
  %276 = vmatpush1.msra.mxu0 %v275
  %277 = vmatprep.subr.mxu0 0.0
  %v278 = vand.u32 %v22, 4294901760
  %v279 = vsub.f32 %v22, %v278
  %v280 = vand.u32 %v279, 4294901760
  %v281 = vsub.f32 %v279, %v280
  %v282 = vand.u32 %v281, 4294901760
  %283 = vmatpush1.msra.mxu0 %v282
  %284 = vmatprep.subr.mxu0 0.0
  %v285 = vand.u32 %v21, 4294901760
  %v286 = vsub.f32 %v21, %v285
  %v287 = vand.u32 %v286, 4294901760
  %v288 = vsub.f32 %v286, %v287
  %v289 = vand.u32 %v288, 4294901760
  %290 = vmatpush1.msra.mxu0 %v289
  %291 = vmatprep.subr.mxu0 0.0
  %v292 = vand.u32 %v20, 4294901760
  %v293 = vsub.f32 %v20, %v292
  %v294 = vand.u32 %v293, 4294901760
  %v295 = vsub.f32 %v293, %v294
  %v296 = vand.u32 %v295, 4294901760
  %297 = vmatpush1.msra.mxu0 %v296
  %298 = vmatprep.subr.mxu0 0.0
  %v299 = vand.u32 %v19, 4294901760
  %v300 = vsub.f32 %v19, %v299
  %v301 = vand.u32 %v300, 4294901760
  %v302 = vsub.f32 %v300, %v301
  %v303 = vand.u32 %v302, 4294901760
  %304 = vmatpush1.msra.mxu0 %v303
  %305 = vmatprep.subr.mxu0 0.0
  %v306 = vand.u32 %v18, 4294901760
  %v307 = vsub.f32 %v18, %v306
  %v308 = vand.u32 %v307, 4294901760
  %v309 = vsub.f32 %v307, %v308
  %v310 = vand.u32 %v309, 4294901760
  %311 = vmatpush1.msra.mxu0 %v310
  %312 = vmatprep.subr.mxu0 0.0
  %v313 = vand.u32 %v49, 4294901760
  %v314 = vsub.f32 %v49, %v313
  %v315 = vand.u32 %v314, 4294901760
  %v316 = vsub.f32 %v314, %v315
  %v317 = vand.u32 %v316, 4294901760
  %318 = vmatpush2.msra.mxu0 %v317
  %319 = vmatprep.subr.mxu0 0.0
  %v320 = vand.u32 %v48, 4294901760
  %v321 = vsub.f32 %v48, %v320
  %v322 = vand.u32 %v321, 4294901760
  %v323 = vsub.f32 %v321, %v322
  %v324 = vand.u32 %v323, 4294901760
  %325 = vmatpush2.msra.mxu0 %v324
  %326 = vmatprep.subr.mxu0 0.0
  %v327 = vand.u32 %v47, 4294901760
  %v328 = vsub.f32 %v47, %v327
  %v329 = vand.u32 %v328, 4294901760
  %v330 = vsub.f32 %v328, %v329
  %v331 = vand.u32 %v330, 4294901760
  %332 = vmatpush2.msra.mxu0 %v331
  %333 = vmatprep.subr.mxu0 0.0
  %v334 = vand.u32 %v46, 4294901760
  %v335 = vsub.f32 %v46, %v334
  %v336 = vand.u32 %v335, 4294901760
  %v337 = vsub.f32 %v335, %v336
  %v338 = vand.u32 %v337, 4294901760
  %339 = vmatpush2.msra.mxu0 %v338
  %340 = vmatprep.subr.mxu0 0.0
  %v341 = vand.u32 %v45, 4294901760
  %v342 = vsub.f32 %v45, %v341
  %v343 = vand.u32 %v342, 4294901760
  %v344 = vsub.f32 %v342, %v343
  %v345 = vand.u32 %v344, 4294901760
  %346 = vmatpush2.msra.mxu0 %v345
  %347 = vmatprep.subr.mxu0 0.0
  %v348 = vand.u32 %v44, 4294901760
  %v349 = vsub.f32 %v44, %v348
  %v350 = vand.u32 %v349, 4294901760
  %v351 = vsub.f32 %v349, %v350
  %v352 = vand.u32 %v351, 4294901760
  %353 = vmatpush2.msra.mxu0 %v352
  %354 = vmatprep.subr.mxu0 0.0
  %v355 = vand.u32 %v43, 4294901760
  %v356 = vsub.f32 %v43, %v355
  %v357 = vand.u32 %v356, 4294901760
  %v358 = vsub.f32 %v356, %v357
  %v359 = vand.u32 %v358, 4294901760
  %360 = vmatpush2.msra.mxu0 %v359
  %361 = vmatprep.subr.mxu0 0.0
  %v362 = vand.u32 %v42, 4294901760
  %v363 = vsub.f32 %v42, %v362
  %v364 = vand.u32 %v363, 4294901760
  %v365 = vsub.f32 %v363, %v364
  %v366 = vand.u32 %v365, 4294901760
  %367 = vmatpush2.msra.mxu0 %v366
  %368 = vmatprep.subr.mxu0 0.0
  %v369 = vand.u32 %v41, 4294901760
  %v370 = vsub.f32 %v41, %v369
  %v371 = vand.u32 %v370, 4294901760
  %v372 = vsub.f32 %v370, %v371
  %v373 = vand.u32 %v372, 4294901760
  %374 = vmatpush2.msra.mxu0 %v373
  %375 = vmatprep.subr.mxu0 0.0
  %v376 = vand.u32 %v40, 4294901760
  %v377 = vsub.f32 %v40, %v376
  %v378 = vand.u32 %v377, 4294901760
  %v379 = vsub.f32 %v377, %v378
  %v380 = vand.u32 %v379, 4294901760
  %381 = vmatpush2.msra.mxu0 %v380
  %382 = vmatprep.subr.mxu0 0.0
  %v383 = vand.u32 %v39, 4294901760
  %v384 = vsub.f32 %v39, %v383
  %v385 = vand.u32 %v384, 4294901760
  %v386 = vsub.f32 %v384, %v385
  %v387 = vand.u32 %v386, 4294901760
  %388 = vmatpush2.msra.mxu0 %v387
  %389 = vmatprep.subr.mxu0 0.0
  %v390 = vand.u32 %v38, 4294901760
  %v391 = vsub.f32 %v38, %v390
  %v392 = vand.u32 %v391, 4294901760
  %v393 = vsub.f32 %v391, %v392
  %v394 = vand.u32 %v393, 4294901760
  %395 = vmatpush2.msra.mxu0 %v394
  %396 = vmatprep.subr.mxu0 0.0
  %v397 = vand.u32 %v37, 4294901760
  %v398 = vsub.f32 %v37, %v397
  %v399 = vand.u32 %v398, 4294901760
  %v400 = vsub.f32 %v398, %v399
  %v401 = vand.u32 %v400, 4294901760
  %402 = vmatpush2.msra.mxu0 %v401
  %403 = vmatprep.subr.mxu0 0.0
  %v404 = vand.u32 %v36, 4294901760
  %v405 = vsub.f32 %v36, %v404
  %v406 = vand.u32 %v405, 4294901760
  %v407 = vsub.f32 %v405, %v406
  %v408 = vand.u32 %v407, 4294901760
  %409 = vmatpush2.msra.mxu0 %v408
  %410 = vmatprep.subr.mxu0 0.0
  %v411 = vand.u32 %v35, 4294901760
  %v412 = vsub.f32 %v35, %v411
  %v413 = vand.u32 %v412, 4294901760
  %v414 = vsub.f32 %v412, %v413
  %v415 = vand.u32 %v414, 4294901760
  %416 = vmatpush2.msra.mxu0 %v415
  %417 = vmatprep.subr.mxu0 0.0
  %v418 = vand.u32 %v34, 4294901760
  %v419 = vsub.f32 %v34, %v418
  %v420 = vand.u32 %v419, 4294901760
  %v421 = vsub.f32 %v419, %v420
  %v422 = vand.u32 %v421, 4294901760
  %423 = vmatpush2.msra.mxu0 %v422
  %v424 = vand.u32 %v84, 4294901760
  %425 = vmatprep.mubr.f32.mxu0 %v424
  %v426 = vand.u32 %v16, 4294901760
  %427 = vmatmul.mubr.f32.gmra.mxu0 %v426
  %v428 = vpop.f32.mrf.mxu0
  %v429 = vadd.f32 %v197, %v428
  %v430 = vpop.f32.mrf.mxu0
  %431 = vdwg.mxu0
  %432 = vmatprep.subr.mxu0 0.0
  %v433 = vand.u32 %v33, 4294901760
  %v434 = vsub.f32 %v33, %v433
  %435 = vmatpush1.msra.mxu0 %v434
  %436 = vmatprep.subr.mxu0 0.0
  %v437 = vand.u32 %v32, 4294901760
  %v438 = vsub.f32 %v32, %v437
  %439 = vmatpush1.msra.mxu0 %v438
  %440 = vmatprep.subr.mxu0 0.0
  %v441 = vand.u32 %v31, 4294901760
  %v442 = vsub.f32 %v31, %v441
  %443 = vmatpush1.msra.mxu0 %v442
  %444 = vmatprep.subr.mxu0 0.0
  %v445 = vand.u32 %v30, 4294901760
  %v446 = vsub.f32 %v30, %v445
  %447 = vmatpush1.msra.mxu0 %v446
  %448 = vmatprep.subr.mxu0 0.0
  %v449 = vand.u32 %v29, 4294901760
  %v450 = vsub.f32 %v29, %v449
  %451 = vmatpush1.msra.mxu0 %v450
  %452 = vmatprep.subr.mxu0 0.0
  %v453 = vand.u32 %v28, 4294901760
  %v454 = vsub.f32 %v28, %v453
  %455 = vmatpush1.msra.mxu0 %v454
  %456 = vmatprep.subr.mxu0 0.0
  %v457 = vand.u32 %v27, 4294901760
  %v458 = vsub.f32 %v27, %v457
  %459 = vmatpush1.msra.mxu0 %v458
  %460 = vmatprep.subr.mxu0 0.0
  %v461 = vand.u32 %v26, 4294901760
  %v462 = vsub.f32 %v26, %v461
  %463 = vmatpush1.msra.mxu0 %v462
  %464 = vmatprep.subr.mxu0 0.0
  %v465 = vand.u32 %v25, 4294901760
  %v466 = vsub.f32 %v25, %v465
  %467 = vmatpush1.msra.mxu0 %v466
  %468 = vmatprep.subr.mxu0 0.0
  %v469 = vand.u32 %v24, 4294901760
  %v470 = vsub.f32 %v24, %v469
  %471 = vmatpush1.msra.mxu0 %v470
  %472 = vmatprep.subr.mxu0 0.0
  %v473 = vand.u32 %v23, 4294901760
  %v474 = vsub.f32 %v23, %v473
  %475 = vmatpush1.msra.mxu0 %v474
  %476 = vmatprep.subr.mxu0 0.0
  %v477 = vand.u32 %v22, 4294901760
  %v478 = vsub.f32 %v22, %v477
  %479 = vmatpush1.msra.mxu0 %v478
  %480 = vmatprep.subr.mxu0 0.0
  %v481 = vand.u32 %v21, 4294901760
  %v482 = vsub.f32 %v21, %v481
  %483 = vmatpush1.msra.mxu0 %v482
  %484 = vmatprep.subr.mxu0 0.0
  %v485 = vand.u32 %v20, 4294901760
  %v486 = vsub.f32 %v20, %v485
  %487 = vmatpush1.msra.mxu0 %v486
  %488 = vmatprep.subr.mxu0 0.0
  %v489 = vand.u32 %v19, 4294901760
  %v490 = vsub.f32 %v19, %v489
  %491 = vmatpush1.msra.mxu0 %v490
  %492 = vmatprep.subr.mxu0 0.0
  %v493 = vand.u32 %v18, 4294901760
  %v494 = vsub.f32 %v18, %v493
  %495 = vmatpush1.msra.mxu0 %v494
  %496 = vmatprep.subr.mxu0 0.0
  %v497 = vand.u32 %v49, 4294901760
  %v498 = vsub.f32 %v49, %v497
  %499 = vmatpush2.msra.mxu0 %v498
  %500 = vmatprep.subr.mxu0 0.0
  %v501 = vand.u32 %v48, 4294901760
  %v502 = vsub.f32 %v48, %v501
  %503 = vmatpush2.msra.mxu0 %v502
  %504 = vmatprep.subr.mxu0 0.0
  %v505 = vand.u32 %v47, 4294901760
  %v506 = vsub.f32 %v47, %v505
  %507 = vmatpush2.msra.mxu0 %v506
  %508 = vmatprep.subr.mxu0 0.0
  %v509 = vand.u32 %v46, 4294901760
  %v510 = vsub.f32 %v46, %v509
  %511 = vmatpush2.msra.mxu0 %v510
  %512 = vmatprep.subr.mxu0 0.0
  %v513 = vand.u32 %v45, 4294901760
  %v514 = vsub.f32 %v45, %v513
  %515 = vmatpush2.msra.mxu0 %v514
  %516 = vmatprep.subr.mxu0 0.0
  %v517 = vand.u32 %v44, 4294901760
  %v518 = vsub.f32 %v44, %v517
  %519 = vmatpush2.msra.mxu0 %v518
  %520 = vmatprep.subr.mxu0 0.0
  %v521 = vand.u32 %v43, 4294901760
  %v522 = vsub.f32 %v43, %v521
  %523 = vmatpush2.msra.mxu0 %v522
  %524 = vmatprep.subr.mxu0 0.0
  %v525 = vand.u32 %v42, 4294901760
  %v526 = vsub.f32 %v42, %v525
  %527 = vmatpush2.msra.mxu0 %v526
  %528 = vmatprep.subr.mxu0 0.0
  %v529 = vand.u32 %v41, 4294901760
  %v530 = vsub.f32 %v41, %v529
  %531 = vmatpush2.msra.mxu0 %v530
  %532 = vmatprep.subr.mxu0 0.0
  %v533 = vand.u32 %v40, 4294901760
  %v534 = vsub.f32 %v40, %v533
  %535 = vmatpush2.msra.mxu0 %v534
  %536 = vmatprep.subr.mxu0 0.0
  %v537 = vand.u32 %v39, 4294901760
  %v538 = vsub.f32 %v39, %v537
  %539 = vmatpush2.msra.mxu0 %v538
  %540 = vmatprep.subr.mxu0 0.0
  %v541 = vand.u32 %v38, 4294901760
  %v542 = vsub.f32 %v38, %v541
  %543 = vmatpush2.msra.mxu0 %v542
  %544 = vmatprep.subr.mxu0 0.0
  %v545 = vand.u32 %v37, 4294901760
  %v546 = vsub.f32 %v37, %v545
  %547 = vmatpush2.msra.mxu0 %v546
  %548 = vmatprep.subr.mxu0 0.0
  %v549 = vand.u32 %v36, 4294901760
  %v550 = vsub.f32 %v36, %v549
  %551 = vmatpush2.msra.mxu0 %v550
  %552 = vmatprep.subr.mxu0 0.0
  %v553 = vand.u32 %v35, 4294901760
  %v554 = vsub.f32 %v35, %v553
  %555 = vmatpush2.msra.mxu0 %v554
  %556 = vmatprep.subr.mxu0 0.0
  %v557 = vand.u32 %v34, 4294901760
  %v558 = vsub.f32 %v34, %v557
  %559 = vmatpush2.msra.mxu0 %v558
  %v560 = vand.u32 %v84, 4294901760
  %v561 = vsub.f32 %v84, %v560
  %562 = vmatprep.mubr.f32.mxu0 %v561
  %v563 = vand.u32 %v16, 4294901760
  %v564 = vsub.f32 %v16, %v563
  %565 = vmatmul.mubr.f32.gmra.mxu0 %v564
  %v566 = vpop.f32.mrf.mxu0
  %v567 = vadd.f32 %v429, %v566
  %v568 = vpop.f32.mrf.mxu0
  %569 = vdwg.mxu0
  %570 = vmatprep.subr.mxu0 0.0
  %v571 = vand.u32 %v33, 4294901760
  %572 = vmatpush1.msra.mxu0 %v571
  %573 = vmatprep.subr.mxu0 0.0
  %v574 = vand.u32 %v32, 4294901760
  %575 = vmatpush1.msra.mxu0 %v574
  %576 = vmatprep.subr.mxu0 0.0
  %v577 = vand.u32 %v31, 4294901760
  %578 = vmatpush1.msra.mxu0 %v577
  %579 = vmatprep.subr.mxu0 0.0
  %v580 = vand.u32 %v30, 4294901760
  %581 = vmatpush1.msra.mxu0 %v580
  %582 = vmatprep.subr.mxu0 0.0
  %v583 = vand.u32 %v29, 4294901760
  %584 = vmatpush1.msra.mxu0 %v583
  %585 = vmatprep.subr.mxu0 0.0
  %v586 = vand.u32 %v28, 4294901760
  %587 = vmatpush1.msra.mxu0 %v586
  %588 = vmatprep.subr.mxu0 0.0
  %v589 = vand.u32 %v27, 4294901760
  %590 = vmatpush1.msra.mxu0 %v589
  %591 = vmatprep.subr.mxu0 0.0
  %v592 = vand.u32 %v26, 4294901760
  %593 = vmatpush1.msra.mxu0 %v592
  %594 = vmatprep.subr.mxu0 0.0
  %v595 = vand.u32 %v25, 4294901760
  %596 = vmatpush1.msra.mxu0 %v595
  %597 = vmatprep.subr.mxu0 0.0
  %v598 = vand.u32 %v24, 4294901760
  %599 = vmatpush1.msra.mxu0 %v598
  %600 = vmatprep.subr.mxu0 0.0
  %v601 = vand.u32 %v23, 4294901760
  %602 = vmatpush1.msra.mxu0 %v601
  %603 = vmatprep.subr.mxu0 0.0
  %v604 = vand.u32 %v22, 4294901760
  %605 = vmatpush1.msra.mxu0 %v604
  %606 = vmatprep.subr.mxu0 0.0
  %v607 = vand.u32 %v21, 4294901760
  %608 = vmatpush1.msra.mxu0 %v607
  %609 = vmatprep.subr.mxu0 0.0
  %v610 = vand.u32 %v20, 4294901760
  %611 = vmatpush1.msra.mxu0 %v610
  %612 = vmatprep.subr.mxu0 0.0
  %v613 = vand.u32 %v19, 4294901760
  %614 = vmatpush1.msra.mxu0 %v613
  %615 = vmatprep.subr.mxu0 0.0
  %v616 = vand.u32 %v18, 4294901760
  %617 = vmatpush1.msra.mxu0 %v616
  %618 = vmatprep.subr.mxu0 0.0
  %v619 = vand.u32 %v49, 4294901760
  %620 = vmatpush2.msra.mxu0 %v619
  %621 = vmatprep.subr.mxu0 0.0
  %v622 = vand.u32 %v48, 4294901760
  %623 = vmatpush2.msra.mxu0 %v622
  %624 = vmatprep.subr.mxu0 0.0
  %v625 = vand.u32 %v47, 4294901760
  %626 = vmatpush2.msra.mxu0 %v625
  %627 = vmatprep.subr.mxu0 0.0
  %v628 = vand.u32 %v46, 4294901760
  %629 = vmatpush2.msra.mxu0 %v628
  %630 = vmatprep.subr.mxu0 0.0
  %v631 = vand.u32 %v45, 4294901760
  %632 = vmatpush2.msra.mxu0 %v631
  %633 = vmatprep.subr.mxu0 0.0
  %v634 = vand.u32 %v44, 4294901760
  %635 = vmatpush2.msra.mxu0 %v634
  %636 = vmatprep.subr.mxu0 0.0
  %v637 = vand.u32 %v43, 4294901760
  %638 = vmatpush2.msra.mxu0 %v637
  %639 = vmatprep.subr.mxu0 0.0
  %v640 = vand.u32 %v42, 4294901760
  %641 = vmatpush2.msra.mxu0 %v640
  %642 = vmatprep.subr.mxu0 0.0
  %v643 = vand.u32 %v41, 4294901760
  %644 = vmatpush2.msra.mxu0 %v643
  %645 = vmatprep.subr.mxu0 0.0
  %v646 = vand.u32 %v40, 4294901760
  %647 = vmatpush2.msra.mxu0 %v646
  %648 = vmatprep.subr.mxu0 0.0
  %v649 = vand.u32 %v39, 4294901760
  %650 = vmatpush2.msra.mxu0 %v649
  %651 = vmatprep.subr.mxu0 0.0
  %v652 = vand.u32 %v38, 4294901760
  %653 = vmatpush2.msra.mxu0 %v652
  %654 = vmatprep.subr.mxu0 0.0
  %v655 = vand.u32 %v37, 4294901760
  %656 = vmatpush2.msra.mxu0 %v655
  %657 = vmatprep.subr.mxu0 0.0
  %v658 = vand.u32 %v36, 4294901760
  %659 = vmatpush2.msra.mxu0 %v658
  %660 = vmatprep.subr.mxu0 0.0
  %v661 = vand.u32 %v35, 4294901760
  %662 = vmatpush2.msra.mxu0 %v661
  %663 = vmatprep.subr.mxu0 0.0
  %v664 = vand.u32 %v34, 4294901760
  %665 = vmatpush2.msra.mxu0 %v664
  %v666 = vand.u32 %v84, 4294901760
  %v667 = vsub.f32 %v84, %v666
  %v668 = vand.u32 %v667, 4294901760
  %669 = vmatprep.mubr.f32.mxu0 %v668
  %v670 = vand.u32 %v16, 4294901760
  %v671 = vsub.f32 %v16, %v670
  %v672 = vand.u32 %v671, 4294901760
  %673 = vmatmul.mubr.f32.gmra.mxu0 %v672
  %v674 = vpop.f32.mrf.mxu0
  %v675 = vadd.f32 %v567, %v674
  %v676 = vpop.f32.mrf.mxu0
  %677 = vdwg.mxu0
  %678 = vmatprep.subr.mxu0 0.0
  %v679 = vand.u32 %v33, 4294901760
  %v680 = vsub.f32 %v33, %v679
  %v681 = vand.u32 %v680, 4294901760
  %682 = vmatpush1.msra.mxu0 %v681
  %683 = vmatprep.subr.mxu0 0.0
  %v684 = vand.u32 %v32, 4294901760
  %v685 = vsub.f32 %v32, %v684
  %v686 = vand.u32 %v685, 4294901760
  %687 = vmatpush1.msra.mxu0 %v686
  %688 = vmatprep.subr.mxu0 0.0
  %v689 = vand.u32 %v31, 4294901760
  %v690 = vsub.f32 %v31, %v689
  %v691 = vand.u32 %v690, 4294901760
  %692 = vmatpush1.msra.mxu0 %v691
  %693 = vmatprep.subr.mxu0 0.0
  %v694 = vand.u32 %v30, 4294901760
  %v695 = vsub.f32 %v30, %v694
  %v696 = vand.u32 %v695, 4294901760
  %697 = vmatpush1.msra.mxu0 %v696
  %698 = vmatprep.subr.mxu0 0.0
  %v699 = vand.u32 %v29, 4294901760
  %v700 = vsub.f32 %v29, %v699
  %v701 = vand.u32 %v700, 4294901760
  %702 = vmatpush1.msra.mxu0 %v701
  %703 = vmatprep.subr.mxu0 0.0
  %v704 = vand.u32 %v28, 4294901760
  %v705 = vsub.f32 %v28, %v704
  %v706 = vand.u32 %v705, 4294901760
  %707 = vmatpush1.msra.mxu0 %v706
  %708 = vmatprep.subr.mxu0 0.0
  %v709 = vand.u32 %v27, 4294901760
  %v710 = vsub.f32 %v27, %v709
  %v711 = vand.u32 %v710, 4294901760
  %712 = vmatpush1.msra.mxu0 %v711
  %713 = vmatprep.subr.mxu0 0.0
  %v714 = vand.u32 %v26, 4294901760
  %v715 = vsub.f32 %v26, %v714
  %v716 = vand.u32 %v715, 4294901760
  %717 = vmatpush1.msra.mxu0 %v716
  %718 = vmatprep.subr.mxu0 0.0
  %v719 = vand.u32 %v25, 4294901760
  %v720 = vsub.f32 %v25, %v719
  %v721 = vand.u32 %v720, 4294901760
  %722 = vmatpush1.msra.mxu0 %v721
  %723 = vmatprep.subr.mxu0 0.0
  %v724 = vand.u32 %v24, 4294901760
  %v725 = vsub.f32 %v24, %v724
  %v726 = vand.u32 %v725, 4294901760
  %727 = vmatpush1.msra.mxu0 %v726
  %728 = vmatprep.subr.mxu0 0.0
  %v729 = vand.u32 %v23, 4294901760
  %v730 = vsub.f32 %v23, %v729
  %v731 = vand.u32 %v730, 4294901760
  %732 = vmatpush1.msra.mxu0 %v731
  %733 = vmatprep.subr.mxu0 0.0
  %v734 = vand.u32 %v22, 4294901760
  %v735 = vsub.f32 %v22, %v734
  %v736 = vand.u32 %v735, 4294901760
  %737 = vmatpush1.msra.mxu0 %v736
  %738 = vmatprep.subr.mxu0 0.0
  %v739 = vand.u32 %v21, 4294901760
  %v740 = vsub.f32 %v21, %v739
  %v741 = vand.u32 %v740, 4294901760
  %742 = vmatpush1.msra.mxu0 %v741
  %743 = vmatprep.subr.mxu0 0.0
  %v744 = vand.u32 %v20, 4294901760
  %v745 = vsub.f32 %v20, %v744
  %v746 = vand.u32 %v745, 4294901760
  %747 = vmatpush1.msra.mxu0 %v746
  %748 = vmatprep.subr.mxu0 0.0
  %v749 = vand.u32 %v19, 4294901760
  %v750 = vsub.f32 %v19, %v749
  %v751 = vand.u32 %v750, 4294901760
  %752 = vmatpush1.msra.mxu0 %v751
  %753 = vmatprep.subr.mxu0 0.0
  %v754 = vand.u32 %v18, 4294901760
  %v755 = vsub.f32 %v18, %v754
  %v756 = vand.u32 %v755, 4294901760
  %757 = vmatpush1.msra.mxu0 %v756
  %758 = vmatprep.subr.mxu0 0.0
  %v759 = vand.u32 %v49, 4294901760
  %v760 = vsub.f32 %v49, %v759
  %v761 = vand.u32 %v760, 4294901760
  %762 = vmatpush2.msra.mxu0 %v761
  %763 = vmatprep.subr.mxu0 0.0
  %v764 = vand.u32 %v48, 4294901760
  %v765 = vsub.f32 %v48, %v764
  %v766 = vand.u32 %v765, 4294901760
  %767 = vmatpush2.msra.mxu0 %v766
  %768 = vmatprep.subr.mxu0 0.0
  %v769 = vand.u32 %v47, 4294901760
  %v770 = vsub.f32 %v47, %v769
  %v771 = vand.u32 %v770, 4294901760
  %772 = vmatpush2.msra.mxu0 %v771
  %773 = vmatprep.subr.mxu0 0.0
  %v774 = vand.u32 %v46, 4294901760
  %v775 = vsub.f32 %v46, %v774
  %v776 = vand.u32 %v775, 4294901760
  %777 = vmatpush2.msra.mxu0 %v776
  %778 = vmatprep.subr.mxu0 0.0
  %v779 = vand.u32 %v45, 4294901760
  %v780 = vsub.f32 %v45, %v779
  %v781 = vand.u32 %v780, 4294901760
  %782 = vmatpush2.msra.mxu0 %v781
  %783 = vmatprep.subr.mxu0 0.0
  %v784 = vand.u32 %v44, 4294901760
  %v785 = vsub.f32 %v44, %v784
  %v786 = vand.u32 %v785, 4294901760
  %787 = vmatpush2.msra.mxu0 %v786
  %788 = vmatprep.subr.mxu0 0.0
  %v789 = vand.u32 %v43, 4294901760
  %v790 = vsub.f32 %v43, %v789
  %v791 = vand.u32 %v790, 4294901760
  %792 = vmatpush2.msra.mxu0 %v791
  %793 = vmatprep.subr.mxu0 0.0
  %v794 = vand.u32 %v42, 4294901760
  %v795 = vsub.f32 %v42, %v794
  %v796 = vand.u32 %v795, 4294901760
  %797 = vmatpush2.msra.mxu0 %v796
  %798 = vmatprep.subr.mxu0 0.0
  %v799 = vand.u32 %v41, 4294901760
  %v800 = vsub.f32 %v41, %v799
  %v801 = vand.u32 %v800, 4294901760
  %802 = vmatpush2.msra.mxu0 %v801
  %803 = vmatprep.subr.mxu0 0.0
  %v804 = vand.u32 %v40, 4294901760
  %v805 = vsub.f32 %v40, %v804
  %v806 = vand.u32 %v805, 4294901760
  %807 = vmatpush2.msra.mxu0 %v806
  %808 = vmatprep.subr.mxu0 0.0
  %v809 = vand.u32 %v39, 4294901760
  %v810 = vsub.f32 %v39, %v809
  %v811 = vand.u32 %v810, 4294901760
  %812 = vmatpush2.msra.mxu0 %v811
  %813 = vmatprep.subr.mxu0 0.0
  %v814 = vand.u32 %v38, 4294901760
  %v815 = vsub.f32 %v38, %v814
  %v816 = vand.u32 %v815, 4294901760
  %817 = vmatpush2.msra.mxu0 %v816
  %818 = vmatprep.subr.mxu0 0.0
  %v819 = vand.u32 %v37, 4294901760
  %v820 = vsub.f32 %v37, %v819
  %v821 = vand.u32 %v820, 4294901760
  %822 = vmatpush2.msra.mxu0 %v821
  %823 = vmatprep.subr.mxu0 0.0
  %v824 = vand.u32 %v36, 4294901760
  %v825 = vsub.f32 %v36, %v824
  %v826 = vand.u32 %v825, 4294901760
  %827 = vmatpush2.msra.mxu0 %v826
  %828 = vmatprep.subr.mxu0 0.0
  %v829 = vand.u32 %v35, 4294901760
  %v830 = vsub.f32 %v35, %v829
  %v831 = vand.u32 %v830, 4294901760
  %832 = vmatpush2.msra.mxu0 %v831
  %833 = vmatprep.subr.mxu0 0.0
  %v834 = vand.u32 %v34, 4294901760
  %v835 = vsub.f32 %v34, %v834
  %v836 = vand.u32 %v835, 4294901760
  %837 = vmatpush2.msra.mxu0 %v836
  %v838 = vand.u32 %v84, 4294901760
  %839 = vmatprep.mubr.f32.mxu0 %v838
  %v840 = vand.u32 %v16, 4294901760
  %841 = vmatmul.mubr.f32.gmra.mxu0 %v840
  %v842 = vpop.f32.mrf.mxu0
  %v843 = vadd.f32 %v675, %v842
  %v844 = vpop.f32.mrf.mxu0
  %845 = vdwg.mxu0
  %846 = vmatprep.subr.mxu0 0.0
  %v847 = vand.u32 %v33, 4294901760
  %848 = vmatpush1.msra.mxu0 %v847
  %849 = vmatprep.subr.mxu0 0.0
  %v850 = vand.u32 %v32, 4294901760
  %851 = vmatpush1.msra.mxu0 %v850
  %852 = vmatprep.subr.mxu0 0.0
  %v853 = vand.u32 %v31, 4294901760
  %854 = vmatpush1.msra.mxu0 %v853
  %855 = vmatprep.subr.mxu0 0.0
  %v856 = vand.u32 %v30, 4294901760
  %857 = vmatpush1.msra.mxu0 %v856
  %858 = vmatprep.subr.mxu0 0.0
  %v859 = vand.u32 %v29, 4294901760
  %860 = vmatpush1.msra.mxu0 %v859
  %861 = vmatprep.subr.mxu0 0.0
  %v862 = vand.u32 %v28, 4294901760
  %863 = vmatpush1.msra.mxu0 %v862
  %864 = vmatprep.subr.mxu0 0.0
  %v865 = vand.u32 %v27, 4294901760
  %866 = vmatpush1.msra.mxu0 %v865
  %867 = vmatprep.subr.mxu0 0.0
  %v868 = vand.u32 %v26, 4294901760
  %869 = vmatpush1.msra.mxu0 %v868
  %870 = vmatprep.subr.mxu0 0.0
  %v871 = vand.u32 %v25, 4294901760
  %872 = vmatpush1.msra.mxu0 %v871
  %873 = vmatprep.subr.mxu0 0.0
  %v874 = vand.u32 %v24, 4294901760
  %875 = vmatpush1.msra.mxu0 %v874
  %876 = vmatprep.subr.mxu0 0.0
  %v877 = vand.u32 %v23, 4294901760
  %878 = vmatpush1.msra.mxu0 %v877
  %879 = vmatprep.subr.mxu0 0.0
  %v880 = vand.u32 %v22, 4294901760
  %881 = vmatpush1.msra.mxu0 %v880
  %882 = vmatprep.subr.mxu0 0.0
  %v883 = vand.u32 %v21, 4294901760
  %884 = vmatpush1.msra.mxu0 %v883
  %885 = vmatprep.subr.mxu0 0.0
  %v886 = vand.u32 %v20, 4294901760
  %887 = vmatpush1.msra.mxu0 %v886
  %888 = vmatprep.subr.mxu0 0.0
  %v889 = vand.u32 %v19, 4294901760
  %890 = vmatpush1.msra.mxu0 %v889
  %891 = vmatprep.subr.mxu0 0.0
  %v892 = vand.u32 %v18, 4294901760
  %893 = vmatpush1.msra.mxu0 %v892
  %894 = vmatprep.subr.mxu0 0.0
  %v895 = vand.u32 %v49, 4294901760
  %896 = vmatpush2.msra.mxu0 %v895
  %897 = vmatprep.subr.mxu0 0.0
  %v898 = vand.u32 %v48, 4294901760
  %899 = vmatpush2.msra.mxu0 %v898
  %900 = vmatprep.subr.mxu0 0.0
  %v901 = vand.u32 %v47, 4294901760
  %902 = vmatpush2.msra.mxu0 %v901
  %903 = vmatprep.subr.mxu0 0.0
  %v904 = vand.u32 %v46, 4294901760
  %905 = vmatpush2.msra.mxu0 %v904
  %906 = vmatprep.subr.mxu0 0.0
  %v907 = vand.u32 %v45, 4294901760
  %908 = vmatpush2.msra.mxu0 %v907
  %909 = vmatprep.subr.mxu0 0.0
  %v910 = vand.u32 %v44, 4294901760
  %911 = vmatpush2.msra.mxu0 %v910
  %912 = vmatprep.subr.mxu0 0.0
  %v913 = vand.u32 %v43, 4294901760
  %914 = vmatpush2.msra.mxu0 %v913
  %915 = vmatprep.subr.mxu0 0.0
  %v916 = vand.u32 %v42, 4294901760
  %917 = vmatpush2.msra.mxu0 %v916
  %918 = vmatprep.subr.mxu0 0.0
  %v919 = vand.u32 %v41, 4294901760
  %920 = vmatpush2.msra.mxu0 %v919
  %921 = vmatprep.subr.mxu0 0.0
  %v922 = vand.u32 %v40, 4294901760
  %923 = vmatpush2.msra.mxu0 %v922
  %924 = vmatprep.subr.mxu0 0.0
  %v925 = vand.u32 %v39, 4294901760
  %926 = vmatpush2.msra.mxu0 %v925
  %927 = vmatprep.subr.mxu0 0.0
  %v928 = vand.u32 %v38, 4294901760
  %929 = vmatpush2.msra.mxu0 %v928
  %930 = vmatprep.subr.mxu0 0.0
  %v931 = vand.u32 %v37, 4294901760
  %932 = vmatpush2.msra.mxu0 %v931
  %933 = vmatprep.subr.mxu0 0.0
  %v934 = vand.u32 %v36, 4294901760
  %935 = vmatpush2.msra.mxu0 %v934
  %936 = vmatprep.subr.mxu0 0.0
  %v937 = vand.u32 %v35, 4294901760
  %938 = vmatpush2.msra.mxu0 %v937
  %939 = vmatprep.subr.mxu0 0.0
  %v940 = vand.u32 %v34, 4294901760
  %941 = vmatpush2.msra.mxu0 %v940
  %v942 = vand.u32 %v84, 4294901760
  %943 = vmatprep.mubr.f32.mxu0 %v942
  %v944 = vand.u32 %v16, 4294901760
  %945 = vmatmul.mubr.f32.gmra.mxu0 %v944
  %v946 = vpop.f32.mrf.mxu0
  %v947 = vadd.f32 %v843, %v946
  %v948 = vpop.f32.mrf.mxu0
  %949 = vdwg.mxu0
  %950 = vmatprep.subr.mxu0 0.0
  %v951 = vand.u32 %v65, 4294901760
  %952 = vmatpush1.msra.mxu0 %v951
  %953 = vmatprep.subr.mxu0 0.0
  %v954 = vand.u32 %v64, 4294901760
  %955 = vmatpush1.msra.mxu0 %v954
  %956 = vmatprep.subr.mxu0 0.0
  %v957 = vand.u32 %v63, 4294901760
  %958 = vmatpush1.msra.mxu0 %v957
  %959 = vmatprep.subr.mxu0 0.0
  %v960 = vand.u32 %v62, 4294901760
  %961 = vmatpush1.msra.mxu0 %v960
  %962 = vmatprep.subr.mxu0 0.0
  %v963 = vand.u32 %v61, 4294901760
  %964 = vmatpush1.msra.mxu0 %v963
  %965 = vmatprep.subr.mxu0 0.0
  %v966 = vand.u32 %v60, 4294901760
  %967 = vmatpush1.msra.mxu0 %v966
  %968 = vmatprep.subr.mxu0 0.0
  %v969 = vand.u32 %v59, 4294901760
  %970 = vmatpush1.msra.mxu0 %v969
  %971 = vmatprep.subr.mxu0 0.0
  %v972 = vand.u32 %v58, 4294901760
  %973 = vmatpush1.msra.mxu0 %v972
  %974 = vmatprep.subr.mxu0 0.0
  %v975 = vand.u32 %v57, 4294901760
  %976 = vmatpush1.msra.mxu0 %v975
  %977 = vmatprep.subr.mxu0 0.0
  %v978 = vand.u32 %v56, 4294901760
  %979 = vmatpush1.msra.mxu0 %v978
  %980 = vmatprep.subr.mxu0 0.0
  %v981 = vand.u32 %v55, 4294901760
  %982 = vmatpush1.msra.mxu0 %v981
  %983 = vmatprep.subr.mxu0 0.0
  %v984 = vand.u32 %v54, 4294901760
  %985 = vmatpush1.msra.mxu0 %v984
  %986 = vmatprep.subr.mxu0 0.0
  %v987 = vand.u32 %v53, 4294901760
  %988 = vmatpush1.msra.mxu0 %v987
  %989 = vmatprep.subr.mxu0 0.0
  %v990 = vand.u32 %v52, 4294901760
  %991 = vmatpush1.msra.mxu0 %v990
  %992 = vmatprep.subr.mxu0 0.0
  %v993 = vand.u32 %v51, 4294901760
  %994 = vmatpush1.msra.mxu0 %v993
  %995 = vmatprep.subr.mxu0 0.0
  %v996 = vand.u32 %v50, 4294901760
  %997 = vmatpush1.msra.mxu0 %v996
  %998 = vmatprep.subr.mxu0 0.0
  %v999 = vand.u32 %v81, 4294901760
  %1000 = vmatpush2.msra.mxu0 %v999
  %1001 = vmatprep.subr.mxu0 0.0
  %v1002 = vand.u32 %v80, 4294901760
  %1003 = vmatpush2.msra.mxu0 %v1002
  %1004 = vmatprep.subr.mxu0 0.0
  %v1005 = vand.u32 %v79, 4294901760
  %1006 = vmatpush2.msra.mxu0 %v1005
  %1007 = vmatprep.subr.mxu0 0.0
  %v1008 = vand.u32 %v78, 4294901760
  %1009 = vmatpush2.msra.mxu0 %v1008
  %1010 = vmatprep.subr.mxu0 0.0
  %v1011 = vand.u32 %v77, 4294901760
  %1012 = vmatpush2.msra.mxu0 %v1011
  %1013 = vmatprep.subr.mxu0 0.0
  %v1014 = vand.u32 %v76, 4294901760
  %1015 = vmatpush2.msra.mxu0 %v1014
  %1016 = vmatprep.subr.mxu0 0.0
  %v1017 = vand.u32 %v75, 4294901760
  %1018 = vmatpush2.msra.mxu0 %v1017
  %1019 = vmatprep.subr.mxu0 0.0
  %v1020 = vand.u32 %v74, 4294901760
  %1021 = vmatpush2.msra.mxu0 %v1020
  %1022 = vmatprep.subr.mxu0 0.0
  %v1023 = vand.u32 %v73, 4294901760
  %1024 = vmatpush2.msra.mxu0 %v1023
  %1025 = vmatprep.subr.mxu0 0.0
  %v1026 = vand.u32 %v72, 4294901760
  %1027 = vmatpush2.msra.mxu0 %v1026
  %1028 = vmatprep.subr.mxu0 0.0
  %v1029 = vand.u32 %v71, 4294901760
  %1030 = vmatpush2.msra.mxu0 %v1029
  %1031 = vmatprep.subr.mxu0 0.0
  %v1032 = vand.u32 %v70, 4294901760
  %1033 = vmatpush2.msra.mxu0 %v1032
  %1034 = vmatprep.subr.mxu0 0.0
  %v1035 = vand.u32 %v69, 4294901760
  %1036 = vmatpush2.msra.mxu0 %v1035
  %1037 = vmatprep.subr.mxu0 0.0
  %v1038 = vand.u32 %v68, 4294901760
  %1039 = vmatpush2.msra.mxu0 %v1038
  %1040 = vmatprep.subr.mxu0 0.0
  %v1041 = vand.u32 %v67, 4294901760
  %1042 = vmatpush2.msra.mxu0 %v1041
  %1043 = vmatprep.subr.mxu0 0.0
  %v1044 = vand.u32 %v66, 4294901760
  %1045 = vmatpush2.msra.mxu0 %v1044
  %v1046 = vand.u32 %v85, 4294901760
  %v1047 = vsub.f32 %v85, %v1046
  %v1048 = vand.u32 %v1047, 4294901760
  %v1049 = vsub.f32 %v1047, %v1048
  %v1050 = vand.u32 %v1049, 4294901760
  %1051 = vmatprep.mubr.f32.mxu0 %v1050
  %v1052 = vand.u32 %v17, 4294901760
  %v1053 = vsub.f32 %v17, %v1052
  %v1054 = vand.u32 %v1053, 4294901760
  %v1055 = vsub.f32 %v1053, %v1054
  %v1056 = vand.u32 %v1055, 4294901760
  %1057 = vmatmul.mubr.f32.gmra.mxu0 %v1056
  %v1058 = vpop.f32.mrf.mxu0
  %v1059 = vadd.f32 %v947, %v1058
  %v1060 = vpop.f32.mrf.mxu0
  %1061 = vdwg.mxu0
  %1062 = vmatprep.subr.mxu0 0.0
  %v1063 = vand.u32 %v65, 4294901760
  %v1064 = vsub.f32 %v65, %v1063
  %v1065 = vand.u32 %v1064, 4294901760
  %v1066 = vsub.f32 %v1064, %v1065
  %v1067 = vand.u32 %v1066, 4294901760
  %1068 = vmatpush1.msra.mxu0 %v1067
  %1069 = vmatprep.subr.mxu0 0.0
  %v1070 = vand.u32 %v64, 4294901760
  %v1071 = vsub.f32 %v64, %v1070
  %v1072 = vand.u32 %v1071, 4294901760
  %v1073 = vsub.f32 %v1071, %v1072
  %v1074 = vand.u32 %v1073, 4294901760
  %1075 = vmatpush1.msra.mxu0 %v1074
  %1076 = vmatprep.subr.mxu0 0.0
  %v1077 = vand.u32 %v63, 4294901760
  %v1078 = vsub.f32 %v63, %v1077
  %v1079 = vand.u32 %v1078, 4294901760
  %v1080 = vsub.f32 %v1078, %v1079
  %v1081 = vand.u32 %v1080, 4294901760
  %1082 = vmatpush1.msra.mxu0 %v1081
  %1083 = vmatprep.subr.mxu0 0.0
  %v1084 = vand.u32 %v62, 4294901760
  %v1085 = vsub.f32 %v62, %v1084
  %v1086 = vand.u32 %v1085, 4294901760
  %v1087 = vsub.f32 %v1085, %v1086
  %v1088 = vand.u32 %v1087, 4294901760
  %1089 = vmatpush1.msra.mxu0 %v1088
  %1090 = vmatprep.subr.mxu0 0.0
  %v1091 = vand.u32 %v61, 4294901760
  %v1092 = vsub.f32 %v61, %v1091
  %v1093 = vand.u32 %v1092, 4294901760
  %v1094 = vsub.f32 %v1092, %v1093
  %v1095 = vand.u32 %v1094, 4294901760
  %1096 = vmatpush1.msra.mxu0 %v1095
  %1097 = vmatprep.subr.mxu0 0.0
  %v1098 = vand.u32 %v60, 4294901760
  %v1099 = vsub.f32 %v60, %v1098
  %v1100 = vand.u32 %v1099, 4294901760
  %v1101 = vsub.f32 %v1099, %v1100
  %v1102 = vand.u32 %v1101, 4294901760
  %1103 = vmatpush1.msra.mxu0 %v1102
  %1104 = vmatprep.subr.mxu0 0.0
  %v1105 = vand.u32 %v59, 4294901760
  %v1106 = vsub.f32 %v59, %v1105
  %v1107 = vand.u32 %v1106, 4294901760
  %v1108 = vsub.f32 %v1106, %v1107
  %v1109 = vand.u32 %v1108, 4294901760
  %1110 = vmatpush1.msra.mxu0 %v1109
  %1111 = vmatprep.subr.mxu0 0.0
  %v1112 = vand.u32 %v58, 4294901760
  %v1113 = vsub.f32 %v58, %v1112
  %v1114 = vand.u32 %v1113, 4294901760
  %v1115 = vsub.f32 %v1113, %v1114
  %v1116 = vand.u32 %v1115, 4294901760
  %1117 = vmatpush1.msra.mxu0 %v1116
  %1118 = vmatprep.subr.mxu0 0.0
  %v1119 = vand.u32 %v57, 4294901760
  %v1120 = vsub.f32 %v57, %v1119
  %v1121 = vand.u32 %v1120, 4294901760
  %v1122 = vsub.f32 %v1120, %v1121
  %v1123 = vand.u32 %v1122, 4294901760
  %1124 = vmatpush1.msra.mxu0 %v1123
  %1125 = vmatprep.subr.mxu0 0.0
  %v1126 = vand.u32 %v56, 4294901760
  %v1127 = vsub.f32 %v56, %v1126
  %v1128 = vand.u32 %v1127, 4294901760
  %v1129 = vsub.f32 %v1127, %v1128
  %v1130 = vand.u32 %v1129, 4294901760
  %1131 = vmatpush1.msra.mxu0 %v1130
  %1132 = vmatprep.subr.mxu0 0.0
  %v1133 = vand.u32 %v55, 4294901760
  %v1134 = vsub.f32 %v55, %v1133
  %v1135 = vand.u32 %v1134, 4294901760
  %v1136 = vsub.f32 %v1134, %v1135
  %v1137 = vand.u32 %v1136, 4294901760
  %1138 = vmatpush1.msra.mxu0 %v1137
  %1139 = vmatprep.subr.mxu0 0.0
  %v1140 = vand.u32 %v54, 4294901760
  %v1141 = vsub.f32 %v54, %v1140
  %v1142 = vand.u32 %v1141, 4294901760
  %v1143 = vsub.f32 %v1141, %v1142
  %v1144 = vand.u32 %v1143, 4294901760
  %1145 = vmatpush1.msra.mxu0 %v1144
  %1146 = vmatprep.subr.mxu0 0.0
  %v1147 = vand.u32 %v53, 4294901760
  %v1148 = vsub.f32 %v53, %v1147
  %v1149 = vand.u32 %v1148, 4294901760
  %v1150 = vsub.f32 %v1148, %v1149
  %v1151 = vand.u32 %v1150, 4294901760
  %1152 = vmatpush1.msra.mxu0 %v1151
  %1153 = vmatprep.subr.mxu0 0.0
  %v1154 = vand.u32 %v52, 4294901760
  %v1155 = vsub.f32 %v52, %v1154
  %v1156 = vand.u32 %v1155, 4294901760
  %v1157 = vsub.f32 %v1155, %v1156
  %v1158 = vand.u32 %v1157, 4294901760
  %1159 = vmatpush1.msra.mxu0 %v1158
  %1160 = vmatprep.subr.mxu0 0.0
  %v1161 = vand.u32 %v51, 4294901760
  %v1162 = vsub.f32 %v51, %v1161
  %v1163 = vand.u32 %v1162, 4294901760
  %v1164 = vsub.f32 %v1162, %v1163
  %v1165 = vand.u32 %v1164, 4294901760
  %1166 = vmatpush1.msra.mxu0 %v1165
  %1167 = vmatprep.subr.mxu0 0.0
  %v1168 = vand.u32 %v50, 4294901760
  %v1169 = vsub.f32 %v50, %v1168
  %v1170 = vand.u32 %v1169, 4294901760
  %v1171 = vsub.f32 %v1169, %v1170
  %v1172 = vand.u32 %v1171, 4294901760
  %1173 = vmatpush1.msra.mxu0 %v1172
  %1174 = vmatprep.subr.mxu0 0.0
  %v1175 = vand.u32 %v81, 4294901760
  %v1176 = vsub.f32 %v81, %v1175
  %v1177 = vand.u32 %v1176, 4294901760
  %v1178 = vsub.f32 %v1176, %v1177
  %v1179 = vand.u32 %v1178, 4294901760
  %1180 = vmatpush2.msra.mxu0 %v1179
  %1181 = vmatprep.subr.mxu0 0.0
  %v1182 = vand.u32 %v80, 4294901760
  %v1183 = vsub.f32 %v80, %v1182
  %v1184 = vand.u32 %v1183, 4294901760
  %v1185 = vsub.f32 %v1183, %v1184
  %v1186 = vand.u32 %v1185, 4294901760
  %1187 = vmatpush2.msra.mxu0 %v1186
  %1188 = vmatprep.subr.mxu0 0.0
  %v1189 = vand.u32 %v79, 4294901760
  %v1190 = vsub.f32 %v79, %v1189
  %v1191 = vand.u32 %v1190, 4294901760
  %v1192 = vsub.f32 %v1190, %v1191
  %v1193 = vand.u32 %v1192, 4294901760
  %1194 = vmatpush2.msra.mxu0 %v1193
  %1195 = vmatprep.subr.mxu0 0.0
  %v1196 = vand.u32 %v78, 4294901760
  %v1197 = vsub.f32 %v78, %v1196
  %v1198 = vand.u32 %v1197, 4294901760
  %v1199 = vsub.f32 %v1197, %v1198
  %v1200 = vand.u32 %v1199, 4294901760
  %1201 = vmatpush2.msra.mxu0 %v1200
  %1202 = vmatprep.subr.mxu0 0.0
  %v1203 = vand.u32 %v77, 4294901760
  %v1204 = vsub.f32 %v77, %v1203
  %v1205 = vand.u32 %v1204, 4294901760
  %v1206 = vsub.f32 %v1204, %v1205
  %v1207 = vand.u32 %v1206, 4294901760
  %1208 = vmatpush2.msra.mxu0 %v1207
  %1209 = vmatprep.subr.mxu0 0.0
  %v1210 = vand.u32 %v76, 4294901760
  %v1211 = vsub.f32 %v76, %v1210
  %v1212 = vand.u32 %v1211, 4294901760
  %v1213 = vsub.f32 %v1211, %v1212
  %v1214 = vand.u32 %v1213, 4294901760
  %1215 = vmatpush2.msra.mxu0 %v1214
  %1216 = vmatprep.subr.mxu0 0.0
  %v1217 = vand.u32 %v75, 4294901760
  %v1218 = vsub.f32 %v75, %v1217
  %v1219 = vand.u32 %v1218, 4294901760
  %v1220 = vsub.f32 %v1218, %v1219
  %v1221 = vand.u32 %v1220, 4294901760
  %1222 = vmatpush2.msra.mxu0 %v1221
  %1223 = vmatprep.subr.mxu0 0.0
  %v1224 = vand.u32 %v74, 4294901760
  %v1225 = vsub.f32 %v74, %v1224
  %v1226 = vand.u32 %v1225, 4294901760
  %v1227 = vsub.f32 %v1225, %v1226
  %v1228 = vand.u32 %v1227, 4294901760
  %1229 = vmatpush2.msra.mxu0 %v1228
  %1230 = vmatprep.subr.mxu0 0.0
  %v1231 = vand.u32 %v73, 4294901760
  %v1232 = vsub.f32 %v73, %v1231
  %v1233 = vand.u32 %v1232, 4294901760
  %v1234 = vsub.f32 %v1232, %v1233
  %v1235 = vand.u32 %v1234, 4294901760
  %1236 = vmatpush2.msra.mxu0 %v1235
  %1237 = vmatprep.subr.mxu0 0.0
  %v1238 = vand.u32 %v72, 4294901760
  %v1239 = vsub.f32 %v72, %v1238
  %v1240 = vand.u32 %v1239, 4294901760
  %v1241 = vsub.f32 %v1239, %v1240
  %v1242 = vand.u32 %v1241, 4294901760
  %1243 = vmatpush2.msra.mxu0 %v1242
  %1244 = vmatprep.subr.mxu0 0.0
  %v1245 = vand.u32 %v71, 4294901760
  %v1246 = vsub.f32 %v71, %v1245
  %v1247 = vand.u32 %v1246, 4294901760
  %v1248 = vsub.f32 %v1246, %v1247
  %v1249 = vand.u32 %v1248, 4294901760
  %1250 = vmatpush2.msra.mxu0 %v1249
  %1251 = vmatprep.subr.mxu0 0.0
  %v1252 = vand.u32 %v70, 4294901760
  %v1253 = vsub.f32 %v70, %v1252
  %v1254 = vand.u32 %v1253, 4294901760
  %v1255 = vsub.f32 %v1253, %v1254
  %v1256 = vand.u32 %v1255, 4294901760
  %1257 = vmatpush2.msra.mxu0 %v1256
  %1258 = vmatprep.subr.mxu0 0.0
  %v1259 = vand.u32 %v69, 4294901760
  %v1260 = vsub.f32 %v69, %v1259
  %v1261 = vand.u32 %v1260, 4294901760
  %v1262 = vsub.f32 %v1260, %v1261
  %v1263 = vand.u32 %v1262, 4294901760
  %1264 = vmatpush2.msra.mxu0 %v1263
  %1265 = vmatprep.subr.mxu0 0.0
  %v1266 = vand.u32 %v68, 4294901760
  %v1267 = vsub.f32 %v68, %v1266
  %v1268 = vand.u32 %v1267, 4294901760
  %v1269 = vsub.f32 %v1267, %v1268
  %v1270 = vand.u32 %v1269, 4294901760
  %1271 = vmatpush2.msra.mxu0 %v1270
  %1272 = vmatprep.subr.mxu0 0.0
  %v1273 = vand.u32 %v67, 4294901760
  %v1274 = vsub.f32 %v67, %v1273
  %v1275 = vand.u32 %v1274, 4294901760
  %v1276 = vsub.f32 %v1274, %v1275
  %v1277 = vand.u32 %v1276, 4294901760
  %1278 = vmatpush2.msra.mxu0 %v1277
  %1279 = vmatprep.subr.mxu0 0.0
  %v1280 = vand.u32 %v66, 4294901760
  %v1281 = vsub.f32 %v66, %v1280
  %v1282 = vand.u32 %v1281, 4294901760
  %v1283 = vsub.f32 %v1281, %v1282
  %v1284 = vand.u32 %v1283, 4294901760
  %1285 = vmatpush2.msra.mxu0 %v1284
  %v1286 = vand.u32 %v85, 4294901760
  %1287 = vmatprep.mubr.f32.mxu0 %v1286
  %v1288 = vand.u32 %v17, 4294901760
  %1289 = vmatmul.mubr.f32.gmra.mxu0 %v1288
  %v1290 = vpop.f32.mrf.mxu0
  %v1291 = vadd.f32 %v1059, %v1290
  %v1292 = vpop.f32.mrf.mxu0
  %1293 = vdwg.mxu0
  %1294 = vmatprep.subr.mxu0 0.0
  %v1295 = vand.u32 %v65, 4294901760
  %v1296 = vsub.f32 %v65, %v1295
  %1297 = vmatpush1.msra.mxu0 %v1296
  %1298 = vmatprep.subr.mxu0 0.0
  %v1299 = vand.u32 %v64, 4294901760
  %v1300 = vsub.f32 %v64, %v1299
  %1301 = vmatpush1.msra.mxu0 %v1300
  %1302 = vmatprep.subr.mxu0 0.0
  %v1303 = vand.u32 %v63, 4294901760
  %v1304 = vsub.f32 %v63, %v1303
  %1305 = vmatpush1.msra.mxu0 %v1304
  %1306 = vmatprep.subr.mxu0 0.0
  %v1307 = vand.u32 %v62, 4294901760
  %v1308 = vsub.f32 %v62, %v1307
  %1309 = vmatpush1.msra.mxu0 %v1308
  %1310 = vmatprep.subr.mxu0 0.0
  %v1311 = vand.u32 %v61, 4294901760
  %v1312 = vsub.f32 %v61, %v1311
  %1313 = vmatpush1.msra.mxu0 %v1312
  %1314 = vmatprep.subr.mxu0 0.0
  %v1315 = vand.u32 %v60, 4294901760
  %v1316 = vsub.f32 %v60, %v1315
  %1317 = vmatpush1.msra.mxu0 %v1316
  %1318 = vmatprep.subr.mxu0 0.0
  %v1319 = vand.u32 %v59, 4294901760
  %v1320 = vsub.f32 %v59, %v1319
  %1321 = vmatpush1.msra.mxu0 %v1320
  %1322 = vmatprep.subr.mxu0 0.0
  %v1323 = vand.u32 %v58, 4294901760
  %v1324 = vsub.f32 %v58, %v1323
  %1325 = vmatpush1.msra.mxu0 %v1324
  %1326 = vmatprep.subr.mxu0 0.0
  %v1327 = vand.u32 %v57, 4294901760
  %v1328 = vsub.f32 %v57, %v1327
  %1329 = vmatpush1.msra.mxu0 %v1328
  %1330 = vmatprep.subr.mxu0 0.0
  %v1331 = vand.u32 %v56, 4294901760
  %v1332 = vsub.f32 %v56, %v1331
  %1333 = vmatpush1.msra.mxu0 %v1332
  %1334 = vmatprep.subr.mxu0 0.0
  %v1335 = vand.u32 %v55, 4294901760
  %v1336 = vsub.f32 %v55, %v1335
  %1337 = vmatpush1.msra.mxu0 %v1336
  %1338 = vmatprep.subr.mxu0 0.0
  %v1339 = vand.u32 %v54, 4294901760
  %v1340 = vsub.f32 %v54, %v1339
  %1341 = vmatpush1.msra.mxu0 %v1340
  %1342 = vmatprep.subr.mxu0 0.0
  %v1343 = vand.u32 %v53, 4294901760
  %v1344 = vsub.f32 %v53, %v1343
  %1345 = vmatpush1.msra.mxu0 %v1344
  %1346 = vmatprep.subr.mxu0 0.0
  %v1347 = vand.u32 %v52, 4294901760
  %v1348 = vsub.f32 %v52, %v1347
  %1349 = vmatpush1.msra.mxu0 %v1348
  %1350 = vmatprep.subr.mxu0 0.0
  %v1351 = vand.u32 %v51, 4294901760
  %v1352 = vsub.f32 %v51, %v1351
  %1353 = vmatpush1.msra.mxu0 %v1352
  %1354 = vmatprep.subr.mxu0 0.0
  %v1355 = vand.u32 %v50, 4294901760
  %v1356 = vsub.f32 %v50, %v1355
  %1357 = vmatpush1.msra.mxu0 %v1356
  %1358 = vmatprep.subr.mxu0 0.0
  %v1359 = vand.u32 %v81, 4294901760
  %v1360 = vsub.f32 %v81, %v1359
  %1361 = vmatpush2.msra.mxu0 %v1360
  %1362 = vmatprep.subr.mxu0 0.0
  %v1363 = vand.u32 %v80, 4294901760
  %v1364 = vsub.f32 %v80, %v1363
  %1365 = vmatpush2.msra.mxu0 %v1364
  %1366 = vmatprep.subr.mxu0 0.0
  %v1367 = vand.u32 %v79, 4294901760
  %v1368 = vsub.f32 %v79, %v1367
  %1369 = vmatpush2.msra.mxu0 %v1368
  %1370 = vmatprep.subr.mxu0 0.0
  %v1371 = vand.u32 %v78, 4294901760
  %v1372 = vsub.f32 %v78, %v1371
  %1373 = vmatpush2.msra.mxu0 %v1372
  %1374 = vmatprep.subr.mxu0 0.0
  %v1375 = vand.u32 %v77, 4294901760
  %v1376 = vsub.f32 %v77, %v1375
  %1377 = vmatpush2.msra.mxu0 %v1376
  %1378 = vmatprep.subr.mxu0 0.0
  %v1379 = vand.u32 %v76, 4294901760
  %v1380 = vsub.f32 %v76, %v1379
  %1381 = vmatpush2.msra.mxu0 %v1380
  %1382 = vmatprep.subr.mxu0 0.0
  %v1383 = vand.u32 %v75, 4294901760
  %v1384 = vsub.f32 %v75, %v1383
  %1385 = vmatpush2.msra.mxu0 %v1384
  %1386 = vmatprep.subr.mxu0 0.0
  %v1387 = vand.u32 %v74, 4294901760
  %v1388 = vsub.f32 %v74, %v1387
  %1389 = vmatpush2.msra.mxu0 %v1388
  %1390 = vmatprep.subr.mxu0 0.0
  %v1391 = vand.u32 %v73, 4294901760
  %v1392 = vsub.f32 %v73, %v1391
  %1393 = vmatpush2.msra.mxu0 %v1392
  %1394 = vmatprep.subr.mxu0 0.0
  %v1395 = vand.u32 %v72, 4294901760
  %v1396 = vsub.f32 %v72, %v1395
  %1397 = vmatpush2.msra.mxu0 %v1396
  %1398 = vmatprep.subr.mxu0 0.0
  %v1399 = vand.u32 %v71, 4294901760
  %v1400 = vsub.f32 %v71, %v1399
  %1401 = vmatpush2.msra.mxu0 %v1400
  %1402 = vmatprep.subr.mxu0 0.0
  %v1403 = vand.u32 %v70, 4294901760
  %v1404 = vsub.f32 %v70, %v1403
  %1405 = vmatpush2.msra.mxu0 %v1404
  %1406 = vmatprep.subr.mxu0 0.0
  %v1407 = vand.u32 %v69, 4294901760
  %v1408 = vsub.f32 %v69, %v1407
  %1409 = vmatpush2.msra.mxu0 %v1408
  %1410 = vmatprep.subr.mxu0 0.0
  %v1411 = vand.u32 %v68, 4294901760
  %v1412 = vsub.f32 %v68, %v1411
  %1413 = vmatpush2.msra.mxu0 %v1412
  %1414 = vmatprep.subr.mxu0 0.0
  %v1415 = vand.u32 %v67, 4294901760
  %v1416 = vsub.f32 %v67, %v1415
  %1417 = vmatpush2.msra.mxu0 %v1416
  %1418 = vmatprep.subr.mxu0 0.0
  %v1419 = vand.u32 %v66, 4294901760
  %v1420 = vsub.f32 %v66, %v1419
  %1421 = vmatpush2.msra.mxu0 %v1420
  %v1422 = vand.u32 %v85, 4294901760
  %v1423 = vsub.f32 %v85, %v1422
  %1424 = vmatprep.mubr.f32.mxu0 %v1423
  %v1425 = vand.u32 %v17, 4294901760
  %v1426 = vsub.f32 %v17, %v1425
  %1427 = vmatmul.mubr.f32.gmra.mxu0 %v1426
  %v1428 = vpop.f32.mrf.mxu0
  %v1429 = vadd.f32 %v1291, %v1428
  %v1430 = vpop.f32.mrf.mxu0
  %1431 = vdwg.mxu0
  %1432 = vmatprep.subr.mxu0 0.0
  %v1433 = vand.u32 %v65, 4294901760
  %1434 = vmatpush1.msra.mxu0 %v1433
  %1435 = vmatprep.subr.mxu0 0.0
  %v1436 = vand.u32 %v64, 4294901760
  %1437 = vmatpush1.msra.mxu0 %v1436
  %1438 = vmatprep.subr.mxu0 0.0
  %v1439 = vand.u32 %v63, 4294901760
  %1440 = vmatpush1.msra.mxu0 %v1439
  %1441 = vmatprep.subr.mxu0 0.0
  %v1442 = vand.u32 %v62, 4294901760
  %1443 = vmatpush1.msra.mxu0 %v1442
  %1444 = vmatprep.subr.mxu0 0.0
  %v1445 = vand.u32 %v61, 4294901760
  %1446 = vmatpush1.msra.mxu0 %v1445
  %1447 = vmatprep.subr.mxu0 0.0
  %v1448 = vand.u32 %v60, 4294901760
  %1449 = vmatpush1.msra.mxu0 %v1448
  %1450 = vmatprep.subr.mxu0 0.0
  %v1451 = vand.u32 %v59, 4294901760
  %1452 = vmatpush1.msra.mxu0 %v1451
  %1453 = vmatprep.subr.mxu0 0.0
  %v1454 = vand.u32 %v58, 4294901760
  %1455 = vmatpush1.msra.mxu0 %v1454
  %1456 = vmatprep.subr.mxu0 0.0
  %v1457 = vand.u32 %v57, 4294901760
  %1458 = vmatpush1.msra.mxu0 %v1457
  %1459 = vmatprep.subr.mxu0 0.0
  %v1460 = vand.u32 %v56, 4294901760
  %1461 = vmatpush1.msra.mxu0 %v1460
  %1462 = vmatprep.subr.mxu0 0.0
  %v1463 = vand.u32 %v55, 4294901760
  %1464 = vmatpush1.msra.mxu0 %v1463
  %1465 = vmatprep.subr.mxu0 0.0
  %v1466 = vand.u32 %v54, 4294901760
  %1467 = vmatpush1.msra.mxu0 %v1466
  %1468 = vmatprep.subr.mxu0 0.0
  %v1469 = vand.u32 %v53, 4294901760
  %1470 = vmatpush1.msra.mxu0 %v1469
  %1471 = vmatprep.subr.mxu0 0.0
  %v1472 = vand.u32 %v52, 4294901760
  %1473 = vmatpush1.msra.mxu0 %v1472
  %1474 = vmatprep.subr.mxu0 0.0
  %v1475 = vand.u32 %v51, 4294901760
  %1476 = vmatpush1.msra.mxu0 %v1475
  %1477 = vmatprep.subr.mxu0 0.0
  %v1478 = vand.u32 %v50, 4294901760
  %1479 = vmatpush1.msra.mxu0 %v1478
  %1480 = vmatprep.subr.mxu0 0.0
  %v1481 = vand.u32 %v81, 4294901760
  %1482 = vmatpush2.msra.mxu0 %v1481
  %1483 = vmatprep.subr.mxu0 0.0
  %v1484 = vand.u32 %v80, 4294901760
  %1485 = vmatpush2.msra.mxu0 %v1484
  %1486 = vmatprep.subr.mxu0 0.0
  %v1487 = vand.u32 %v79, 4294901760
  %1488 = vmatpush2.msra.mxu0 %v1487
  %1489 = vmatprep.subr.mxu0 0.0
  %v1490 = vand.u32 %v78, 4294901760
  %1491 = vmatpush2.msra.mxu0 %v1490
  %1492 = vmatprep.subr.mxu0 0.0
  %v1493 = vand.u32 %v77, 4294901760
  %1494 = vmatpush2.msra.mxu0 %v1493
  %1495 = vmatprep.subr.mxu0 0.0
  %v1496 = vand.u32 %v76, 4294901760
  %1497 = vmatpush2.msra.mxu0 %v1496
  %1498 = vmatprep.subr.mxu0 0.0
  %v1499 = vand.u32 %v75, 4294901760
  %1500 = vmatpush2.msra.mxu0 %v1499
  %1501 = vmatprep.subr.mxu0 0.0
  %v1502 = vand.u32 %v74, 4294901760
  %1503 = vmatpush2.msra.mxu0 %v1502
  %1504 = vmatprep.subr.mxu0 0.0
  %v1505 = vand.u32 %v73, 4294901760
  %1506 = vmatpush2.msra.mxu0 %v1505
  %1507 = vmatprep.subr.mxu0 0.0
  %v1508 = vand.u32 %v72, 4294901760
  %1509 = vmatpush2.msra.mxu0 %v1508
  %1510 = vmatprep.subr.mxu0 0.0
  %v1511 = vand.u32 %v71, 4294901760
  %1512 = vmatpush2.msra.mxu0 %v1511
  %1513 = vmatprep.subr.mxu0 0.0
  %v1514 = vand.u32 %v70, 4294901760
  %1515 = vmatpush2.msra.mxu0 %v1514
  %1516 = vmatprep.subr.mxu0 0.0
  %v1517 = vand.u32 %v69, 4294901760
  %1518 = vmatpush2.msra.mxu0 %v1517
  %1519 = vmatprep.subr.mxu0 0.0
  %v1520 = vand.u32 %v68, 4294901760
  %1521 = vmatpush2.msra.mxu0 %v1520
  %1522 = vmatprep.subr.mxu0 0.0
  %v1523 = vand.u32 %v67, 4294901760
  %1524 = vmatpush2.msra.mxu0 %v1523
  %1525 = vmatprep.subr.mxu0 0.0
  %v1526 = vand.u32 %v66, 4294901760
  %1527 = vmatpush2.msra.mxu0 %v1526
  %v1528 = vand.u32 %v85, 4294901760
  %v1529 = vsub.f32 %v85, %v1528
  %v1530 = vand.u32 %v1529, 4294901760
  %1531 = vmatprep.mubr.f32.mxu0 %v1530
  %v1532 = vand.u32 %v17, 4294901760
  %v1533 = vsub.f32 %v17, %v1532
  %v1534 = vand.u32 %v1533, 4294901760
  %1535 = vmatmul.mubr.f32.gmra.mxu0 %v1534
  %v1536 = vpop.f32.mrf.mxu0
  %v1537 = vadd.f32 %v1429, %v1536
  %v1538 = vpop.f32.mrf.mxu0
  %1539 = vdwg.mxu0
  %1540 = vmatprep.subr.mxu0 0.0
  %v1541 = vand.u32 %v65, 4294901760
  %v1542 = vsub.f32 %v65, %v1541
  %v1543 = vand.u32 %v1542, 4294901760
  %1544 = vmatpush1.msra.mxu0 %v1543
  %1545 = vmatprep.subr.mxu0 0.0
  %v1546 = vand.u32 %v64, 4294901760
  %v1547 = vsub.f32 %v64, %v1546
  %v1548 = vand.u32 %v1547, 4294901760
  %1549 = vmatpush1.msra.mxu0 %v1548
  %1550 = vmatprep.subr.mxu0 0.0
  %v1551 = vand.u32 %v63, 4294901760
  %v1552 = vsub.f32 %v63, %v1551
  %v1553 = vand.u32 %v1552, 4294901760
  %1554 = vmatpush1.msra.mxu0 %v1553
  %1555 = vmatprep.subr.mxu0 0.0
  %v1556 = vand.u32 %v62, 4294901760
  %v1557 = vsub.f32 %v62, %v1556
  %v1558 = vand.u32 %v1557, 4294901760
  %1559 = vmatpush1.msra.mxu0 %v1558
  %1560 = vmatprep.subr.mxu0 0.0
  %v1561 = vand.u32 %v61, 4294901760
  %v1562 = vsub.f32 %v61, %v1561
  %v1563 = vand.u32 %v1562, 4294901760
  %1564 = vmatpush1.msra.mxu0 %v1563
  %1565 = vmatprep.subr.mxu0 0.0
  %v1566 = vand.u32 %v60, 4294901760
  %v1567 = vsub.f32 %v60, %v1566
  %v1568 = vand.u32 %v1567, 4294901760
  %1569 = vmatpush1.msra.mxu0 %v1568
  %1570 = vmatprep.subr.mxu0 0.0
  %v1571 = vand.u32 %v59, 4294901760
  %v1572 = vsub.f32 %v59, %v1571
  %v1573 = vand.u32 %v1572, 4294901760
  %1574 = vmatpush1.msra.mxu0 %v1573
  %1575 = vmatprep.subr.mxu0 0.0
  %v1576 = vand.u32 %v58, 4294901760
  %v1577 = vsub.f32 %v58, %v1576
  %v1578 = vand.u32 %v1577, 4294901760
  %1579 = vmatpush1.msra.mxu0 %v1578
  %1580 = vmatprep.subr.mxu0 0.0
  %v1581 = vand.u32 %v57, 4294901760
  %v1582 = vsub.f32 %v57, %v1581
  %v1583 = vand.u32 %v1582, 4294901760
  %1584 = vmatpush1.msra.mxu0 %v1583
  %1585 = vmatprep.subr.mxu0 0.0
  %v1586 = vand.u32 %v56, 4294901760
  %v1587 = vsub.f32 %v56, %v1586
  %v1588 = vand.u32 %v1587, 4294901760
  %1589 = vmatpush1.msra.mxu0 %v1588
  %1590 = vmatprep.subr.mxu0 0.0
  %v1591 = vand.u32 %v55, 4294901760
  %v1592 = vsub.f32 %v55, %v1591
  %v1593 = vand.u32 %v1592, 4294901760
  %1594 = vmatpush1.msra.mxu0 %v1593
  %1595 = vmatprep.subr.mxu0 0.0
  %v1596 = vand.u32 %v54, 4294901760
  %v1597 = vsub.f32 %v54, %v1596
  %v1598 = vand.u32 %v1597, 4294901760
  %1599 = vmatpush1.msra.mxu0 %v1598
  %1600 = vmatprep.subr.mxu0 0.0
  %v1601 = vand.u32 %v53, 4294901760
  %v1602 = vsub.f32 %v53, %v1601
  %v1603 = vand.u32 %v1602, 4294901760
  %1604 = vmatpush1.msra.mxu0 %v1603
  %1605 = vmatprep.subr.mxu0 0.0
  %v1606 = vand.u32 %v52, 4294901760
  %v1607 = vsub.f32 %v52, %v1606
  %v1608 = vand.u32 %v1607, 4294901760
  %1609 = vmatpush1.msra.mxu0 %v1608
  %1610 = vmatprep.subr.mxu0 0.0
  %v1611 = vand.u32 %v51, 4294901760
  %v1612 = vsub.f32 %v51, %v1611
  %v1613 = vand.u32 %v1612, 4294901760
  %1614 = vmatpush1.msra.mxu0 %v1613
  %1615 = vmatprep.subr.mxu0 0.0
  %v1616 = vand.u32 %v50, 4294901760
  %v1617 = vsub.f32 %v50, %v1616
  %v1618 = vand.u32 %v1617, 4294901760
  %1619 = vmatpush1.msra.mxu0 %v1618
  %1620 = vmatprep.subr.mxu0 0.0
  %v1621 = vand.u32 %v81, 4294901760
  %v1622 = vsub.f32 %v81, %v1621
  %v1623 = vand.u32 %v1622, 4294901760
  %1624 = vmatpush2.msra.mxu0 %v1623
  %1625 = vmatprep.subr.mxu0 0.0
  %v1626 = vand.u32 %v80, 4294901760
  %v1627 = vsub.f32 %v80, %v1626
  %v1628 = vand.u32 %v1627, 4294901760
  %1629 = vmatpush2.msra.mxu0 %v1628
  %1630 = vmatprep.subr.mxu0 0.0
  %v1631 = vand.u32 %v79, 4294901760
  %v1632 = vsub.f32 %v79, %v1631
  %v1633 = vand.u32 %v1632, 4294901760
  %1634 = vmatpush2.msra.mxu0 %v1633
  %1635 = vmatprep.subr.mxu0 0.0
  %v1636 = vand.u32 %v78, 4294901760
  %v1637 = vsub.f32 %v78, %v1636
  %v1638 = vand.u32 %v1637, 4294901760
  %1639 = vmatpush2.msra.mxu0 %v1638
  %1640 = vmatprep.subr.mxu0 0.0
  %v1641 = vand.u32 %v77, 4294901760
  %v1642 = vsub.f32 %v77, %v1641
  %v1643 = vand.u32 %v1642, 4294901760
  %1644 = vmatpush2.msra.mxu0 %v1643
  %1645 = vmatprep.subr.mxu0 0.0
  %v1646 = vand.u32 %v76, 4294901760
  %v1647 = vsub.f32 %v76, %v1646
  %v1648 = vand.u32 %v1647, 4294901760
  %1649 = vmatpush2.msra.mxu0 %v1648
  %1650 = vmatprep.subr.mxu0 0.0
  %v1651 = vand.u32 %v75, 4294901760
  %v1652 = vsub.f32 %v75, %v1651
  %v1653 = vand.u32 %v1652, 4294901760
  %1654 = vmatpush2.msra.mxu0 %v1653
  %1655 = vmatprep.subr.mxu0 0.0
  %v1656 = vand.u32 %v74, 4294901760
  %v1657 = vsub.f32 %v74, %v1656
  %v1658 = vand.u32 %v1657, 4294901760
  %1659 = vmatpush2.msra.mxu0 %v1658
  %1660 = vmatprep.subr.mxu0 0.0
  %v1661 = vand.u32 %v73, 4294901760
  %v1662 = vsub.f32 %v73, %v1661
  %v1663 = vand.u32 %v1662, 4294901760
  %1664 = vmatpush2.msra.mxu0 %v1663
  %1665 = vmatprep.subr.mxu0 0.0
  %v1666 = vand.u32 %v72, 4294901760
  %v1667 = vsub.f32 %v72, %v1666
  %v1668 = vand.u32 %v1667, 4294901760
  %1669 = vmatpush2.msra.mxu0 %v1668
  %1670 = vmatprep.subr.mxu0 0.0
  %v1671 = vand.u32 %v71, 4294901760
  %v1672 = vsub.f32 %v71, %v1671
  %v1673 = vand.u32 %v1672, 4294901760
  %1674 = vmatpush2.msra.mxu0 %v1673
  %1675 = vmatprep.subr.mxu0 0.0
  %v1676 = vand.u32 %v70, 4294901760
  %v1677 = vsub.f32 %v70, %v1676
  %v1678 = vand.u32 %v1677, 4294901760
  %1679 = vmatpush2.msra.mxu0 %v1678
  %1680 = vmatprep.subr.mxu0 0.0
  %v1681 = vand.u32 %v69, 4294901760
  %v1682 = vsub.f32 %v69, %v1681
  %v1683 = vand.u32 %v1682, 4294901760
  %1684 = vmatpush2.msra.mxu0 %v1683
  %1685 = vmatprep.subr.mxu0 0.0
  %v1686 = vand.u32 %v68, 4294901760
  %v1687 = vsub.f32 %v68, %v1686
  %v1688 = vand.u32 %v1687, 4294901760
  %1689 = vmatpush2.msra.mxu0 %v1688
  %1690 = vmatprep.subr.mxu0 0.0
  %v1691 = vand.u32 %v67, 4294901760
  %v1692 = vsub.f32 %v67, %v1691
  %v1693 = vand.u32 %v1692, 4294901760
  %1694 = vmatpush2.msra.mxu0 %v1693
  %1695 = vmatprep.subr.mxu0 0.0
  %v1696 = vand.u32 %v66, 4294901760
  %v1697 = vsub.f32 %v66, %v1696
  %v1698 = vand.u32 %v1697, 4294901760
  %1699 = vmatpush2.msra.mxu0 %v1698
  %v1700 = vand.u32 %v85, 4294901760
  %1701 = vmatprep.mubr.f32.mxu0 %v1700
  %v1702 = vand.u32 %v17, 4294901760
  %1703 = vmatmul.mubr.f32.gmra.mxu0 %v1702
  %v1704 = vpop.f32.mrf.mxu0
  %v1705 = vadd.f32 %v1537, %v1704
  %v1706 = vpop.f32.mrf.mxu0
  %1707 = vdwg.mxu0
  %1708 = vmatprep.subr.mxu0 0.0
  %v1709 = vand.u32 %v65, 4294901760
  %1710 = vmatpush1.msra.mxu0 %v1709
  %1711 = vmatprep.subr.mxu0 0.0
  %v1712 = vand.u32 %v64, 4294901760
  %1713 = vmatpush1.msra.mxu0 %v1712
  %1714 = vmatprep.subr.mxu0 0.0
  %v1715 = vand.u32 %v63, 4294901760
  %1716 = vmatpush1.msra.mxu0 %v1715
  %1717 = vmatprep.subr.mxu0 0.0
  %v1718 = vand.u32 %v62, 4294901760
  %1719 = vmatpush1.msra.mxu0 %v1718
  %1720 = vmatprep.subr.mxu0 0.0
  %v1721 = vand.u32 %v61, 4294901760
  %1722 = vmatpush1.msra.mxu0 %v1721
  %1723 = vmatprep.subr.mxu0 0.0
  %v1724 = vand.u32 %v60, 4294901760
  %1725 = vmatpush1.msra.mxu0 %v1724
  %1726 = vmatprep.subr.mxu0 0.0
  %v1727 = vand.u32 %v59, 4294901760
  %1728 = vmatpush1.msra.mxu0 %v1727
  %1729 = vmatprep.subr.mxu0 0.0
  %v1730 = vand.u32 %v58, 4294901760
  %1731 = vmatpush1.msra.mxu0 %v1730
  %1732 = vmatprep.subr.mxu0 0.0
  %v1733 = vand.u32 %v57, 4294901760
  %1734 = vmatpush1.msra.mxu0 %v1733
  %1735 = vmatprep.subr.mxu0 0.0
  %v1736 = vand.u32 %v56, 4294901760
  %1737 = vmatpush1.msra.mxu0 %v1736
  %1738 = vmatprep.subr.mxu0 0.0
  %v1739 = vand.u32 %v55, 4294901760
  %1740 = vmatpush1.msra.mxu0 %v1739
  %1741 = vmatprep.subr.mxu0 0.0
  %v1742 = vand.u32 %v54, 4294901760
  %1743 = vmatpush1.msra.mxu0 %v1742
  %1744 = vmatprep.subr.mxu0 0.0
  %v1745 = vand.u32 %v53, 4294901760
  %1746 = vmatpush1.msra.mxu0 %v1745
  %1747 = vmatprep.subr.mxu0 0.0
  %v1748 = vand.u32 %v52, 4294901760
  %1749 = vmatpush1.msra.mxu0 %v1748
  %1750 = vmatprep.subr.mxu0 0.0
  %v1751 = vand.u32 %v51, 4294901760
  %1752 = vmatpush1.msra.mxu0 %v1751
  %1753 = vmatprep.subr.mxu0 0.0
  %v1754 = vand.u32 %v50, 4294901760
  %1755 = vmatpush1.msra.mxu0 %v1754
  %1756 = vmatprep.subr.mxu0 0.0
  %v1757 = vand.u32 %v81, 4294901760
  %1758 = vmatpush2.msra.mxu0 %v1757
  %1759 = vmatprep.subr.mxu0 0.0
  %v1760 = vand.u32 %v80, 4294901760
  %1761 = vmatpush2.msra.mxu0 %v1760
  %1762 = vmatprep.subr.mxu0 0.0
  %v1763 = vand.u32 %v79, 4294901760
  %1764 = vmatpush2.msra.mxu0 %v1763
  %1765 = vmatprep.subr.mxu0 0.0
  %v1766 = vand.u32 %v78, 4294901760
  %1767 = vmatpush2.msra.mxu0 %v1766
  %1768 = vmatprep.subr.mxu0 0.0
  %v1769 = vand.u32 %v77, 4294901760
  %1770 = vmatpush2.msra.mxu0 %v1769
  %1771 = vmatprep.subr.mxu0 0.0
  %v1772 = vand.u32 %v76, 4294901760
  %1773 = vmatpush2.msra.mxu0 %v1772
  %1774 = vmatprep.subr.mxu0 0.0
  %v1775 = vand.u32 %v75, 4294901760
  %1776 = vmatpush2.msra.mxu0 %v1775
  %1777 = vmatprep.subr.mxu0 0.0
  %v1778 = vand.u32 %v74, 4294901760
  %1779 = vmatpush2.msra.mxu0 %v1778
  %1780 = vmatprep.subr.mxu0 0.0
  %v1781 = vand.u32 %v73, 4294901760
  %1782 = vmatpush2.msra.mxu0 %v1781
  %1783 = vmatprep.subr.mxu0 0.0
  %v1784 = vand.u32 %v72, 4294901760
  %1785 = vmatpush2.msra.mxu0 %v1784
  %1786 = vmatprep.subr.mxu0 0.0
  %v1787 = vand.u32 %v71, 4294901760
  %1788 = vmatpush2.msra.mxu0 %v1787
  %1789 = vmatprep.subr.mxu0 0.0
  %v1790 = vand.u32 %v70, 4294901760
  %1791 = vmatpush2.msra.mxu0 %v1790
  %1792 = vmatprep.subr.mxu0 0.0
  %v1793 = vand.u32 %v69, 4294901760
  %1794 = vmatpush2.msra.mxu0 %v1793
  %1795 = vmatprep.subr.mxu0 0.0
  %v1796 = vand.u32 %v68, 4294901760
  %1797 = vmatpush2.msra.mxu0 %v1796
  %1798 = vmatprep.subr.mxu0 0.0
  %v1799 = vand.u32 %v67, 4294901760
  %1800 = vmatpush2.msra.mxu0 %v1799
  %1801 = vmatprep.subr.mxu0 0.0
  %v1802 = vand.u32 %v66, 4294901760
  %1803 = vmatpush2.msra.mxu0 %v1802
  %v1804 = vand.u32 %v85, 4294901760
  %1805 = vmatprep.mubr.f32.mxu0 %v1804
  %v1806 = vand.u32 %v17, 4294901760
  %1807 = vmatmul.mubr.f32.gmra.mxu0 %v1806
  %v1808 = vpop.f32.mrf.mxu0
  %v1809 = vadd.f32 %v1705, %v1808
  %v1810 = vpop.f32.mrf.mxu0
  %1811 = vdwg.mxu0
  %v1812 = vld [vmem:[%s1] sm:$0xff]
  %v1813 = vld [vmem:[%s1 + $0x8] sm:$0xff]
  %v1814 = vld [vmem:[%s1 + $0x10] sm:$0xff]
  %v1815 = vld [vmem:[%s1 + $0x18] sm:$0xff]
  %v1816 = vld [vmem:[%s1 + $0x20] sm:$0xff]
  %v1817 = vld [vmem:[%s1 + $0x28] sm:$0xff]
  %v1818 = vld [vmem:[%s1 + $0x30] sm:$0xff]
  %v1819 = vld [vmem:[%s1 + $0x38] sm:$0xff]
  %v1820 = vld [vmem:[%s1 + $0x40] sm:$0xff]
  %v1821 = vld [vmem:[%s1 + $0x48] sm:$0xff]
  %v1822 = vld [vmem:[%s1 + $0x50] sm:$0xff]
  %v1823 = vld [vmem:[%s1 + $0x58] sm:$0xff]
  %v1824 = vld [vmem:[%s1 + $0x60] sm:$0xff]
  %v1825 = vld [vmem:[%s1 + $0x68] sm:$0xff]
  %v1826 = vld [vmem:[%s1 + $0x70] sm:$0xff]
  %v1827 = vld [vmem:[%s1 + $0x78] sm:$0xff]
  %v1828 = vld [vmem:[%s1 + $0x80] sm:$0xff]
  %v1829 = vld [vmem:[%s1 + $0x88] sm:$0xff]
  %v1830 = vld [vmem:[%s1 + $0x90] sm:$0xff]
  %v1831 = vld [vmem:[%s1 + $0x98] sm:$0xff]
  %v1832 = vld [vmem:[%s1 + $0xa0] sm:$0xff]
  %v1833 = vld [vmem:[%s1 + $0xa8] sm:$0xff]
  %v1834 = vld [vmem:[%s1 + $0xb0] sm:$0xff]
  %v1835 = vld [vmem:[%s1 + $0xb8] sm:$0xff]
  %v1836 = vld [vmem:[%s1 + $0xc0] sm:$0xff]
  %v1837 = vld [vmem:[%s1 + $0xc8] sm:$0xff]
  %v1838 = vld [vmem:[%s1 + $0xd0] sm:$0xff]
  %v1839 = vld [vmem:[%s1 + $0xd8] sm:$0xff]
  %v1840 = vld [vmem:[%s1 + $0xe0] sm:$0xff]
  %v1841 = vld [vmem:[%s1 + $0xe8] sm:$0xff]
  %v1842 = vld [vmem:[%s1 + $0xf0] sm:$0xff]
  %v1843 = vld [vmem:[%s1 + $0xf8] sm:$0xff]
  %v1844 = vld [vmem:[%s1 + $0x100] sm:$0xff]
  %v1845 = vld [vmem:[%s1 + $0x108] sm:$0xff]
  %v1846 = vld [vmem:[%s1 + $0x110] sm:$0xff]
  %v1847 = vld [vmem:[%s1 + $0x118] sm:$0xff]
  %v1848 = vld [vmem:[%s1 + $0x120] sm:$0xff]
  %v1849 = vld [vmem:[%s1 + $0x128] sm:$0xff]
  %v1850 = vld [vmem:[%s1 + $0x130] sm:$0xff]
  %v1851 = vld [vmem:[%s1 + $0x138] sm:$0xff]
  %v1852 = vld [vmem:[%s1 + $0x140] sm:$0xff]
  %v1853 = vld [vmem:[%s1 + $0x148] sm:$0xff]
  %v1854 = vld [vmem:[%s1 + $0x150] sm:$0xff]
  %v1855 = vld [vmem:[%s1 + $0x158] sm:$0xff]
  %v1856 = vld [vmem:[%s1 + $0x160] sm:$0xff]
  %v1857 = vld [vmem:[%s1 + $0x168] sm:$0xff]
  %v1858 = vld [vmem:[%s1 + $0x170] sm:$0xff]
  %v1859 = vld [vmem:[%s1 + $0x178] sm:$0xff]
  %v1860 = vld [vmem:[%s1 + $0x180] sm:$0xff]
  %v1861 = vld [vmem:[%s1 + $0x188] sm:$0xff]
  %v1862 = vld [vmem:[%s1 + $0x190] sm:$0xff]
  %v1863 = vld [vmem:[%s1 + $0x198] sm:$0xff]
  %v1864 = vld [vmem:[%s1 + $0x1a0] sm:$0xff]
  %v1865 = vld [vmem:[%s1 + $0x1a8] sm:$0xff]
  %v1866 = vld [vmem:[%s1 + $0x1b0] sm:$0xff]
  %v1867 = vld [vmem:[%s1 + $0x1b8] sm:$0xff]
  %v1868 = vld [vmem:[%s1 + $0x1c0] sm:$0xff]
  %v1869 = vld [vmem:[%s1 + $0x1c8] sm:$0xff]
  %v1870 = vld [vmem:[%s1 + $0x1d0] sm:$0xff]
  %v1871 = vld [vmem:[%s1 + $0x1d8] sm:$0xff]
  %v1872 = vld [vmem:[%s1 + $0x1e0] sm:$0xff]
  %v1873 = vld [vmem:[%s1 + $0x1e8] sm:$0xff]
  %v1874 = vld [vmem:[%s1 + $0x1f0] sm:$0xff]
  %v1875 = vld [vmem:[%s1 + $0x1f8] sm:$0xff]
  %1876 = vmatprep.subr.mxu0 0.0
  %v1877 = vand.u32 %v1827, 4294901760
  %1878 = vmatpush1.msra.mxu0 %v1877
  %1879 = vmatprep.subr.mxu0 0.0
  %v1880 = vand.u32 %v1826, 4294901760
  %1881 = vmatpush1.msra.mxu0 %v1880
  %1882 = vmatprep.subr.mxu0 0.0
  %v1883 = vand.u32 %v1825, 4294901760
  %1884 = vmatpush1.msra.mxu0 %v1883
  %1885 = vmatprep.subr.mxu0 0.0
  %v1886 = vand.u32 %v1824, 4294901760
  %1887 = vmatpush1.msra.mxu0 %v1886
  %1888 = vmatprep.subr.mxu0 0.0
  %v1889 = vand.u32 %v1823, 4294901760
  %1890 = vmatpush1.msra.mxu0 %v1889
  %1891 = vmatprep.subr.mxu0 0.0
  %v1892 = vand.u32 %v1822, 4294901760
  %1893 = vmatpush1.msra.mxu0 %v1892
  %1894 = vmatprep.subr.mxu0 0.0
  %v1895 = vand.u32 %v1821, 4294901760
  %1896 = vmatpush1.msra.mxu0 %v1895
  %1897 = vmatprep.subr.mxu0 0.0
  %v1898 = vand.u32 %v1820, 4294901760
  %1899 = vmatpush1.msra.mxu0 %v1898
  %1900 = vmatprep.subr.mxu0 0.0
  %v1901 = vand.u32 %v1819, 4294901760
  %1902 = vmatpush1.msra.mxu0 %v1901
  %1903 = vmatprep.subr.mxu0 0.0
  %v1904 = vand.u32 %v1818, 4294901760
  %1905 = vmatpush1.msra.mxu0 %v1904
  %1906 = vmatprep.subr.mxu0 0.0
  %v1907 = vand.u32 %v1817, 4294901760
  %1908 = vmatpush1.msra.mxu0 %v1907
  %1909 = vmatprep.subr.mxu0 0.0
  %v1910 = vand.u32 %v1816, 4294901760
  %1911 = vmatpush1.msra.mxu0 %v1910
  %1912 = vmatprep.subr.mxu0 0.0
  %v1913 = vand.u32 %v1815, 4294901760
  %1914 = vmatpush1.msra.mxu0 %v1913
  %1915 = vmatprep.subr.mxu0 0.0
  %v1916 = vand.u32 %v1814, 4294901760
  %1917 = vmatpush1.msra.mxu0 %v1916
  %1918 = vmatprep.subr.mxu0 0.0
  %v1919 = vand.u32 %v1813, 4294901760
  %1920 = vmatpush1.msra.mxu0 %v1919
  %1921 = vmatprep.subr.mxu0 0.0
  %v1922 = vand.u32 %v1812, 4294901760
  %1923 = vmatpush1.msra.mxu0 %v1922
  %1924 = vmatprep.subr.mxu0 0.0
  %v1925 = vand.u32 %v1843, 4294901760
  %1926 = vmatpush2.msra.mxu0 %v1925
  %1927 = vmatprep.subr.mxu0 0.0
  %v1928 = vand.u32 %v1842, 4294901760
  %1929 = vmatpush2.msra.mxu0 %v1928
  %1930 = vmatprep.subr.mxu0 0.0
  %v1931 = vand.u32 %v1841, 4294901760
  %1932 = vmatpush2.msra.mxu0 %v1931
  %1933 = vmatprep.subr.mxu0 0.0
  %v1934 = vand.u32 %v1840, 4294901760
  %1935 = vmatpush2.msra.mxu0 %v1934
  %1936 = vmatprep.subr.mxu0 0.0
  %v1937 = vand.u32 %v1839, 4294901760
  %1938 = vmatpush2.msra.mxu0 %v1937
  %1939 = vmatprep.subr.mxu0 0.0
  %v1940 = vand.u32 %v1838, 4294901760
  %1941 = vmatpush2.msra.mxu0 %v1940
  %1942 = vmatprep.subr.mxu0 0.0
  %v1943 = vand.u32 %v1837, 4294901760
  %1944 = vmatpush2.msra.mxu0 %v1943
  %1945 = vmatprep.subr.mxu0 0.0
  %v1946 = vand.u32 %v1836, 4294901760
  %1947 = vmatpush2.msra.mxu0 %v1946
  %1948 = vmatprep.subr.mxu0 0.0
  %v1949 = vand.u32 %v1835, 4294901760
  %1950 = vmatpush2.msra.mxu0 %v1949
  %1951 = vmatprep.subr.mxu0 0.0
  %v1952 = vand.u32 %v1834, 4294901760
  %1953 = vmatpush2.msra.mxu0 %v1952
  %1954 = vmatprep.subr.mxu0 0.0
  %v1955 = vand.u32 %v1833, 4294901760
  %1956 = vmatpush2.msra.mxu0 %v1955
  %1957 = vmatprep.subr.mxu0 0.0
  %v1958 = vand.u32 %v1832, 4294901760
  %1959 = vmatpush2.msra.mxu0 %v1958
  %1960 = vmatprep.subr.mxu0 0.0
  %v1961 = vand.u32 %v1831, 4294901760
  %1962 = vmatpush2.msra.mxu0 %v1961
  %1963 = vmatprep.subr.mxu0 0.0
  %v1964 = vand.u32 %v1830, 4294901760
  %1965 = vmatpush2.msra.mxu0 %v1964
  %1966 = vmatprep.subr.mxu0 0.0
  %v1967 = vand.u32 %v1829, 4294901760
  %1968 = vmatpush2.msra.mxu0 %v1967
  %1969 = vmatprep.subr.mxu0 0.0
  %v1970 = vand.u32 %v1828, 4294901760
  %1971 = vmatpush2.msra.mxu0 %v1970
  %v1972 = vand.u32 %v84, 4294901760
  %v1973 = vsub.f32 %v84, %v1972
  %v1974 = vand.u32 %v1973, 4294901760
  %v1975 = vsub.f32 %v1973, %v1974
  %v1976 = vand.u32 %v1975, 4294901760
  %1977 = vmatprep.mubr.f32.mxu0 %v1976
  %v1978 = vand.u32 %v16, 4294901760
  %v1979 = vsub.f32 %v16, %v1978
  %v1980 = vand.u32 %v1979, 4294901760
  %v1981 = vsub.f32 %v1979, %v1980
  %v1982 = vand.u32 %v1981, 4294901760
  %1983 = vmatmul.mubr.f32.gmra.mxu0 %v1982
  %v1984 = vpop.f32.mrf.mxu0
  %v1985 = vadd.f32 0.0, %v1984
  %v1986 = vpop.f32.mrf.mxu0
  %1987 = vdwg.mxu0
  %1988 = vmatprep.subr.mxu0 0.0
  %v1989 = vand.u32 %v1827, 4294901760
  %v1990 = vsub.f32 %v1827, %v1989
  %v1991 = vand.u32 %v1990, 4294901760
  %v1992 = vsub.f32 %v1990, %v1991
  %v1993 = vand.u32 %v1992, 4294901760
  %1994 = vmatpush1.msra.mxu0 %v1993
  %1995 = vmatprep.subr.mxu0 0.0
  %v1996 = vand.u32 %v1826, 4294901760
  %v1997 = vsub.f32 %v1826, %v1996
  %v1998 = vand.u32 %v1997, 4294901760
  %v1999 = vsub.f32 %v1997, %v1998
  %v2000 = vand.u32 %v1999, 4294901760
  %2001 = vmatpush1.msra.mxu0 %v2000
  %2002 = vmatprep.subr.mxu0 0.0
  %v2003 = vand.u32 %v1825, 4294901760
  %v2004 = vsub.f32 %v1825, %v2003
  %v2005 = vand.u32 %v2004, 4294901760
  %v2006 = vsub.f32 %v2004, %v2005
  %v2007 = vand.u32 %v2006, 4294901760
  %2008 = vmatpush1.msra.mxu0 %v2007
  %2009 = vmatprep.subr.mxu0 0.0
  %v2010 = vand.u32 %v1824, 4294901760
  %v2011 = vsub.f32 %v1824, %v2010
  %v2012 = vand.u32 %v2011, 4294901760
  %v2013 = vsub.f32 %v2011, %v2012
  %v2014 = vand.u32 %v2013, 4294901760
  %2015 = vmatpush1.msra.mxu0 %v2014
  %2016 = vmatprep.subr.mxu0 0.0
  %v2017 = vand.u32 %v1823, 4294901760
  %v2018 = vsub.f32 %v1823, %v2017
  %v2019 = vand.u32 %v2018, 4294901760
  %v2020 = vsub.f32 %v2018, %v2019
  %v2021 = vand.u32 %v2020, 4294901760
  %2022 = vmatpush1.msra.mxu0 %v2021
  %2023 = vmatprep.subr.mxu0 0.0
  %v2024 = vand.u32 %v1822, 4294901760
  %v2025 = vsub.f32 %v1822, %v2024
  %v2026 = vand.u32 %v2025, 4294901760
  %v2027 = vsub.f32 %v2025, %v2026
  %v2028 = vand.u32 %v2027, 4294901760
  %2029 = vmatpush1.msra.mxu0 %v2028
  %2030 = vmatprep.subr.mxu0 0.0
  %v2031 = vand.u32 %v1821, 4294901760
  %v2032 = vsub.f32 %v1821, %v2031
  %v2033 = vand.u32 %v2032, 4294901760
  %v2034 = vsub.f32 %v2032, %v2033
  %v2035 = vand.u32 %v2034, 4294901760
  %2036 = vmatpush1.msra.mxu0 %v2035
  %2037 = vmatprep.subr.mxu0 0.0
  %v2038 = vand.u32 %v1820, 4294901760
  %v2039 = vsub.f32 %v1820, %v2038
  %v2040 = vand.u32 %v2039, 4294901760
  %v2041 = vsub.f32 %v2039, %v2040
  %v2042 = vand.u32 %v2041, 4294901760
  %2043 = vmatpush1.msra.mxu0 %v2042
  %2044 = vmatprep.subr.mxu0 0.0
  %v2045 = vand.u32 %v1819, 4294901760
  %v2046 = vsub.f32 %v1819, %v2045
  %v2047 = vand.u32 %v2046, 4294901760
  %v2048 = vsub.f32 %v2046, %v2047
  %v2049 = vand.u32 %v2048, 4294901760
  %2050 = vmatpush1.msra.mxu0 %v2049
  %2051 = vmatprep.subr.mxu0 0.0
  %v2052 = vand.u32 %v1818, 4294901760
  %v2053 = vsub.f32 %v1818, %v2052
  %v2054 = vand.u32 %v2053, 4294901760
  %v2055 = vsub.f32 %v2053, %v2054
  %v2056 = vand.u32 %v2055, 4294901760
  %2057 = vmatpush1.msra.mxu0 %v2056
  %2058 = vmatprep.subr.mxu0 0.0
  %v2059 = vand.u32 %v1817, 4294901760
  %v2060 = vsub.f32 %v1817, %v2059
  %v2061 = vand.u32 %v2060, 4294901760
  %v2062 = vsub.f32 %v2060, %v2061
  %v2063 = vand.u32 %v2062, 4294901760
  %2064 = vmatpush1.msra.mxu0 %v2063
  %2065 = vmatprep.subr.mxu0 0.0
  %v2066 = vand.u32 %v1816, 4294901760
  %v2067 = vsub.f32 %v1816, %v2066
  %v2068 = vand.u32 %v2067, 4294901760
  %v2069 = vsub.f32 %v2067, %v2068
  %v2070 = vand.u32 %v2069, 4294901760
  %2071 = vmatpush1.msra.mxu0 %v2070
  %2072 = vmatprep.subr.mxu0 0.0
  %v2073 = vand.u32 %v1815, 4294901760
  %v2074 = vsub.f32 %v1815, %v2073
  %v2075 = vand.u32 %v2074, 4294901760
  %v2076 = vsub.f32 %v2074, %v2075
  %v2077 = vand.u32 %v2076, 4294901760
  %2078 = vmatpush1.msra.mxu0 %v2077
  %2079 = vmatprep.subr.mxu0 0.0
  %v2080 = vand.u32 %v1814, 4294901760
  %v2081 = vsub.f32 %v1814, %v2080
  %v2082 = vand.u32 %v2081, 4294901760
  %v2083 = vsub.f32 %v2081, %v2082
  %v2084 = vand.u32 %v2083, 4294901760
  %2085 = vmatpush1.msra.mxu0 %v2084
  %2086 = vmatprep.subr.mxu0 0.0
  %v2087 = vand.u32 %v1813, 4294901760
  %v2088 = vsub.f32 %v1813, %v2087
  %v2089 = vand.u32 %v2088, 4294901760
  %v2090 = vsub.f32 %v2088, %v2089
  %v2091 = vand.u32 %v2090, 4294901760
  %2092 = vmatpush1.msra.mxu0 %v2091
  %2093 = vmatprep.subr.mxu0 0.0
  %v2094 = vand.u32 %v1812, 4294901760
  %v2095 = vsub.f32 %v1812, %v2094
  %v2096 = vand.u32 %v2095, 4294901760
  %v2097 = vsub.f32 %v2095, %v2096
  %v2098 = vand.u32 %v2097, 4294901760
  %2099 = vmatpush1.msra.mxu0 %v2098
  %2100 = vmatprep.subr.mxu0 0.0
  %v2101 = vand.u32 %v1843, 4294901760
  %v2102 = vsub.f32 %v1843, %v2101
  %v2103 = vand.u32 %v2102, 4294901760
  %v2104 = vsub.f32 %v2102, %v2103
  %v2105 = vand.u32 %v2104, 4294901760
  %2106 = vmatpush2.msra.mxu0 %v2105
  %2107 = vmatprep.subr.mxu0 0.0
  %v2108 = vand.u32 %v1842, 4294901760
  %v2109 = vsub.f32 %v1842, %v2108
  %v2110 = vand.u32 %v2109, 4294901760
  %v2111 = vsub.f32 %v2109, %v2110
  %v2112 = vand.u32 %v2111, 4294901760
  %2113 = vmatpush2.msra.mxu0 %v2112
  %2114 = vmatprep.subr.mxu0 0.0
  %v2115 = vand.u32 %v1841, 4294901760
  %v2116 = vsub.f32 %v1841, %v2115
  %v2117 = vand.u32 %v2116, 4294901760
  %v2118 = vsub.f32 %v2116, %v2117
  %v2119 = vand.u32 %v2118, 4294901760
  %2120 = vmatpush2.msra.mxu0 %v2119
  %2121 = vmatprep.subr.mxu0 0.0
  %v2122 = vand.u32 %v1840, 4294901760
  %v2123 = vsub.f32 %v1840, %v2122
  %v2124 = vand.u32 %v2123, 4294901760
  %v2125 = vsub.f32 %v2123, %v2124
  %v2126 = vand.u32 %v2125, 4294901760
  %2127 = vmatpush2.msra.mxu0 %v2126
  %2128 = vmatprep.subr.mxu0 0.0
  %v2129 = vand.u32 %v1839, 4294901760
  %v2130 = vsub.f32 %v1839, %v2129
  %v2131 = vand.u32 %v2130, 4294901760
  %v2132 = vsub.f32 %v2130, %v2131
  %v2133 = vand.u32 %v2132, 4294901760
  %2134 = vmatpush2.msra.mxu0 %v2133
  %2135 = vmatprep.subr.mxu0 0.0
  %v2136 = vand.u32 %v1838, 4294901760
  %v2137 = vsub.f32 %v1838, %v2136
  %v2138 = vand.u32 %v2137, 4294901760
  %v2139 = vsub.f32 %v2137, %v2138
  %v2140 = vand.u32 %v2139, 4294901760
  %2141 = vmatpush2.msra.mxu0 %v2140
  %2142 = vmatprep.subr.mxu0 0.0
  %v2143 = vand.u32 %v1837, 4294901760
  %v2144 = vsub.f32 %v1837, %v2143
  %v2145 = vand.u32 %v2144, 4294901760
  %v2146 = vsub.f32 %v2144, %v2145
  %v2147 = vand.u32 %v2146, 4294901760
  %2148 = vmatpush2.msra.mxu0 %v2147
  %2149 = vmatprep.subr.mxu0 0.0
  %v2150 = vand.u32 %v1836, 4294901760
  %v2151 = vsub.f32 %v1836, %v2150
  %v2152 = vand.u32 %v2151, 4294901760
  %v2153 = vsub.f32 %v2151, %v2152
  %v2154 = vand.u32 %v2153, 4294901760
  %2155 = vmatpush2.msra.mxu0 %v2154
  %2156 = vmatprep.subr.mxu0 0.0
  %v2157 = vand.u32 %v1835, 4294901760
  %v2158 = vsub.f32 %v1835, %v2157
  %v2159 = vand.u32 %v2158, 4294901760
  %v2160 = vsub.f32 %v2158, %v2159
  %v2161 = vand.u32 %v2160, 4294901760
  %2162 = vmatpush2.msra.mxu0 %v2161
  %2163 = vmatprep.subr.mxu0 0.0
  %v2164 = vand.u32 %v1834, 4294901760
  %v2165 = vsub.f32 %v1834, %v2164
  %v2166 = vand.u32 %v2165, 4294901760
  %v2167 = vsub.f32 %v2165, %v2166
  %v2168 = vand.u32 %v2167, 4294901760
  %2169 = vmatpush2.msra.mxu0 %v2168
  %2170 = vmatprep.subr.mxu0 0.0
  %v2171 = vand.u32 %v1833, 4294901760
  %v2172 = vsub.f32 %v1833, %v2171
  %v2173 = vand.u32 %v2172, 4294901760
  %v2174 = vsub.f32 %v2172, %v2173
  %v2175 = vand.u32 %v2174, 4294901760
  %2176 = vmatpush2.msra.mxu0 %v2175
  %2177 = vmatprep.subr.mxu0 0.0
  %v2178 = vand.u32 %v1832, 4294901760
  %v2179 = vsub.f32 %v1832, %v2178
  %v2180 = vand.u32 %v2179, 4294901760
  %v2181 = vsub.f32 %v2179, %v2180
  %v2182 = vand.u32 %v2181, 4294901760
  %2183 = vmatpush2.msra.mxu0 %v2182
  %2184 = vmatprep.subr.mxu0 0.0
  %v2185 = vand.u32 %v1831, 4294901760
  %v2186 = vsub.f32 %v1831, %v2185
  %v2187 = vand.u32 %v2186, 4294901760
  %v2188 = vsub.f32 %v2186, %v2187
  %v2189 = vand.u32 %v2188, 4294901760
  %2190 = vmatpush2.msra.mxu0 %v2189
  %2191 = vmatprep.subr.mxu0 0.0
  %v2192 = vand.u32 %v1830, 4294901760
  %v2193 = vsub.f32 %v1830, %v2192
  %v2194 = vand.u32 %v2193, 4294901760
  %v2195 = vsub.f32 %v2193, %v2194
  %v2196 = vand.u32 %v2195, 4294901760
  %2197 = vmatpush2.msra.mxu0 %v2196
  %2198 = vmatprep.subr.mxu0 0.0
  %v2199 = vand.u32 %v1829, 4294901760
  %v2200 = vsub.f32 %v1829, %v2199
  %v2201 = vand.u32 %v2200, 4294901760
  %v2202 = vsub.f32 %v2200, %v2201
  %v2203 = vand.u32 %v2202, 4294901760
  %2204 = vmatpush2.msra.mxu0 %v2203
  %2205 = vmatprep.subr.mxu0 0.0
  %v2206 = vand.u32 %v1828, 4294901760
  %v2207 = vsub.f32 %v1828, %v2206
  %v2208 = vand.u32 %v2207, 4294901760
  %v2209 = vsub.f32 %v2207, %v2208
  %v2210 = vand.u32 %v2209, 4294901760
  %2211 = vmatpush2.msra.mxu0 %v2210
  %v2212 = vand.u32 %v84, 4294901760
  %2213 = vmatprep.mubr.f32.mxu0 %v2212
  %v2214 = vand.u32 %v16, 4294901760
  %2215 = vmatmul.mubr.f32.gmra.mxu0 %v2214
  %v2216 = vpop.f32.mrf.mxu0
  %v2217 = vadd.f32 %v1985, %v2216
  %v2218 = vpop.f32.mrf.mxu0
  %2219 = vdwg.mxu0
  %2220 = vmatprep.subr.mxu0 0.0
  %v2221 = vand.u32 %v1827, 4294901760
  %v2222 = vsub.f32 %v1827, %v2221
  %2223 = vmatpush1.msra.mxu0 %v2222
  %2224 = vmatprep.subr.mxu0 0.0
  %v2225 = vand.u32 %v1826, 4294901760
  %v2226 = vsub.f32 %v1826, %v2225
  %2227 = vmatpush1.msra.mxu0 %v2226
  %2228 = vmatprep.subr.mxu0 0.0
  %v2229 = vand.u32 %v1825, 4294901760
  %v2230 = vsub.f32 %v1825, %v2229
  %2231 = vmatpush1.msra.mxu0 %v2230
  %2232 = vmatprep.subr.mxu0 0.0
  %v2233 = vand.u32 %v1824, 4294901760
  %v2234 = vsub.f32 %v1824, %v2233
  %2235 = vmatpush1.msra.mxu0 %v2234
  %2236 = vmatprep.subr.mxu0 0.0
  %v2237 = vand.u32 %v1823, 4294901760
  %v2238 = vsub.f32 %v1823, %v2237
  %2239 = vmatpush1.msra.mxu0 %v2238
  %2240 = vmatprep.subr.mxu0 0.0
  %v2241 = vand.u32 %v1822, 4294901760
  %v2242 = vsub.f32 %v1822, %v2241
  %2243 = vmatpush1.msra.mxu0 %v2242
  %2244 = vmatprep.subr.mxu0 0.0
  %v2245 = vand.u32 %v1821, 4294901760
  %v2246 = vsub.f32 %v1821, %v2245
  %2247 = vmatpush1.msra.mxu0 %v2246
  %2248 = vmatprep.subr.mxu0 0.0
  %v2249 = vand.u32 %v1820, 4294901760
  %v2250 = vsub.f32 %v1820, %v2249
  %2251 = vmatpush1.msra.mxu0 %v2250
  %2252 = vmatprep.subr.mxu0 0.0
  %v2253 = vand.u32 %v1819, 4294901760
  %v2254 = vsub.f32 %v1819, %v2253
  %2255 = vmatpush1.msra.mxu0 %v2254
  %2256 = vmatprep.subr.mxu0 0.0
  %v2257 = vand.u32 %v1818, 4294901760
  %v2258 = vsub.f32 %v1818, %v2257
  %2259 = vmatpush1.msra.mxu0 %v2258
  %2260 = vmatprep.subr.mxu0 0.0
  %v2261 = vand.u32 %v1817, 4294901760
  %v2262 = vsub.f32 %v1817, %v2261
  %2263 = vmatpush1.msra.mxu0 %v2262
  %2264 = vmatprep.subr.mxu0 0.0
  %v2265 = vand.u32 %v1816, 4294901760
  %v2266 = vsub.f32 %v1816, %v2265
  %2267 = vmatpush1.msra.mxu0 %v2266
  %2268 = vmatprep.subr.mxu0 0.0
  %v2269 = vand.u32 %v1815, 4294901760
  %v2270 = vsub.f32 %v1815, %v2269
  %2271 = vmatpush1.msra.mxu0 %v2270
  %2272 = vmatprep.subr.mxu0 0.0
  %v2273 = vand.u32 %v1814, 4294901760
  %v2274 = vsub.f32 %v1814, %v2273
  %2275 = vmatpush1.msra.mxu0 %v2274
  %2276 = vmatprep.subr.mxu0 0.0
  %v2277 = vand.u32 %v1813, 4294901760
  %v2278 = vsub.f32 %v1813, %v2277
  %2279 = vmatpush1.msra.mxu0 %v2278
  %2280 = vmatprep.subr.mxu0 0.0
  %v2281 = vand.u32 %v1812, 4294901760
  %v2282 = vsub.f32 %v1812, %v2281
  %2283 = vmatpush1.msra.mxu0 %v2282
  %2284 = vmatprep.subr.mxu0 0.0
  %v2285 = vand.u32 %v1843, 4294901760
  %v2286 = vsub.f32 %v1843, %v2285
  %2287 = vmatpush2.msra.mxu0 %v2286
  %2288 = vmatprep.subr.mxu0 0.0
  %v2289 = vand.u32 %v1842, 4294901760
  %v2290 = vsub.f32 %v1842, %v2289
  %2291 = vmatpush2.msra.mxu0 %v2290
  %2292 = vmatprep.subr.mxu0 0.0
  %v2293 = vand.u32 %v1841, 4294901760
  %v2294 = vsub.f32 %v1841, %v2293
  %2295 = vmatpush2.msra.mxu0 %v2294
  %2296 = vmatprep.subr.mxu0 0.0
  %v2297 = vand.u32 %v1840, 4294901760
  %v2298 = vsub.f32 %v1840, %v2297
  %2299 = vmatpush2.msra.mxu0 %v2298
  %2300 = vmatprep.subr.mxu0 0.0
  %v2301 = vand.u32 %v1839, 4294901760
  %v2302 = vsub.f32 %v1839, %v2301
  %2303 = vmatpush2.msra.mxu0 %v2302
  %2304 = vmatprep.subr.mxu0 0.0
  %v2305 = vand.u32 %v1838, 4294901760
  %v2306 = vsub.f32 %v1838, %v2305
  %2307 = vmatpush2.msra.mxu0 %v2306
  %2308 = vmatprep.subr.mxu0 0.0
  %v2309 = vand.u32 %v1837, 4294901760
  %v2310 = vsub.f32 %v1837, %v2309
  %2311 = vmatpush2.msra.mxu0 %v2310
  %2312 = vmatprep.subr.mxu0 0.0
  %v2313 = vand.u32 %v1836, 4294901760
  %v2314 = vsub.f32 %v1836, %v2313
  %2315 = vmatpush2.msra.mxu0 %v2314
  %2316 = vmatprep.subr.mxu0 0.0
  %v2317 = vand.u32 %v1835, 4294901760
  %v2318 = vsub.f32 %v1835, %v2317
  %2319 = vmatpush2.msra.mxu0 %v2318
  %2320 = vmatprep.subr.mxu0 0.0
  %v2321 = vand.u32 %v1834, 4294901760
  %v2322 = vsub.f32 %v1834, %v2321
  %2323 = vmatpush2.msra.mxu0 %v2322
  %2324 = vmatprep.subr.mxu0 0.0
  %v2325 = vand.u32 %v1833, 4294901760
  %v2326 = vsub.f32 %v1833, %v2325
  %2327 = vmatpush2.msra.mxu0 %v2326
  %2328 = vmatprep.subr.mxu0 0.0
  %v2329 = vand.u32 %v1832, 4294901760
  %v2330 = vsub.f32 %v1832, %v2329
  %2331 = vmatpush2.msra.mxu0 %v2330
  %2332 = vmatprep.subr.mxu0 0.0
  %v2333 = vand.u32 %v1831, 4294901760
  %v2334 = vsub.f32 %v1831, %v2333
  %2335 = vmatpush2.msra.mxu0 %v2334
  %2336 = vmatprep.subr.mxu0 0.0
  %v2337 = vand.u32 %v1830, 4294901760
  %v2338 = vsub.f32 %v1830, %v2337
  %2339 = vmatpush2.msra.mxu0 %v2338
  %2340 = vmatprep.subr.mxu0 0.0
  %v2341 = vand.u32 %v1829, 4294901760
  %v2342 = vsub.f32 %v1829, %v2341
  %2343 = vmatpush2.msra.mxu0 %v2342
  %2344 = vmatprep.subr.mxu0 0.0
  %v2345 = vand.u32 %v1828, 4294901760
  %v2346 = vsub.f32 %v1828, %v2345
  %2347 = vmatpush2.msra.mxu0 %v2346
  %v2348 = vand.u32 %v84, 4294901760
  %v2349 = vsub.f32 %v84, %v2348
  %2350 = vmatprep.mubr.f32.mxu0 %v2349
  %v2351 = vand.u32 %v16, 4294901760
  %v2352 = vsub.f32 %v16, %v2351
  %2353 = vmatmul.mubr.f32.gmra.mxu0 %v2352
  %v2354 = vpop.f32.mrf.mxu0
  %v2355 = vadd.f32 %v2217, %v2354
  %v2356 = vpop.f32.mrf.mxu0
  %2357 = vdwg.mxu0
  %2358 = vmatprep.subr.mxu0 0.0
  %v2359 = vand.u32 %v1827, 4294901760
  %2360 = vmatpush1.msra.mxu0 %v2359
  %2361 = vmatprep.subr.mxu0 0.0
  %v2362 = vand.u32 %v1826, 4294901760
  %2363 = vmatpush1.msra.mxu0 %v2362
  %2364 = vmatprep.subr.mxu0 0.0
  %v2365 = vand.u32 %v1825, 4294901760
  %2366 = vmatpush1.msra.mxu0 %v2365
  %2367 = vmatprep.subr.mxu0 0.0
  %v2368 = vand.u32 %v1824, 4294901760
  %2369 = vmatpush1.msra.mxu0 %v2368
  %2370 = vmatprep.subr.mxu0 0.0
  %v2371 = vand.u32 %v1823, 4294901760
  %2372 = vmatpush1.msra.mxu0 %v2371
  %2373 = vmatprep.subr.mxu0 0.0
  %v2374 = vand.u32 %v1822, 4294901760
  %2375 = vmatpush1.msra.mxu0 %v2374
  %2376 = vmatprep.subr.mxu0 0.0
  %v2377 = vand.u32 %v1821, 4294901760
  %2378 = vmatpush1.msra.mxu0 %v2377
  %2379 = vmatprep.subr.mxu0 0.0
  %v2380 = vand.u32 %v1820, 4294901760
  %2381 = vmatpush1.msra.mxu0 %v2380
  %2382 = vmatprep.subr.mxu0 0.0
  %v2383 = vand.u32 %v1819, 4294901760
  %2384 = vmatpush1.msra.mxu0 %v2383
  %2385 = vmatprep.subr.mxu0 0.0
  %v2386 = vand.u32 %v1818, 4294901760
  %2387 = vmatpush1.msra.mxu0 %v2386
  %2388 = vmatprep.subr.mxu0 0.0
  %v2389 = vand.u32 %v1817, 4294901760
  %2390 = vmatpush1.msra.mxu0 %v2389
  %2391 = vmatprep.subr.mxu0 0.0
  %v2392 = vand.u32 %v1816, 4294901760
  %2393 = vmatpush1.msra.mxu0 %v2392
  %2394 = vmatprep.subr.mxu0 0.0
  %v2395 = vand.u32 %v1815, 4294901760
  %2396 = vmatpush1.msra.mxu0 %v2395
  %2397 = vmatprep.subr.mxu0 0.0
  %v2398 = vand.u32 %v1814, 4294901760
  %2399 = vmatpush1.msra.mxu0 %v2398
  %2400 = vmatprep.subr.mxu0 0.0
  %v2401 = vand.u32 %v1813, 4294901760
  %2402 = vmatpush1.msra.mxu0 %v2401
  %2403 = vmatprep.subr.mxu0 0.0
  %v2404 = vand.u32 %v1812, 4294901760
  %2405 = vmatpush1.msra.mxu0 %v2404
  %2406 = vmatprep.subr.mxu0 0.0
  %v2407 = vand.u32 %v1843, 4294901760
  %2408 = vmatpush2.msra.mxu0 %v2407
  %2409 = vmatprep.subr.mxu0 0.0
  %v2410 = vand.u32 %v1842, 4294901760
  %2411 = vmatpush2.msra.mxu0 %v2410
  %2412 = vmatprep.subr.mxu0 0.0
  %v2413 = vand.u32 %v1841, 4294901760
  %2414 = vmatpush2.msra.mxu0 %v2413
  %2415 = vmatprep.subr.mxu0 0.0
  %v2416 = vand.u32 %v1840, 4294901760
  %2417 = vmatpush2.msra.mxu0 %v2416
  %2418 = vmatprep.subr.mxu0 0.0
  %v2419 = vand.u32 %v1839, 4294901760
  %2420 = vmatpush2.msra.mxu0 %v2419
  %2421 = vmatprep.subr.mxu0 0.0
  %v2422 = vand.u32 %v1838, 4294901760
  %2423 = vmatpush2.msra.mxu0 %v2422
  %2424 = vmatprep.subr.mxu0 0.0
  %v2425 = vand.u32 %v1837, 4294901760
  %2426 = vmatpush2.msra.mxu0 %v2425
  %2427 = vmatprep.subr.mxu0 0.0
  %v2428 = vand.u32 %v1836, 4294901760
  %2429 = vmatpush2.msra.mxu0 %v2428
  %2430 = vmatprep.subr.mxu0 0.0
  %v2431 = vand.u32 %v1835, 4294901760
  %2432 = vmatpush2.msra.mxu0 %v2431
  %2433 = vmatprep.subr.mxu0 0.0
  %v2434 = vand.u32 %v1834, 4294901760
  %2435 = vmatpush2.msra.mxu0 %v2434
  %2436 = vmatprep.subr.mxu0 0.0
  %v2437 = vand.u32 %v1833, 4294901760
  %2438 = vmatpush2.msra.mxu0 %v2437
  %2439 = vmatprep.subr.mxu0 0.0
  %v2440 = vand.u32 %v1832, 4294901760
  %2441 = vmatpush2.msra.mxu0 %v2440
  %2442 = vmatprep.subr.mxu0 0.0
  %v2443 = vand.u32 %v1831, 4294901760
  %2444 = vmatpush2.msra.mxu0 %v2443
  %2445 = vmatprep.subr.mxu0 0.0
  %v2446 = vand.u32 %v1830, 4294901760
  %2447 = vmatpush2.msra.mxu0 %v2446
  %2448 = vmatprep.subr.mxu0 0.0
  %v2449 = vand.u32 %v1829, 4294901760
  %2450 = vmatpush2.msra.mxu0 %v2449
  %2451 = vmatprep.subr.mxu0 0.0
  %v2452 = vand.u32 %v1828, 4294901760
  %2453 = vmatpush2.msra.mxu0 %v2452
  %v2454 = vand.u32 %v84, 4294901760
  %v2455 = vsub.f32 %v84, %v2454
  %v2456 = vand.u32 %v2455, 4294901760
  %2457 = vmatprep.mubr.f32.mxu0 %v2456
  %v2458 = vand.u32 %v16, 4294901760
  %v2459 = vsub.f32 %v16, %v2458
  %v2460 = vand.u32 %v2459, 4294901760
  %2461 = vmatmul.mubr.f32.gmra.mxu0 %v2460
  %v2462 = vpop.f32.mrf.mxu0
  %v2463 = vadd.f32 %v2355, %v2462
  %v2464 = vpop.f32.mrf.mxu0
  %2465 = vdwg.mxu0
  %2466 = vmatprep.subr.mxu0 0.0
  %v2467 = vand.u32 %v1827, 4294901760
  %v2468 = vsub.f32 %v1827, %v2467
  %v2469 = vand.u32 %v2468, 4294901760
  %2470 = vmatpush1.msra.mxu0 %v2469
  %2471 = vmatprep.subr.mxu0 0.0
  %v2472 = vand.u32 %v1826, 4294901760
  %v2473 = vsub.f32 %v1826, %v2472
  %v2474 = vand.u32 %v2473, 4294901760
  %2475 = vmatpush1.msra.mxu0 %v2474
  %2476 = vmatprep.subr.mxu0 0.0
  %v2477 = vand.u32 %v1825, 4294901760
  %v2478 = vsub.f32 %v1825, %v2477
  %v2479 = vand.u32 %v2478, 4294901760
  %2480 = vmatpush1.msra.mxu0 %v2479
  %2481 = vmatprep.subr.mxu0 0.0
  %v2482 = vand.u32 %v1824, 4294901760
  %v2483 = vsub.f32 %v1824, %v2482
  %v2484 = vand.u32 %v2483, 4294901760
  %2485 = vmatpush1.msra.mxu0 %v2484
  %2486 = vmatprep.subr.mxu0 0.0
  %v2487 = vand.u32 %v1823, 4294901760
  %v2488 = vsub.f32 %v1823, %v2487
  %v2489 = vand.u32 %v2488, 4294901760
  %2490 = vmatpush1.msra.mxu0 %v2489
  %2491 = vmatprep.subr.mxu0 0.0
  %v2492 = vand.u32 %v1822, 4294901760
  %v2493 = vsub.f32 %v1822, %v2492
  %v2494 = vand.u32 %v2493, 4294901760
  %2495 = vmatpush1.msra.mxu0 %v2494
  %2496 = vmatprep.subr.mxu0 0.0
  %v2497 = vand.u32 %v1821, 4294901760
  %v2498 = vsub.f32 %v1821, %v2497
  %v2499 = vand.u32 %v2498, 4294901760
  %2500 = vmatpush1.msra.mxu0 %v2499
  %2501 = vmatprep.subr.mxu0 0.0
  %v2502 = vand.u32 %v1820, 4294901760
  %v2503 = vsub.f32 %v1820, %v2502
  %v2504 = vand.u32 %v2503, 4294901760
  %2505 = vmatpush1.msra.mxu0 %v2504
  %2506 = vmatprep.subr.mxu0 0.0
  %v2507 = vand.u32 %v1819, 4294901760
  %v2508 = vsub.f32 %v1819, %v2507
  %v2509 = vand.u32 %v2508, 4294901760
  %2510 = vmatpush1.msra.mxu0 %v2509
  %2511 = vmatprep.subr.mxu0 0.0
  %v2512 = vand.u32 %v1818, 4294901760
  %v2513 = vsub.f32 %v1818, %v2512
  %v2514 = vand.u32 %v2513, 4294901760
  %2515 = vmatpush1.msra.mxu0 %v2514
  %2516 = vmatprep.subr.mxu0 0.0
  %v2517 = vand.u32 %v1817, 4294901760
  %v2518 = vsub.f32 %v1817, %v2517
  %v2519 = vand.u32 %v2518, 4294901760
  %2520 = vmatpush1.msra.mxu0 %v2519
  %2521 = vmatprep.subr.mxu0 0.0
  %v2522 = vand.u32 %v1816, 4294901760
  %v2523 = vsub.f32 %v1816, %v2522
  %v2524 = vand.u32 %v2523, 4294901760
  %2525 = vmatpush1.msra.mxu0 %v2524
  %2526 = vmatprep.subr.mxu0 0.0
  %v2527 = vand.u32 %v1815, 4294901760
  %v2528 = vsub.f32 %v1815, %v2527
  %v2529 = vand.u32 %v2528, 4294901760
  %2530 = vmatpush1.msra.mxu0 %v2529
  %2531 = vmatprep.subr.mxu0 0.0
  %v2532 = vand.u32 %v1814, 4294901760
  %v2533 = vsub.f32 %v1814, %v2532
  %v2534 = vand.u32 %v2533, 4294901760
  %2535 = vmatpush1.msra.mxu0 %v2534
  %2536 = vmatprep.subr.mxu0 0.0
  %v2537 = vand.u32 %v1813, 4294901760
  %v2538 = vsub.f32 %v1813, %v2537
  %v2539 = vand.u32 %v2538, 4294901760
  %2540 = vmatpush1.msra.mxu0 %v2539
  %2541 = vmatprep.subr.mxu0 0.0
  %v2542 = vand.u32 %v1812, 4294901760
  %v2543 = vsub.f32 %v1812, %v2542
  %v2544 = vand.u32 %v2543, 4294901760
  %2545 = vmatpush1.msra.mxu0 %v2544
  %2546 = vmatprep.subr.mxu0 0.0
  %v2547 = vand.u32 %v1843, 4294901760
  %v2548 = vsub.f32 %v1843, %v2547
  %v2549 = vand.u32 %v2548, 4294901760
  %2550 = vmatpush2.msra.mxu0 %v2549
  %2551 = vmatprep.subr.mxu0 0.0
  %v2552 = vand.u32 %v1842, 4294901760
  %v2553 = vsub.f32 %v1842, %v2552
  %v2554 = vand.u32 %v2553, 4294901760
  %2555 = vmatpush2.msra.mxu0 %v2554
  %2556 = vmatprep.subr.mxu0 0.0
  %v2557 = vand.u32 %v1841, 4294901760
  %v2558 = vsub.f32 %v1841, %v2557
  %v2559 = vand.u32 %v2558, 4294901760
  %2560 = vmatpush2.msra.mxu0 %v2559
  %2561 = vmatprep.subr.mxu0 0.0
  %v2562 = vand.u32 %v1840, 4294901760
  %v2563 = vsub.f32 %v1840, %v2562
  %v2564 = vand.u32 %v2563, 4294901760
  %2565 = vmatpush2.msra.mxu0 %v2564
  %2566 = vmatprep.subr.mxu0 0.0
  %v2567 = vand.u32 %v1839, 4294901760
  %v2568 = vsub.f32 %v1839, %v2567
  %v2569 = vand.u32 %v2568, 4294901760
  %2570 = vmatpush2.msra.mxu0 %v2569
  %2571 = vmatprep.subr.mxu0 0.0
  %v2572 = vand.u32 %v1838, 4294901760
  %v2573 = vsub.f32 %v1838, %v2572
  %v2574 = vand.u32 %v2573, 4294901760
  %2575 = vmatpush2.msra.mxu0 %v2574
  %2576 = vmatprep.subr.mxu0 0.0
  %v2577 = vand.u32 %v1837, 4294901760
  %v2578 = vsub.f32 %v1837, %v2577
  %v2579 = vand.u32 %v2578, 4294901760
  %2580 = vmatpush2.msra.mxu0 %v2579
  %2581 = vmatprep.subr.mxu0 0.0
  %v2582 = vand.u32 %v1836, 4294901760
  %v2583 = vsub.f32 %v1836, %v2582
  %v2584 = vand.u32 %v2583, 4294901760
  %2585 = vmatpush2.msra.mxu0 %v2584
  %2586 = vmatprep.subr.mxu0 0.0
  %v2587 = vand.u32 %v1835, 4294901760
  %v2588 = vsub.f32 %v1835, %v2587
  %v2589 = vand.u32 %v2588, 4294901760
  %2590 = vmatpush2.msra.mxu0 %v2589
  %2591 = vmatprep.subr.mxu0 0.0
  %v2592 = vand.u32 %v1834, 4294901760
  %v2593 = vsub.f32 %v1834, %v2592
  %v2594 = vand.u32 %v2593, 4294901760
  %2595 = vmatpush2.msra.mxu0 %v2594
  %2596 = vmatprep.subr.mxu0 0.0
  %v2597 = vand.u32 %v1833, 4294901760
  %v2598 = vsub.f32 %v1833, %v2597
  %v2599 = vand.u32 %v2598, 4294901760
  %2600 = vmatpush2.msra.mxu0 %v2599
  %2601 = vmatprep.subr.mxu0 0.0
  %v2602 = vand.u32 %v1832, 4294901760
  %v2603 = vsub.f32 %v1832, %v2602
  %v2604 = vand.u32 %v2603, 4294901760
  %2605 = vmatpush2.msra.mxu0 %v2604
  %2606 = vmatprep.subr.mxu0 0.0
  %v2607 = vand.u32 %v1831, 4294901760
  %v2608 = vsub.f32 %v1831, %v2607
  %v2609 = vand.u32 %v2608, 4294901760
  %2610 = vmatpush2.msra.mxu0 %v2609
  %2611 = vmatprep.subr.mxu0 0.0
  %v2612 = vand.u32 %v1830, 4294901760
  %v2613 = vsub.f32 %v1830, %v2612
  %v2614 = vand.u32 %v2613, 4294901760
  %2615 = vmatpush2.msra.mxu0 %v2614
  %2616 = vmatprep.subr.mxu0 0.0
  %v2617 = vand.u32 %v1829, 4294901760
  %v2618 = vsub.f32 %v1829, %v2617
  %v2619 = vand.u32 %v2618, 4294901760
  %2620 = vmatpush2.msra.mxu0 %v2619
  %2621 = vmatprep.subr.mxu0 0.0
  %v2622 = vand.u32 %v1828, 4294901760
  %v2623 = vsub.f32 %v1828, %v2622
  %v2624 = vand.u32 %v2623, 4294901760
  %2625 = vmatpush2.msra.mxu0 %v2624
  %v2626 = vand.u32 %v84, 4294901760
  %2627 = vmatprep.mubr.f32.mxu0 %v2626
  %v2628 = vand.u32 %v16, 4294901760
  %2629 = vmatmul.mubr.f32.gmra.mxu0 %v2628
  %v2630 = vpop.f32.mrf.mxu0
  %v2631 = vadd.f32 %v2463, %v2630
  %v2632 = vpop.f32.mrf.mxu0
  %2633 = vdwg.mxu0
  %2634 = vmatprep.subr.mxu0 0.0
  %v2635 = vand.u32 %v1827, 4294901760
  %2636 = vmatpush1.msra.mxu0 %v2635
  %2637 = vmatprep.subr.mxu0 0.0
  %v2638 = vand.u32 %v1826, 4294901760
  %2639 = vmatpush1.msra.mxu0 %v2638
  %2640 = vmatprep.subr.mxu0 0.0
  %v2641 = vand.u32 %v1825, 4294901760
  %2642 = vmatpush1.msra.mxu0 %v2641
  %2643 = vmatprep.subr.mxu0 0.0
  %v2644 = vand.u32 %v1824, 4294901760
  %2645 = vmatpush1.msra.mxu0 %v2644
  %2646 = vmatprep.subr.mxu0 0.0
  %v2647 = vand.u32 %v1823, 4294901760
  %2648 = vmatpush1.msra.mxu0 %v2647
  %2649 = vmatprep.subr.mxu0 0.0
  %v2650 = vand.u32 %v1822, 4294901760
  %2651 = vmatpush1.msra.mxu0 %v2650
  %2652 = vmatprep.subr.mxu0 0.0
  %v2653 = vand.u32 %v1821, 4294901760
  %2654 = vmatpush1.msra.mxu0 %v2653
  %2655 = vmatprep.subr.mxu0 0.0
  %v2656 = vand.u32 %v1820, 4294901760
  %2657 = vmatpush1.msra.mxu0 %v2656
  %2658 = vmatprep.subr.mxu0 0.0
  %v2659 = vand.u32 %v1819, 4294901760
  %2660 = vmatpush1.msra.mxu0 %v2659
  %2661 = vmatprep.subr.mxu0 0.0
  %v2662 = vand.u32 %v1818, 4294901760
  %2663 = vmatpush1.msra.mxu0 %v2662
  %2664 = vmatprep.subr.mxu0 0.0
  %v2665 = vand.u32 %v1817, 4294901760
  %2666 = vmatpush1.msra.mxu0 %v2665
  %2667 = vmatprep.subr.mxu0 0.0
  %v2668 = vand.u32 %v1816, 4294901760
  %2669 = vmatpush1.msra.mxu0 %v2668
  %2670 = vmatprep.subr.mxu0 0.0
  %v2671 = vand.u32 %v1815, 4294901760
  %2672 = vmatpush1.msra.mxu0 %v2671
  %2673 = vmatprep.subr.mxu0 0.0
  %v2674 = vand.u32 %v1814, 4294901760
  %2675 = vmatpush1.msra.mxu0 %v2674
  %2676 = vmatprep.subr.mxu0 0.0
  %v2677 = vand.u32 %v1813, 4294901760
  %2678 = vmatpush1.msra.mxu0 %v2677
  %2679 = vmatprep.subr.mxu0 0.0
  %v2680 = vand.u32 %v1812, 4294901760
  %2681 = vmatpush1.msra.mxu0 %v2680
  %2682 = vmatprep.subr.mxu0 0.0
  %v2683 = vand.u32 %v1843, 4294901760
  %2684 = vmatpush2.msra.mxu0 %v2683
  %2685 = vmatprep.subr.mxu0 0.0
  %v2686 = vand.u32 %v1842, 4294901760
  %2687 = vmatpush2.msra.mxu0 %v2686
  %2688 = vmatprep.subr.mxu0 0.0
  %v2689 = vand.u32 %v1841, 4294901760
  %2690 = vmatpush2.msra.mxu0 %v2689
  %2691 = vmatprep.subr.mxu0 0.0
  %v2692 = vand.u32 %v1840, 4294901760
  %2693 = vmatpush2.msra.mxu0 %v2692
  %2694 = vmatprep.subr.mxu0 0.0
  %v2695 = vand.u32 %v1839, 4294901760
  %2696 = vmatpush2.msra.mxu0 %v2695
  %2697 = vmatprep.subr.mxu0 0.0
  %v2698 = vand.u32 %v1838, 4294901760
  %2699 = vmatpush2.msra.mxu0 %v2698
  %2700 = vmatprep.subr.mxu0 0.0
  %v2701 = vand.u32 %v1837, 4294901760
  %2702 = vmatpush2.msra.mxu0 %v2701
  %2703 = vmatprep.subr.mxu0 0.0
  %v2704 = vand.u32 %v1836, 4294901760
  %2705 = vmatpush2.msra.mxu0 %v2704
  %2706 = vmatprep.subr.mxu0 0.0
  %v2707 = vand.u32 %v1835, 4294901760
  %2708 = vmatpush2.msra.mxu0 %v2707
  %2709 = vmatprep.subr.mxu0 0.0
  %v2710 = vand.u32 %v1834, 4294901760
  %2711 = vmatpush2.msra.mxu0 %v2710
  %2712 = vmatprep.subr.mxu0 0.0
  %v2713 = vand.u32 %v1833, 4294901760
  %2714 = vmatpush2.msra.mxu0 %v2713
  %2715 = vmatprep.subr.mxu0 0.0
  %v2716 = vand.u32 %v1832, 4294901760
  %2717 = vmatpush2.msra.mxu0 %v2716
  %2718 = vmatprep.subr.mxu0 0.0
  %v2719 = vand.u32 %v1831, 4294901760
  %2720 = vmatpush2.msra.mxu0 %v2719
  %2721 = vmatprep.subr.mxu0 0.0
  %v2722 = vand.u32 %v1830, 4294901760
  %2723 = vmatpush2.msra.mxu0 %v2722
  %2724 = vmatprep.subr.mxu0 0.0
  %v2725 = vand.u32 %v1829, 4294901760
  %2726 = vmatpush2.msra.mxu0 %v2725
  %2727 = vmatprep.subr.mxu0 0.0
  %v2728 = vand.u32 %v1828, 4294901760
  %2729 = vmatpush2.msra.mxu0 %v2728
  %v2730 = vand.u32 %v84, 4294901760
  %2731 = vmatprep.mubr.f32.mxu0 %v2730
  %v2732 = vand.u32 %v16, 4294901760
  %2733 = vmatmul.mubr.f32.gmra.mxu0 %v2732
  %v2734 = vpop.f32.mrf.mxu0
  %v2735 = vadd.f32 %v2631, %v2734
  %v2736 = vpop.f32.mrf.mxu0
  %2737 = vdwg.mxu0
  %2738 = vmatprep.subr.mxu0 0.0
  %v2739 = vand.u32 %v1859, 4294901760
  %2740 = vmatpush1.msra.mxu0 %v2739
  %2741 = vmatprep.subr.mxu0 0.0
  %v2742 = vand.u32 %v1858, 4294901760
  %2743 = vmatpush1.msra.mxu0 %v2742
  %2744 = vmatprep.subr.mxu0 0.0
  %v2745 = vand.u32 %v1857, 4294901760
  %2746 = vmatpush1.msra.mxu0 %v2745
  %2747 = vmatprep.subr.mxu0 0.0
  %v2748 = vand.u32 %v1856, 4294901760
  %2749 = vmatpush1.msra.mxu0 %v2748
  %2750 = vmatprep.subr.mxu0 0.0
  %v2751 = vand.u32 %v1855, 4294901760
  %2752 = vmatpush1.msra.mxu0 %v2751
  %2753 = vmatprep.subr.mxu0 0.0
  %v2754 = vand.u32 %v1854, 4294901760
  %2755 = vmatpush1.msra.mxu0 %v2754
  %2756 = vmatprep.subr.mxu0 0.0
  %v2757 = vand.u32 %v1853, 4294901760
  %2758 = vmatpush1.msra.mxu0 %v2757
  %2759 = vmatprep.subr.mxu0 0.0
  %v2760 = vand.u32 %v1852, 4294901760
  %2761 = vmatpush1.msra.mxu0 %v2760
  %2762 = vmatprep.subr.mxu0 0.0
  %v2763 = vand.u32 %v1851, 4294901760
  %2764 = vmatpush1.msra.mxu0 %v2763
  %2765 = vmatprep.subr.mxu0 0.0
  %v2766 = vand.u32 %v1850, 4294901760
  %2767 = vmatpush1.msra.mxu0 %v2766
  %2768 = vmatprep.subr.mxu0 0.0
  %v2769 = vand.u32 %v1849, 4294901760
  %2770 = vmatpush1.msra.mxu0 %v2769
  %2771 = vmatprep.subr.mxu0 0.0
  %v2772 = vand.u32 %v1848, 4294901760
  %2773 = vmatpush1.msra.mxu0 %v2772
  %2774 = vmatprep.subr.mxu0 0.0
  %v2775 = vand.u32 %v1847, 4294901760
  %2776 = vmatpush1.msra.mxu0 %v2775
  %2777 = vmatprep.subr.mxu0 0.0
  %v2778 = vand.u32 %v1846, 4294901760
  %2779 = vmatpush1.msra.mxu0 %v2778
  %2780 = vmatprep.subr.mxu0 0.0
  %v2781 = vand.u32 %v1845, 4294901760
  %2782 = vmatpush1.msra.mxu0 %v2781
  %2783 = vmatprep.subr.mxu0 0.0
  %v2784 = vand.u32 %v1844, 4294901760
  %2785 = vmatpush1.msra.mxu0 %v2784
  %2786 = vmatprep.subr.mxu0 0.0
  %v2787 = vand.u32 %v1875, 4294901760
  %2788 = vmatpush2.msra.mxu0 %v2787
  %2789 = vmatprep.subr.mxu0 0.0
  %v2790 = vand.u32 %v1874, 4294901760
  %2791 = vmatpush2.msra.mxu0 %v2790
  %2792 = vmatprep.subr.mxu0 0.0
  %v2793 = vand.u32 %v1873, 4294901760
  %2794 = vmatpush2.msra.mxu0 %v2793
  %2795 = vmatprep.subr.mxu0 0.0
  %v2796 = vand.u32 %v1872, 4294901760
  %2797 = vmatpush2.msra.mxu0 %v2796
  %2798 = vmatprep.subr.mxu0 0.0
  %v2799 = vand.u32 %v1871, 4294901760
  %2800 = vmatpush2.msra.mxu0 %v2799
  %2801 = vmatprep.subr.mxu0 0.0
  %v2802 = vand.u32 %v1870, 4294901760
  %2803 = vmatpush2.msra.mxu0 %v2802
  %2804 = vmatprep.subr.mxu0 0.0
  %v2805 = vand.u32 %v1869, 4294901760
  %2806 = vmatpush2.msra.mxu0 %v2805
  %2807 = vmatprep.subr.mxu0 0.0
  %v2808 = vand.u32 %v1868, 4294901760
  %2809 = vmatpush2.msra.mxu0 %v2808
  %2810 = vmatprep.subr.mxu0 0.0
  %v2811 = vand.u32 %v1867, 4294901760
  %2812 = vmatpush2.msra.mxu0 %v2811
  %2813 = vmatprep.subr.mxu0 0.0
  %v2814 = vand.u32 %v1866, 4294901760
  %2815 = vmatpush2.msra.mxu0 %v2814
  %2816 = vmatprep.subr.mxu0 0.0
  %v2817 = vand.u32 %v1865, 4294901760
  %2818 = vmatpush2.msra.mxu0 %v2817
  %2819 = vmatprep.subr.mxu0 0.0
  %v2820 = vand.u32 %v1864, 4294901760
  %2821 = vmatpush2.msra.mxu0 %v2820
  %2822 = vmatprep.subr.mxu0 0.0
  %v2823 = vand.u32 %v1863, 4294901760
  %2824 = vmatpush2.msra.mxu0 %v2823
  %2825 = vmatprep.subr.mxu0 0.0
  %v2826 = vand.u32 %v1862, 4294901760
  %2827 = vmatpush2.msra.mxu0 %v2826
  %2828 = vmatprep.subr.mxu0 0.0
  %v2829 = vand.u32 %v1861, 4294901760
  %2830 = vmatpush2.msra.mxu0 %v2829
  %2831 = vmatprep.subr.mxu0 0.0
  %v2832 = vand.u32 %v1860, 4294901760
  %2833 = vmatpush2.msra.mxu0 %v2832
  %v2834 = vand.u32 %v85, 4294901760
  %v2835 = vsub.f32 %v85, %v2834
  %v2836 = vand.u32 %v2835, 4294901760
  %v2837 = vsub.f32 %v2835, %v2836
  %v2838 = vand.u32 %v2837, 4294901760
  %2839 = vmatprep.mubr.f32.mxu0 %v2838
  %v2840 = vand.u32 %v17, 4294901760
  %v2841 = vsub.f32 %v17, %v2840
  %v2842 = vand.u32 %v2841, 4294901760
  %v2843 = vsub.f32 %v2841, %v2842
  %v2844 = vand.u32 %v2843, 4294901760
  %2845 = vmatmul.mubr.f32.gmra.mxu0 %v2844
  %v2846 = vpop.f32.mrf.mxu0
  %v2847 = vadd.f32 %v2735, %v2846
  %v2848 = vpop.f32.mrf.mxu0
  %2849 = vdwg.mxu0
  %2850 = vmatprep.subr.mxu0 0.0
  %v2851 = vand.u32 %v1859, 4294901760
  %v2852 = vsub.f32 %v1859, %v2851
  %v2853 = vand.u32 %v2852, 4294901760
  %v2854 = vsub.f32 %v2852, %v2853
  %v2855 = vand.u32 %v2854, 4294901760
  %2856 = vmatpush1.msra.mxu0 %v2855
  %2857 = vmatprep.subr.mxu0 0.0
  %v2858 = vand.u32 %v1858, 4294901760
  %v2859 = vsub.f32 %v1858, %v2858
  %v2860 = vand.u32 %v2859, 4294901760
  %v2861 = vsub.f32 %v2859, %v2860
  %v2862 = vand.u32 %v2861, 4294901760
  %2863 = vmatpush1.msra.mxu0 %v2862
  %2864 = vmatprep.subr.mxu0 0.0
  %v2865 = vand.u32 %v1857, 4294901760
  %v2866 = vsub.f32 %v1857, %v2865
  %v2867 = vand.u32 %v2866, 4294901760
  %v2868 = vsub.f32 %v2866, %v2867
  %v2869 = vand.u32 %v2868, 4294901760
  %2870 = vmatpush1.msra.mxu0 %v2869
  %2871 = vmatprep.subr.mxu0 0.0
  %v2872 = vand.u32 %v1856, 4294901760
  %v2873 = vsub.f32 %v1856, %v2872
  %v2874 = vand.u32 %v2873, 4294901760
  %v2875 = vsub.f32 %v2873, %v2874
  %v2876 = vand.u32 %v2875, 4294901760
  %2877 = vmatpush1.msra.mxu0 %v2876
  %2878 = vmatprep.subr.mxu0 0.0
  %v2879 = vand.u32 %v1855, 4294901760
  %v2880 = vsub.f32 %v1855, %v2879
  %v2881 = vand.u32 %v2880, 4294901760
  %v2882 = vsub.f32 %v2880, %v2881
  %v2883 = vand.u32 %v2882, 4294901760
  %2884 = vmatpush1.msra.mxu0 %v2883
  %2885 = vmatprep.subr.mxu0 0.0
  %v2886 = vand.u32 %v1854, 4294901760
  %v2887 = vsub.f32 %v1854, %v2886
  %v2888 = vand.u32 %v2887, 4294901760
  %v2889 = vsub.f32 %v2887, %v2888
  %v2890 = vand.u32 %v2889, 4294901760
  %2891 = vmatpush1.msra.mxu0 %v2890
  %2892 = vmatprep.subr.mxu0 0.0
  %v2893 = vand.u32 %v1853, 4294901760
  %v2894 = vsub.f32 %v1853, %v2893
  %v2895 = vand.u32 %v2894, 4294901760
  %v2896 = vsub.f32 %v2894, %v2895
  %v2897 = vand.u32 %v2896, 4294901760
  %2898 = vmatpush1.msra.mxu0 %v2897
  %2899 = vmatprep.subr.mxu0 0.0
  %v2900 = vand.u32 %v1852, 4294901760
  %v2901 = vsub.f32 %v1852, %v2900
  %v2902 = vand.u32 %v2901, 4294901760
  %v2903 = vsub.f32 %v2901, %v2902
  %v2904 = vand.u32 %v2903, 4294901760
  %2905 = vmatpush1.msra.mxu0 %v2904
  %2906 = vmatprep.subr.mxu0 0.0
  %v2907 = vand.u32 %v1851, 4294901760
  %v2908 = vsub.f32 %v1851, %v2907
  %v2909 = vand.u32 %v2908, 4294901760
  %v2910 = vsub.f32 %v2908, %v2909
  %v2911 = vand.u32 %v2910, 4294901760
  %2912 = vmatpush1.msra.mxu0 %v2911
  %2913 = vmatprep.subr.mxu0 0.0
  %v2914 = vand.u32 %v1850, 4294901760
  %v2915 = vsub.f32 %v1850, %v2914
  %v2916 = vand.u32 %v2915, 4294901760
  %v2917 = vsub.f32 %v2915, %v2916
  %v2918 = vand.u32 %v2917, 4294901760
  %2919 = vmatpush1.msra.mxu0 %v2918
  %2920 = vmatprep.subr.mxu0 0.0
  %v2921 = vand.u32 %v1849, 4294901760
  %v2922 = vsub.f32 %v1849, %v2921
  %v2923 = vand.u32 %v2922, 4294901760
  %v2924 = vsub.f32 %v2922, %v2923
  %v2925 = vand.u32 %v2924, 4294901760
  %2926 = vmatpush1.msra.mxu0 %v2925
  %2927 = vmatprep.subr.mxu0 0.0
  %v2928 = vand.u32 %v1848, 4294901760
  %v2929 = vsub.f32 %v1848, %v2928
  %v2930 = vand.u32 %v2929, 4294901760
  %v2931 = vsub.f32 %v2929, %v2930
  %v2932 = vand.u32 %v2931, 4294901760
  %2933 = vmatpush1.msra.mxu0 %v2932
  %2934 = vmatprep.subr.mxu0 0.0
  %v2935 = vand.u32 %v1847, 4294901760
  %v2936 = vsub.f32 %v1847, %v2935
  %v2937 = vand.u32 %v2936, 4294901760
  %v2938 = vsub.f32 %v2936, %v2937
  %v2939 = vand.u32 %v2938, 4294901760
  %2940 = vmatpush1.msra.mxu0 %v2939
  %2941 = vmatprep.subr.mxu0 0.0
  %v2942 = vand.u32 %v1846, 4294901760
  %v2943 = vsub.f32 %v1846, %v2942
  %v2944 = vand.u32 %v2943, 4294901760
  %v2945 = vsub.f32 %v2943, %v2944
  %v2946 = vand.u32 %v2945, 4294901760
  %2947 = vmatpush1.msra.mxu0 %v2946
  %2948 = vmatprep.subr.mxu0 0.0
  %v2949 = vand.u32 %v1845, 4294901760
  %v2950 = vsub.f32 %v1845, %v2949
  %v2951 = vand.u32 %v2950, 4294901760
  %v2952 = vsub.f32 %v2950, %v2951
  %v2953 = vand.u32 %v2952, 4294901760
  %2954 = vmatpush1.msra.mxu0 %v2953
  %2955 = vmatprep.subr.mxu0 0.0
  %v2956 = vand.u32 %v1844, 4294901760
  %v2957 = vsub.f32 %v1844, %v2956
  %v2958 = vand.u32 %v2957, 4294901760
  %v2959 = vsub.f32 %v2957, %v2958
  %v2960 = vand.u32 %v2959, 4294901760
  %2961 = vmatpush1.msra.mxu0 %v2960
  %2962 = vmatprep.subr.mxu0 0.0
  %v2963 = vand.u32 %v1875, 4294901760
  %v2964 = vsub.f32 %v1875, %v2963
  %v2965 = vand.u32 %v2964, 4294901760
  %v2966 = vsub.f32 %v2964, %v2965
  %v2967 = vand.u32 %v2966, 4294901760
  %2968 = vmatpush2.msra.mxu0 %v2967
  %2969 = vmatprep.subr.mxu0 0.0
  %v2970 = vand.u32 %v1874, 4294901760
  %v2971 = vsub.f32 %v1874, %v2970
  %v2972 = vand.u32 %v2971, 4294901760
  %v2973 = vsub.f32 %v2971, %v2972
  %v2974 = vand.u32 %v2973, 4294901760
  %2975 = vmatpush2.msra.mxu0 %v2974
  %2976 = vmatprep.subr.mxu0 0.0
  %v2977 = vand.u32 %v1873, 4294901760
  %v2978 = vsub.f32 %v1873, %v2977
  %v2979 = vand.u32 %v2978, 4294901760
  %v2980 = vsub.f32 %v2978, %v2979
  %v2981 = vand.u32 %v2980, 4294901760
  %2982 = vmatpush2.msra.mxu0 %v2981
  %2983 = vmatprep.subr.mxu0 0.0
  %v2984 = vand.u32 %v1872, 4294901760
  %v2985 = vsub.f32 %v1872, %v2984
  %v2986 = vand.u32 %v2985, 4294901760
  %v2987 = vsub.f32 %v2985, %v2986
  %v2988 = vand.u32 %v2987, 4294901760
  %2989 = vmatpush2.msra.mxu0 %v2988
  %2990 = vmatprep.subr.mxu0 0.0
  %v2991 = vand.u32 %v1871, 4294901760
  %v2992 = vsub.f32 %v1871, %v2991
  %v2993 = vand.u32 %v2992, 4294901760
  %v2994 = vsub.f32 %v2992, %v2993
  %v2995 = vand.u32 %v2994, 4294901760
  %2996 = vmatpush2.msra.mxu0 %v2995
  %2997 = vmatprep.subr.mxu0 0.0
  %v2998 = vand.u32 %v1870, 4294901760
  %v2999 = vsub.f32 %v1870, %v2998
  %v3000 = vand.u32 %v2999, 4294901760
  %v3001 = vsub.f32 %v2999, %v3000
  %v3002 = vand.u32 %v3001, 4294901760
  %3003 = vmatpush2.msra.mxu0 %v3002
  %3004 = vmatprep.subr.mxu0 0.0
  %v3005 = vand.u32 %v1869, 4294901760
  %v3006 = vsub.f32 %v1869, %v3005
  %v3007 = vand.u32 %v3006, 4294901760
  %v3008 = vsub.f32 %v3006, %v3007
  %v3009 = vand.u32 %v3008, 4294901760
  %3010 = vmatpush2.msra.mxu0 %v3009
  %3011 = vmatprep.subr.mxu0 0.0
  %v3012 = vand.u32 %v1868, 4294901760
  %v3013 = vsub.f32 %v1868, %v3012
  %v3014 = vand.u32 %v3013, 4294901760
  %v3015 = vsub.f32 %v3013, %v3014
  %v3016 = vand.u32 %v3015, 4294901760
  %3017 = vmatpush2.msra.mxu0 %v3016
  %3018 = vmatprep.subr.mxu0 0.0
  %v3019 = vand.u32 %v1867, 4294901760
  %v3020 = vsub.f32 %v1867, %v3019
  %v3021 = vand.u32 %v3020, 4294901760
  %v3022 = vsub.f32 %v3020, %v3021
  %v3023 = vand.u32 %v3022, 4294901760
  %3024 = vmatpush2.msra.mxu0 %v3023
  %3025 = vmatprep.subr.mxu0 0.0
  %v3026 = vand.u32 %v1866, 4294901760
  %v3027 = vsub.f32 %v1866, %v3026
  %v3028 = vand.u32 %v3027, 4294901760
  %v3029 = vsub.f32 %v3027, %v3028
  %v3030 = vand.u32 %v3029, 4294901760
  %3031 = vmatpush2.msra.mxu0 %v3030
  %3032 = vmatprep.subr.mxu0 0.0
  %v3033 = vand.u32 %v1865, 4294901760
  %v3034 = vsub.f32 %v1865, %v3033
  %v3035 = vand.u32 %v3034, 4294901760
  %v3036 = vsub.f32 %v3034, %v3035
  %v3037 = vand.u32 %v3036, 4294901760
  %3038 = vmatpush2.msra.mxu0 %v3037
  %3039 = vmatprep.subr.mxu0 0.0
  %v3040 = vand.u32 %v1864, 4294901760
  %v3041 = vsub.f32 %v1864, %v3040
  %v3042 = vand.u32 %v3041, 4294901760
  %v3043 = vsub.f32 %v3041, %v3042
  %v3044 = vand.u32 %v3043, 4294901760
  %3045 = vmatpush2.msra.mxu0 %v3044
  %3046 = vmatprep.subr.mxu0 0.0
  %v3047 = vand.u32 %v1863, 4294901760
  %v3048 = vsub.f32 %v1863, %v3047
  %v3049 = vand.u32 %v3048, 4294901760
  %v3050 = vsub.f32 %v3048, %v3049
  %v3051 = vand.u32 %v3050, 4294901760
  %3052 = vmatpush2.msra.mxu0 %v3051
  %3053 = vmatprep.subr.mxu0 0.0
  %v3054 = vand.u32 %v1862, 4294901760
  %v3055 = vsub.f32 %v1862, %v3054
  %v3056 = vand.u32 %v3055, 4294901760
  %v3057 = vsub.f32 %v3055, %v3056
  %v3058 = vand.u32 %v3057, 4294901760
  %3059 = vmatpush2.msra.mxu0 %v3058
  %3060 = vmatprep.subr.mxu0 0.0
  %v3061 = vand.u32 %v1861, 4294901760
  %v3062 = vsub.f32 %v1861, %v3061
  %v3063 = vand.u32 %v3062, 4294901760
  %v3064 = vsub.f32 %v3062, %v3063
  %v3065 = vand.u32 %v3064, 4294901760
  %3066 = vmatpush2.msra.mxu0 %v3065
  %3067 = vmatprep.subr.mxu0 0.0
  %v3068 = vand.u32 %v1860, 4294901760
  %v3069 = vsub.f32 %v1860, %v3068
  %v3070 = vand.u32 %v3069, 4294901760
  %v3071 = vsub.f32 %v3069, %v3070
  %v3072 = vand.u32 %v3071, 4294901760
  %3073 = vmatpush2.msra.mxu0 %v3072
  %v3074 = vand.u32 %v85, 4294901760
  %3075 = vmatprep.mubr.f32.mxu0 %v3074
  %v3076 = vand.u32 %v17, 4294901760
  %3077 = vmatmul.mubr.f32.gmra.mxu0 %v3076
  %v3078 = vpop.f32.mrf.mxu0
  %v3079 = vadd.f32 %v2847, %v3078
  %v3080 = vpop.f32.mrf.mxu0
  %3081 = vdwg.mxu0
  %3082 = vmatprep.subr.mxu0 0.0
  %v3083 = vand.u32 %v1859, 4294901760
  %v3084 = vsub.f32 %v1859, %v3083
  %3085 = vmatpush1.msra.mxu0 %v3084
  %3086 = vmatprep.subr.mxu0 0.0
  %v3087 = vand.u32 %v1858, 4294901760
  %v3088 = vsub.f32 %v1858, %v3087
  %3089 = vmatpush1.msra.mxu0 %v3088
  %3090 = vmatprep.subr.mxu0 0.0
  %v3091 = vand.u32 %v1857, 4294901760
  %v3092 = vsub.f32 %v1857, %v3091
  %3093 = vmatpush1.msra.mxu0 %v3092
  %3094 = vmatprep.subr.mxu0 0.0
  %v3095 = vand.u32 %v1856, 4294901760
  %v3096 = vsub.f32 %v1856, %v3095
  %3097 = vmatpush1.msra.mxu0 %v3096
  %3098 = vmatprep.subr.mxu0 0.0
  %v3099 = vand.u32 %v1855, 4294901760
  %v3100 = vsub.f32 %v1855, %v3099
  %3101 = vmatpush1.msra.mxu0 %v3100
  %3102 = vmatprep.subr.mxu0 0.0
  %v3103 = vand.u32 %v1854, 4294901760
  %v3104 = vsub.f32 %v1854, %v3103
  %3105 = vmatpush1.msra.mxu0 %v3104
  %3106 = vmatprep.subr.mxu0 0.0
  %v3107 = vand.u32 %v1853, 4294901760
  %v3108 = vsub.f32 %v1853, %v3107
  %3109 = vmatpush1.msra.mxu0 %v3108
  %3110 = vmatprep.subr.mxu0 0.0
  %v3111 = vand.u32 %v1852, 4294901760
  %v3112 = vsub.f32 %v1852, %v3111
  %3113 = vmatpush1.msra.mxu0 %v3112
  %3114 = vmatprep.subr.mxu0 0.0
  %v3115 = vand.u32 %v1851, 4294901760
  %v3116 = vsub.f32 %v1851, %v3115
  %3117 = vmatpush1.msra.mxu0 %v3116
  %3118 = vmatprep.subr.mxu0 0.0
  %v3119 = vand.u32 %v1850, 4294901760
  %v3120 = vsub.f32 %v1850, %v3119
  %3121 = vmatpush1.msra.mxu0 %v3120
  %3122 = vmatprep.subr.mxu0 0.0
  %v3123 = vand.u32 %v1849, 4294901760
  %v3124 = vsub.f32 %v1849, %v3123
  %3125 = vmatpush1.msra.mxu0 %v3124
  %3126 = vmatprep.subr.mxu0 0.0
  %v3127 = vand.u32 %v1848, 4294901760
  %v3128 = vsub.f32 %v1848, %v3127
  %3129 = vmatpush1.msra.mxu0 %v3128
  %3130 = vmatprep.subr.mxu0 0.0
  %v3131 = vand.u32 %v1847, 4294901760
  %v3132 = vsub.f32 %v1847, %v3131
  %3133 = vmatpush1.msra.mxu0 %v3132
  %3134 = vmatprep.subr.mxu0 0.0
  %v3135 = vand.u32 %v1846, 4294901760
  %v3136 = vsub.f32 %v1846, %v3135
  %3137 = vmatpush1.msra.mxu0 %v3136
  %3138 = vmatprep.subr.mxu0 0.0
  %v3139 = vand.u32 %v1845, 4294901760
  %v3140 = vsub.f32 %v1845, %v3139
  %3141 = vmatpush1.msra.mxu0 %v3140
  %3142 = vmatprep.subr.mxu0 0.0
  %v3143 = vand.u32 %v1844, 4294901760
  %v3144 = vsub.f32 %v1844, %v3143
  %3145 = vmatpush1.msra.mxu0 %v3144
  %3146 = vmatprep.subr.mxu0 0.0
  %v3147 = vand.u32 %v1875, 4294901760
  %v3148 = vsub.f32 %v1875, %v3147
  %3149 = vmatpush2.msra.mxu0 %v3148
  %3150 = vmatprep.subr.mxu0 0.0
  %v3151 = vand.u32 %v1874, 4294901760
  %v3152 = vsub.f32 %v1874, %v3151
  %3153 = vmatpush2.msra.mxu0 %v3152
  %3154 = vmatprep.subr.mxu0 0.0
  %v3155 = vand.u32 %v1873, 4294901760
  %v3156 = vsub.f32 %v1873, %v3155
  %3157 = vmatpush2.msra.mxu0 %v3156
  %3158 = vmatprep.subr.mxu0 0.0
  %v3159 = vand.u32 %v1872, 4294901760
  %v3160 = vsub.f32 %v1872, %v3159
  %3161 = vmatpush2.msra.mxu0 %v3160
  %3162 = vmatprep.subr.mxu0 0.0
  %v3163 = vand.u32 %v1871, 4294901760
  %v3164 = vsub.f32 %v1871, %v3163
  %3165 = vmatpush2.msra.mxu0 %v3164
  %3166 = vmatprep.subr.mxu0 0.0
  %v3167 = vand.u32 %v1870, 4294901760
  %v3168 = vsub.f32 %v1870, %v3167
  %3169 = vmatpush2.msra.mxu0 %v3168
  %3170 = vmatprep.subr.mxu0 0.0
  %v3171 = vand.u32 %v1869, 4294901760
  %v3172 = vsub.f32 %v1869, %v3171
  %3173 = vmatpush2.msra.mxu0 %v3172
  %3174 = vmatprep.subr.mxu0 0.0
  %v3175 = vand.u32 %v1868, 4294901760
  %v3176 = vsub.f32 %v1868, %v3175
  %3177 = vmatpush2.msra.mxu0 %v3176
  %3178 = vmatprep.subr.mxu0 0.0
  %v3179 = vand.u32 %v1867, 4294901760
  %v3180 = vsub.f32 %v1867, %v3179
  %3181 = vmatpush2.msra.mxu0 %v3180
  %3182 = vmatprep.subr.mxu0 0.0
  %v3183 = vand.u32 %v1866, 4294901760
  %v3184 = vsub.f32 %v1866, %v3183
  %3185 = vmatpush2.msra.mxu0 %v3184
  %3186 = vmatprep.subr.mxu0 0.0
  %v3187 = vand.u32 %v1865, 4294901760
  %v3188 = vsub.f32 %v1865, %v3187
  %3189 = vmatpush2.msra.mxu0 %v3188
  %3190 = vmatprep.subr.mxu0 0.0
  %v3191 = vand.u32 %v1864, 4294901760
  %v3192 = vsub.f32 %v1864, %v3191
  %3193 = vmatpush2.msra.mxu0 %v3192
  %3194 = vmatprep.subr.mxu0 0.0
  %v3195 = vand.u32 %v1863, 4294901760
  %v3196 = vsub.f32 %v1863, %v3195
  %3197 = vmatpush2.msra.mxu0 %v3196
  %3198 = vmatprep.subr.mxu0 0.0
  %v3199 = vand.u32 %v1862, 4294901760
  %v3200 = vsub.f32 %v1862, %v3199
  %3201 = vmatpush2.msra.mxu0 %v3200
  %3202 = vmatprep.subr.mxu0 0.0
  %v3203 = vand.u32 %v1861, 4294901760
  %v3204 = vsub.f32 %v1861, %v3203
  %3205 = vmatpush2.msra.mxu0 %v3204
  %3206 = vmatprep.subr.mxu0 0.0
  %v3207 = vand.u32 %v1860, 4294901760
  %v3208 = vsub.f32 %v1860, %v3207
  %3209 = vmatpush2.msra.mxu0 %v3208
  %v3210 = vand.u32 %v85, 4294901760
  %v3211 = vsub.f32 %v85, %v3210
  %3212 = vmatprep.mubr.f32.mxu0 %v3211
  %v3213 = vand.u32 %v17, 4294901760
  %v3214 = vsub.f32 %v17, %v3213
  %3215 = vmatmul.mubr.f32.gmra.mxu0 %v3214
  %v3216 = vpop.f32.mrf.mxu0
  %v3217 = vadd.f32 %v3079, %v3216
  %v3218 = vpop.f32.mrf.mxu0
  %3219 = vdwg.mxu0
  %3220 = vmatprep.subr.mxu0 0.0
  %v3221 = vand.u32 %v1859, 4294901760
  %3222 = vmatpush1.msra.mxu0 %v3221
  %3223 = vmatprep.subr.mxu0 0.0
  %v3224 = vand.u32 %v1858, 4294901760
  %3225 = vmatpush1.msra.mxu0 %v3224
  %3226 = vmatprep.subr.mxu0 0.0
  %v3227 = vand.u32 %v1857, 4294901760
  %3228 = vmatpush1.msra.mxu0 %v3227
  %3229 = vmatprep.subr.mxu0 0.0
  %v3230 = vand.u32 %v1856, 4294901760
  %3231 = vmatpush1.msra.mxu0 %v3230
  %3232 = vmatprep.subr.mxu0 0.0
  %v3233 = vand.u32 %v1855, 4294901760
  %3234 = vmatpush1.msra.mxu0 %v3233
  %3235 = vmatprep.subr.mxu0 0.0
  %v3236 = vand.u32 %v1854, 4294901760
  %3237 = vmatpush1.msra.mxu0 %v3236
  %3238 = vmatprep.subr.mxu0 0.0
  %v3239 = vand.u32 %v1853, 4294901760
  %3240 = vmatpush1.msra.mxu0 %v3239
  %3241 = vmatprep.subr.mxu0 0.0
  %v3242 = vand.u32 %v1852, 4294901760
  %3243 = vmatpush1.msra.mxu0 %v3242
  %3244 = vmatprep.subr.mxu0 0.0
  %v3245 = vand.u32 %v1851, 4294901760
  %3246 = vmatpush1.msra.mxu0 %v3245
  %3247 = vmatprep.subr.mxu0 0.0
  %v3248 = vand.u32 %v1850, 4294901760
  %3249 = vmatpush1.msra.mxu0 %v3248
  %3250 = vmatprep.subr.mxu0 0.0
  %v3251 = vand.u32 %v1849, 4294901760
  %3252 = vmatpush1.msra.mxu0 %v3251
  %3253 = vmatprep.subr.mxu0 0.0
  %v3254 = vand.u32 %v1848, 4294901760
  %3255 = vmatpush1.msra.mxu0 %v3254
  %3256 = vmatprep.subr.mxu0 0.0
  %v3257 = vand.u32 %v1847, 4294901760
  %3258 = vmatpush1.msra.mxu0 %v3257
  %3259 = vmatprep.subr.mxu0 0.0
  %v3260 = vand.u32 %v1846, 4294901760
  %3261 = vmatpush1.msra.mxu0 %v3260
  %3262 = vmatprep.subr.mxu0 0.0
  %v3263 = vand.u32 %v1845, 4294901760
  %3264 = vmatpush1.msra.mxu0 %v3263
  %3265 = vmatprep.subr.mxu0 0.0
  %v3266 = vand.u32 %v1844, 4294901760
  %3267 = vmatpush1.msra.mxu0 %v3266
  %3268 = vmatprep.subr.mxu0 0.0
  %v3269 = vand.u32 %v1875, 4294901760
  %3270 = vmatpush2.msra.mxu0 %v3269
  %3271 = vmatprep.subr.mxu0 0.0
  %v3272 = vand.u32 %v1874, 4294901760
  %3273 = vmatpush2.msra.mxu0 %v3272
  %3274 = vmatprep.subr.mxu0 0.0
  %v3275 = vand.u32 %v1873, 4294901760
  %3276 = vmatpush2.msra.mxu0 %v3275
  %3277 = vmatprep.subr.mxu0 0.0
  %v3278 = vand.u32 %v1872, 4294901760
  %3279 = vmatpush2.msra.mxu0 %v3278
  %3280 = vmatprep.subr.mxu0 0.0
  %v3281 = vand.u32 %v1871, 4294901760
  %3282 = vmatpush2.msra.mxu0 %v3281
  %3283 = vmatprep.subr.mxu0 0.0
  %v3284 = vand.u32 %v1870, 4294901760
  %3285 = vmatpush2.msra.mxu0 %v3284
  %3286 = vmatprep.subr.mxu0 0.0
  %v3287 = vand.u32 %v1869, 4294901760
  %3288 = vmatpush2.msra.mxu0 %v3287
  %3289 = vmatprep.subr.mxu0 0.0
  %v3290 = vand.u32 %v1868, 4294901760
  %3291 = vmatpush2.msra.mxu0 %v3290
  %3292 = vmatprep.subr.mxu0 0.0
  %v3293 = vand.u32 %v1867, 4294901760
  %3294 = vmatpush2.msra.mxu0 %v3293
  %3295 = vmatprep.subr.mxu0 0.0
  %v3296 = vand.u32 %v1866, 4294901760
  %3297 = vmatpush2.msra.mxu0 %v3296
  %3298 = vmatprep.subr.mxu0 0.0
  %v3299 = vand.u32 %v1865, 4294901760
  %3300 = vmatpush2.msra.mxu0 %v3299
  %3301 = vmatprep.subr.mxu0 0.0
  %v3302 = vand.u32 %v1864, 4294901760
  %3303 = vmatpush2.msra.mxu0 %v3302
  %3304 = vmatprep.subr.mxu0 0.0
  %v3305 = vand.u32 %v1863, 4294901760
  %3306 = vmatpush2.msra.mxu0 %v3305
  %3307 = vmatprep.subr.mxu0 0.0
  %v3308 = vand.u32 %v1862, 4294901760
  %3309 = vmatpush2.msra.mxu0 %v3308
  %3310 = vmatprep.subr.mxu0 0.0
  %v3311 = vand.u32 %v1861, 4294901760
  %3312 = vmatpush2.msra.mxu0 %v3311
  %3313 = vmatprep.subr.mxu0 0.0
  %v3314 = vand.u32 %v1860, 4294901760
  %3315 = vmatpush2.msra.mxu0 %v3314
  %v3316 = vand.u32 %v85, 4294901760
  %v3317 = vsub.f32 %v85, %v3316
  %v3318 = vand.u32 %v3317, 4294901760
  %3319 = vmatprep.mubr.f32.mxu0 %v3318
  %v3320 = vand.u32 %v17, 4294901760
  %v3321 = vsub.f32 %v17, %v3320
  %v3322 = vand.u32 %v3321, 4294901760
  %3323 = vmatmul.mubr.f32.gmra.mxu0 %v3322
  %v3324 = vpop.f32.mrf.mxu0
  %v3325 = vadd.f32 %v3217, %v3324
  %v3326 = vpop.f32.mrf.mxu0
  %3327 = vdwg.mxu0
  %3328 = vmatprep.subr.mxu0 0.0
  %v3329 = vand.u32 %v1859, 4294901760
  %v3330 = vsub.f32 %v1859, %v3329
  %v3331 = vand.u32 %v3330, 4294901760
  %3332 = vmatpush1.msra.mxu0 %v3331
  %3333 = vmatprep.subr.mxu0 0.0
  %v3334 = vand.u32 %v1858, 4294901760
  %v3335 = vsub.f32 %v1858, %v3334
  %v3336 = vand.u32 %v3335, 4294901760
  %3337 = vmatpush1.msra.mxu0 %v3336
  %3338 = vmatprep.subr.mxu0 0.0
  %v3339 = vand.u32 %v1857, 4294901760
  %v3340 = vsub.f32 %v1857, %v3339
  %v3341 = vand.u32 %v3340, 4294901760
  %3342 = vmatpush1.msra.mxu0 %v3341
  %3343 = vmatprep.subr.mxu0 0.0
  %v3344 = vand.u32 %v1856, 4294901760
  %v3345 = vsub.f32 %v1856, %v3344
  %v3346 = vand.u32 %v3345, 4294901760
  %3347 = vmatpush1.msra.mxu0 %v3346
  %3348 = vmatprep.subr.mxu0 0.0
  %v3349 = vand.u32 %v1855, 4294901760
  %v3350 = vsub.f32 %v1855, %v3349
  %v3351 = vand.u32 %v3350, 4294901760
  %3352 = vmatpush1.msra.mxu0 %v3351
  %3353 = vmatprep.subr.mxu0 0.0
  %v3354 = vand.u32 %v1854, 4294901760
  %v3355 = vsub.f32 %v1854, %v3354
  %v3356 = vand.u32 %v3355, 4294901760
  %3357 = vmatpush1.msra.mxu0 %v3356
  %3358 = vmatprep.subr.mxu0 0.0
  %v3359 = vand.u32 %v1853, 4294901760
  %v3360 = vsub.f32 %v1853, %v3359
  %v3361 = vand.u32 %v3360, 4294901760
  %3362 = vmatpush1.msra.mxu0 %v3361
  %3363 = vmatprep.subr.mxu0 0.0
  %v3364 = vand.u32 %v1852, 4294901760
  %v3365 = vsub.f32 %v1852, %v3364
  %v3366 = vand.u32 %v3365, 4294901760
  %3367 = vmatpush1.msra.mxu0 %v3366
  %3368 = vmatprep.subr.mxu0 0.0
  %v3369 = vand.u32 %v1851, 4294901760
  %v3370 = vsub.f32 %v1851, %v3369
  %v3371 = vand.u32 %v3370, 4294901760
  %3372 = vmatpush1.msra.mxu0 %v3371
  %3373 = vmatprep.subr.mxu0 0.0
  %v3374 = vand.u32 %v1850, 4294901760
  %v3375 = vsub.f32 %v1850, %v3374
  %v3376 = vand.u32 %v3375, 4294901760
  %3377 = vmatpush1.msra.mxu0 %v3376
  %3378 = vmatprep.subr.mxu0 0.0
  %v3379 = vand.u32 %v1849, 4294901760
  %v3380 = vsub.f32 %v1849, %v3379
  %v3381 = vand.u32 %v3380, 4294901760
  %3382 = vmatpush1.msra.mxu0 %v3381
  %3383 = vmatprep.subr.mxu0 0.0
  %v3384 = vand.u32 %v1848, 4294901760
  %v3385 = vsub.f32 %v1848, %v3384
  %v3386 = vand.u32 %v3385, 4294901760
  %3387 = vmatpush1.msra.mxu0 %v3386
  %3388 = vmatprep.subr.mxu0 0.0
  %v3389 = vand.u32 %v1847, 4294901760
  %v3390 = vsub.f32 %v1847, %v3389
  %v3391 = vand.u32 %v3390, 4294901760
  %3392 = vmatpush1.msra.mxu0 %v3391
  %3393 = vmatprep.subr.mxu0 0.0
  %v3394 = vand.u32 %v1846, 4294901760
  %v3395 = vsub.f32 %v1846, %v3394
  %v3396 = vand.u32 %v3395, 4294901760
  %3397 = vmatpush1.msra.mxu0 %v3396
  %3398 = vmatprep.subr.mxu0 0.0
  %v3399 = vand.u32 %v1845, 4294901760
  %v3400 = vsub.f32 %v1845, %v3399
  %v3401 = vand.u32 %v3400, 4294901760
  %3402 = vmatpush1.msra.mxu0 %v3401
  %3403 = vmatprep.subr.mxu0 0.0
  %v3404 = vand.u32 %v1844, 4294901760
  %v3405 = vsub.f32 %v1844, %v3404
  %v3406 = vand.u32 %v3405, 4294901760
  %3407 = vmatpush1.msra.mxu0 %v3406
  %3408 = vmatprep.subr.mxu0 0.0
  %v3409 = vand.u32 %v1875, 4294901760
  %v3410 = vsub.f32 %v1875, %v3409
  %v3411 = vand.u32 %v3410, 4294901760
  %3412 = vmatpush2.msra.mxu0 %v3411
  %3413 = vmatprep.subr.mxu0 0.0
  %v3414 = vand.u32 %v1874, 4294901760
  %v3415 = vsub.f32 %v1874, %v3414
  %v3416 = vand.u32 %v3415, 4294901760
  %3417 = vmatpush2.msra.mxu0 %v3416
  %3418 = vmatprep.subr.mxu0 0.0
  %v3419 = vand.u32 %v1873, 4294901760
  %v3420 = vsub.f32 %v1873, %v3419
  %v3421 = vand.u32 %v3420, 4294901760
  %3422 = vmatpush2.msra.mxu0 %v3421
  %3423 = vmatprep.subr.mxu0 0.0
  %v3424 = vand.u32 %v1872, 4294901760
  %v3425 = vsub.f32 %v1872, %v3424
  %v3426 = vand.u32 %v3425, 4294901760
  %3427 = vmatpush2.msra.mxu0 %v3426
  %3428 = vmatprep.subr.mxu0 0.0
  %v3429 = vand.u32 %v1871, 4294901760
  %v3430 = vsub.f32 %v1871, %v3429
  %v3431 = vand.u32 %v3430, 4294901760
  %3432 = vmatpush2.msra.mxu0 %v3431
  %3433 = vmatprep.subr.mxu0 0.0
  %v3434 = vand.u32 %v1870, 4294901760
  %v3435 = vsub.f32 %v1870, %v3434
  %v3436 = vand.u32 %v3435, 4294901760
  %3437 = vmatpush2.msra.mxu0 %v3436
  %3438 = vmatprep.subr.mxu0 0.0
  %v3439 = vand.u32 %v1869, 4294901760
  %v3440 = vsub.f32 %v1869, %v3439
  %v3441 = vand.u32 %v3440, 4294901760
  %3442 = vmatpush2.msra.mxu0 %v3441
  %3443 = vmatprep.subr.mxu0 0.0
  %v3444 = vand.u32 %v1868, 4294901760
  %v3445 = vsub.f32 %v1868, %v3444
  %v3446 = vand.u32 %v3445, 4294901760
  %3447 = vmatpush2.msra.mxu0 %v3446
  %3448 = vmatprep.subr.mxu0 0.0
  %v3449 = vand.u32 %v1867, 4294901760
  %v3450 = vsub.f32 %v1867, %v3449
  %v3451 = vand.u32 %v3450, 4294901760
  %3452 = vmatpush2.msra.mxu0 %v3451
  %3453 = vmatprep.subr.mxu0 0.0
  %v3454 = vand.u32 %v1866, 4294901760
  %v3455 = vsub.f32 %v1866, %v3454
  %v3456 = vand.u32 %v3455, 4294901760
  %3457 = vmatpush2.msra.mxu0 %v3456
  %3458 = vmatprep.subr.mxu0 0.0
  %v3459 = vand.u32 %v1865, 4294901760
  %v3460 = vsub.f32 %v1865, %v3459
  %v3461 = vand.u32 %v3460, 4294901760
  %3462 = vmatpush2.msra.mxu0 %v3461
  %3463 = vmatprep.subr.mxu0 0.0
  %v3464 = vand.u32 %v1864, 4294901760
  %v3465 = vsub.f32 %v1864, %v3464
  %v3466 = vand.u32 %v3465, 4294901760
  %3467 = vmatpush2.msra.mxu0 %v3466
  %3468 = vmatprep.subr.mxu0 0.0
  %v3469 = vand.u32 %v1863, 4294901760
  %v3470 = vsub.f32 %v1863, %v3469
  %v3471 = vand.u32 %v3470, 4294901760
  %3472 = vmatpush2.msra.mxu0 %v3471
  %3473 = vmatprep.subr.mxu0 0.0
  %v3474 = vand.u32 %v1862, 4294901760
  %v3475 = vsub.f32 %v1862, %v3474
  %v3476 = vand.u32 %v3475, 4294901760
  %3477 = vmatpush2.msra.mxu0 %v3476
  %3478 = vmatprep.subr.mxu0 0.0
  %v3479 = vand.u32 %v1861, 4294901760
  %v3480 = vsub.f32 %v1861, %v3479
  %v3481 = vand.u32 %v3480, 4294901760
  %3482 = vmatpush2.msra.mxu0 %v3481
  %3483 = vmatprep.subr.mxu0 0.0
  %v3484 = vand.u32 %v1860, 4294901760
  %v3485 = vsub.f32 %v1860, %v3484
  %v3486 = vand.u32 %v3485, 4294901760
  %3487 = vmatpush2.msra.mxu0 %v3486
  %v3488 = vand.u32 %v85, 4294901760
  %3489 = vmatprep.mubr.f32.mxu0 %v3488
  %v3490 = vand.u32 %v17, 4294901760
  %3491 = vmatmul.mubr.f32.gmra.mxu0 %v3490
  %v3492 = vpop.f32.mrf.mxu0
  %v3493 = vadd.f32 %v3325, %v3492
  %v3494 = vpop.f32.mrf.mxu0
  %3495 = vdwg.mxu0
  %3496 = vmatprep.subr.mxu0 0.0
  %v3497 = vand.u32 %v1859, 4294901760
  %3498 = vmatpush1.msra.mxu0 %v3497
  %3499 = vmatprep.subr.mxu0 0.0
  %v3500 = vand.u32 %v1858, 4294901760
  %3501 = vmatpush1.msra.mxu0 %v3500
  %3502 = vmatprep.subr.mxu0 0.0
  %v3503 = vand.u32 %v1857, 4294901760
  %3504 = vmatpush1.msra.mxu0 %v3503
  %3505 = vmatprep.subr.mxu0 0.0
  %v3506 = vand.u32 %v1856, 4294901760
  %3507 = vmatpush1.msra.mxu0 %v3506
  %3508 = vmatprep.subr.mxu0 0.0
  %v3509 = vand.u32 %v1855, 4294901760
  %3510 = vmatpush1.msra.mxu0 %v3509
  %3511 = vmatprep.subr.mxu0 0.0
  %v3512 = vand.u32 %v1854, 4294901760
  %3513 = vmatpush1.msra.mxu0 %v3512
  %3514 = vmatprep.subr.mxu0 0.0
  %v3515 = vand.u32 %v1853, 4294901760
  %3516 = vmatpush1.msra.mxu0 %v3515
  %3517 = vmatprep.subr.mxu0 0.0
  %v3518 = vand.u32 %v1852, 4294901760
  %3519 = vmatpush1.msra.mxu0 %v3518
  %3520 = vmatprep.subr.mxu0 0.0
  %v3521 = vand.u32 %v1851, 4294901760
  %3522 = vmatpush1.msra.mxu0 %v3521
  %3523 = vmatprep.subr.mxu0 0.0
  %v3524 = vand.u32 %v1850, 4294901760
  %3525 = vmatpush1.msra.mxu0 %v3524
  %3526 = vmatprep.subr.mxu0 0.0
  %v3527 = vand.u32 %v1849, 4294901760
  %3528 = vmatpush1.msra.mxu0 %v3527
  %3529 = vmatprep.subr.mxu0 0.0
  %v3530 = vand.u32 %v1848, 4294901760
  %3531 = vmatpush1.msra.mxu0 %v3530
  %3532 = vmatprep.subr.mxu0 0.0
  %v3533 = vand.u32 %v1847, 4294901760
  %3534 = vmatpush1.msra.mxu0 %v3533
  %3535 = vmatprep.subr.mxu0 0.0
  %v3536 = vand.u32 %v1846, 4294901760
  %3537 = vmatpush1.msra.mxu0 %v3536
  %3538 = vmatprep.subr.mxu0 0.0
  %v3539 = vand.u32 %v1845, 4294901760
  %3540 = vmatpush1.msra.mxu0 %v3539
  %3541 = vmatprep.subr.mxu0 0.0
  %v3542 = vand.u32 %v1844, 4294901760
  %3543 = vmatpush1.msra.mxu0 %v3542
  %3544 = vmatprep.subr.mxu0 0.0
  %v3545 = vand.u32 %v1875, 4294901760
  %3546 = vmatpush2.msra.mxu0 %v3545
  %3547 = vmatprep.subr.mxu0 0.0
  %v3548 = vand.u32 %v1874, 4294901760
  %3549 = vmatpush2.msra.mxu0 %v3548
  %3550 = vmatprep.subr.mxu0 0.0
  %v3551 = vand.u32 %v1873, 4294901760
  %3552 = vmatpush2.msra.mxu0 %v3551
  %3553 = vmatprep.subr.mxu0 0.0
  %v3554 = vand.u32 %v1872, 4294901760
  %3555 = vmatpush2.msra.mxu0 %v3554
  %3556 = vmatprep.subr.mxu0 0.0
  %v3557 = vand.u32 %v1871, 4294901760
  %3558 = vmatpush2.msra.mxu0 %v3557
  %3559 = vmatprep.subr.mxu0 0.0
  %v3560 = vand.u32 %v1870, 4294901760
  %3561 = vmatpush2.msra.mxu0 %v3560
  %3562 = vmatprep.subr.mxu0 0.0
  %v3563 = vand.u32 %v1869, 4294901760
  %3564 = vmatpush2.msra.mxu0 %v3563
  %3565 = vmatprep.subr.mxu0 0.0
  %v3566 = vand.u32 %v1868, 4294901760
  %3567 = vmatpush2.msra.mxu0 %v3566
  %3568 = vmatprep.subr.mxu0 0.0
  %v3569 = vand.u32 %v1867, 4294901760
  %3570 = vmatpush2.msra.mxu0 %v3569
  %3571 = vmatprep.subr.mxu0 0.0
  %v3572 = vand.u32 %v1866, 4294901760
  %3573 = vmatpush2.msra.mxu0 %v3572
  %3574 = vmatprep.subr.mxu0 0.0
  %v3575 = vand.u32 %v1865, 4294901760
  %3576 = vmatpush2.msra.mxu0 %v3575
  %3577 = vmatprep.subr.mxu0 0.0
  %v3578 = vand.u32 %v1864, 4294901760
  %3579 = vmatpush2.msra.mxu0 %v3578
  %3580 = vmatprep.subr.mxu0 0.0
  %v3581 = vand.u32 %v1863, 4294901760
  %3582 = vmatpush2.msra.mxu0 %v3581
  %3583 = vmatprep.subr.mxu0 0.0
  %v3584 = vand.u32 %v1862, 4294901760
  %3585 = vmatpush2.msra.mxu0 %v3584
  %3586 = vmatprep.subr.mxu0 0.0
  %v3587 = vand.u32 %v1861, 4294901760
  %3588 = vmatpush2.msra.mxu0 %v3587
  %3589 = vmatprep.subr.mxu0 0.0
  %v3590 = vand.u32 %v1860, 4294901760
  %3591 = vmatpush2.msra.mxu0 %v3590
  %v3592 = vand.u32 %v85, 4294901760
  %3593 = vmatprep.mubr.f32.mxu0 %v3592
  %v3594 = vand.u32 %v17, 4294901760
  %3595 = vmatmul.mubr.f32.gmra.mxu0 %v3594
  %v3596 = vpop.f32.mrf.mxu0
  %v3597 = vadd.f32 %v3493, %v3596
  %v3598 = vpop.f32.mrf.mxu0
  %3599 = vdwg.mxu0
  %3600 = vst [vmem:[%s3] sm:$0xf] %v1809
  %3601 = vst [vmem:[%s4] sm:$0xf] %v3597
  // Predicated region
  $region14: #{mask_sampling_v2.1} parent=0 // pred_check
    _
  $region15: #{mask_sampling_v2.1} parent=0 // pred_check_branch
    %3603 = sbr.rel (0) target = $region17
  $region16: #{mask_sampling_v2.1} parent=0 // pred_region
    _
  $region17: #{mask_sampling_v2.1} parent=0 // pred_fallthru
    _
  // Predicated region
  $region18: #{mask_sampling_v2.1} parent=0 // pred_check
    _
  $region19: #{mask_sampling_v2.1} parent=0 // pred_check_branch
    %3605 = sbr.rel (0) target = $region21
  $region20: #{mask_sampling_v2.1} parent=0 // pred_region
    _
  $region21: #{mask_sampling_v2.1} parent=0 // pred_fallthru
    _
  // Predicated region
  $region22: #{mask_sampling_v2.1} parent=0 // pred_check
    _
  $region23: #{mask_sampling_v2.1} parent=0 // pred_check_branch
    %3607 = sbr.rel (0) target = $region25
  $region24: #{mask_sampling_v2.1} parent=0 // pred_region
    _
  $region25: #{mask_sampling_v2.1} parent=0 // pred_fallthru
    _
  // Predicated region
  $region26: #{mask_sampling_v2.1} parent=0 // pred_check
    _
  $region27: #{mask_sampling_v2.1} parent=0 // pred_check_branch
    %3609 = sbr.rel (0) target = $region29
  $region28: #{mask_sampling_v2.1} parent=0 // pred_region
    _
  $region29: #{mask_sampling_v2.1} parent=0 // pred_fallthru
    _

</llo_original>
